<compile_context>
chip_gen: v6e
topology: v6e:2x2x1
jax: 0.10.0
libtpu: 0.0.40
codegen_flags: <defaults>
</compile_context>

<pallas_src>
import functools
import math

import jax
import jax.numpy as jnp
from jax import lax
from jax.experimental import pallas as pl
from jax.experimental.pallas import tpu as pltpu

# Model hyperparameters (PyTorch module defaults).
D_MODEL = 128
N_HEAD = 8
HEAD_DIM = D_MODEL // N_HEAD          # 16
N_LAYERS = 6
D_FF = 512
PATCH = 90
PATCH_DIM = 2 * PATCH                 # 180
NUM_CLASSES = 1
LN_EPS = 1e-5


def _layer_norm(x, gamma, beta):
    """LayerNorm over the last (lane) dim; gamma/beta are (1, D). f32 math."""
    mu = jnp.mean(x, axis=-1, keepdims=True)
    xc = x - mu
    var = jnp.mean(xc * xc, axis=-1, keepdims=True)
    return xc * lax.rsqrt(var + LN_EPS) * gamma + beta


# ---------------------------------------------------------------------------
# Kernel body: one grid step == one encoder layer.
# Activation persists in VMEM scratch as (M, D) f32 with M = batch * seq.
# ---------------------------------------------------------------------------
def transformer_kernel(x_in_ref, wemb_ref, add_ref, mkv_ref, me_ref,
                       wq_ref, bq_ref, wk_ref, bk_ref, wv_ref, bv_ref,
                       wo_ref, bo_ref, ln1g_ref, ln1b_ref,
                       w1_ref, b1_ref, w2_ref, b2_ref, ln2g_ref, ln2b_ref,
                       hg_ref, hb_ref, wh_ref, bh_ref,
                       o_ref, x_scr, *, batch, seq):
    f32 = jnp.float32
    bf16 = jnp.bfloat16
    scale = 1.0 / math.sqrt(HEAD_DIM)
    l = pl.program_id(0)

    # --- Patch embedding + (cls token, emb bias, positional enc.) fold ------
    @pl.when(l == 0)
    def _embed():
        emb = jnp.dot(x_in_ref[...], wemb_ref[...], preferred_element_type=f32)
        x_scr[...] = emb + add_ref[...]                         # (M, D) f32

    x = x_scr[...]                                              # (M, D) f32
    xb = x.astype(bf16)

    # --- Multi-head self-attention (post-norm block) -------------------------
    q = jnp.dot(xb, wq_ref[...], preferred_element_type=f32) + bq_ref[...]
    k = jnp.dot(xb, wk_ref[...], preferred_element_type=f32) + bk_ref[...]
    v = jnp.dot(xb, wv_ref[...], preferred_element_type=f32) + bv_ref[...]

    mask_kv = mkv_ref[...]            # (SH, D)  0/1 bf16, SH = N_HEAD * seq
    mask_e = me_ref[...]              # (SH, SH) 0/1 bf16

    ctx_rows = []
    for b in range(batch):            # tiny static unroll over the batch
        rs = b * seq
        qb = q[rs:rs + seq, :].astype(bf16)                     # (S, D)
        kb = k[rs:rs + seq, :].astype(bf16)
        vb = v[rs:rs + seq, :].astype(bf16)

        # Heads packed along the score-lane axis: row h*S + t of the tiled
        # operands is key/value position t restricted (via the block-diagonal
        # mask) to head h's HEAD_DIM model dims.  Sublane-aligned tiling only.
        kb_bd = jnp.concatenate([kb] * N_HEAD, axis=0) * mask_kv    # (SH, D)
        vb_bd = jnp.concatenate([vb] * N_HEAD, axis=0) * mask_kv    # (SH, D)

        # All-head scores in one full-lane MXU matmul (contract model dim).
        s = lax.dot_general(qb, kb_bd, (((1,), (1,)), ((), ())),
                            preferred_element_type=f32) * scale     # (S, SH)

        # One row-max over all packed heads: softmax is shift-invariant per
        # head segment and the global max is an overflow-safe shift.
        m = jnp.max(s, axis=-1, keepdims=True)
        e = jnp.exp(s - m)                                           # f32
        # Segmented softmax denominator via one matmul against the 0/1 mask.
        denom = jnp.dot(e.astype(bf16), mask_e, preferred_element_type=f32)
        probs = (e * pl.reciprocal(denom, approx=True)).astype(bf16)  # (S, SH)
        # Per-head context, already head-concatenated along lanes.
        ctx_rows.append(jnp.dot(probs, vb_bd, preferred_element_type=f32))

    ctx = jnp.concatenate(ctx_rows, axis=0)                          # (M, D)
    attn = jnp.dot(ctx.astype(bf16), wo_ref[...],
                   preferred_element_type=f32) + bo_ref[...]

    # residual + norm1 (attention dropout == identity in eval)
    x = _layer_norm(x + attn, ln1g_ref[...], ln1b_ref[...])

    # --- Feed-forward ---------------------------------------------------------
    h = jnp.dot(x.astype(bf16), w1_ref[...], preferred_element_type=f32) + b1_ref[...]
    h = jnp.maximum(h, 0.0)                                          # ReLU
    ffn = jnp.dot(h.astype(bf16), w2_ref[...], preferred_element_type=f32) + b2_ref[...]

    # residual + norm2 (FFN dropout == identity in eval)
    x = _layer_norm(x + ffn, ln2g_ref[...], ln2b_ref[...])
    x_scr[...] = x

    # --- Classifier head on the CLS rows (last grid step only) ---------------
    @pl.when(l == pl.num_programs(0) - 1)
    def _head():
        cls = jnp.concatenate(
            [x[b * seq:b * seq + 1, :] for b in range(batch)], axis=0)   # (B, D)
        cls = _layer_norm(cls, hg_ref[...], hb_ref[...])
        out = jnp.dot(cls, wh_ref[...], preferred_element_type=f32) + bh_ref[...]
        o_ref[...] = out.astype(o_ref.dtype)


# ---------------------------------------------------------------------------
# Wrapper: layout plumbing + per-layer grid pallas_call.
# ---------------------------------------------------------------------------
def transformer_forward(x, p):
    # x: (B, 2, L) with L a multiple of PATCH (PyTorch input layout).
    B, C, L = x.shape
    assert L % PATCH == 0
    P = L // PATCH
    S = P + 1                                   # +1 for the cls token
    assert S % 8 == 0, "sequence length (num_patches + 1) must be 8-aligned"
    M = B * S
    SH = N_HEAD * S
    f32, bf16 = jnp.float32, jnp.bfloat16

    # unfold(2, PATCH, PATCH) + transpose(1,2) + flatten(start_dim=2)
    patches = x.reshape(B, C, P, PATCH).transpose(0, 2, 1, 3).reshape(B, P, C * PATCH)
    # Zero "patch" in the cls slot; the cls token itself is injected through
    # the additive term below (zero row @ W_emb == 0).
    tokens = jnp.concatenate(
        [jnp.zeros((B, 1, C * PATCH), x.dtype), patches], axis=1)       # (B, S, 180)
    x_in = tokens.reshape(M, C * PATCH)

    # Pad the embedding contraction dim to a lane multiple; cast all matmul
    # weights/operands to bf16 (halves weight DMA, native MXU bf16).
    pad = (-x_in.shape[1]) % 128
    x_in = jnp.pad(x_in, ((0, 0), (0, pad))).astype(bf16)
    wemb = jnp.pad(p['w_emb'], ((0, pad), (0, 0))).astype(bf16)

    # Fold cls token, embedding bias and positional encoding into one f32 add.
    add = p['pe'][:S] + jnp.concatenate(
        [p['cls'][None, :], jnp.tile(p['b_emb'][None, :], (P, 1))], axis=0)
    add = jnp.tile(add, (B, 1)).astype(f32)                              # (M, D)

    # Block-diagonal 0/1 masks for packed-head attention.
    head_of_lane = jnp.arange(SH) // S
    head_of_dim = jnp.arange(D_MODEL) // HEAD_DIM
    mask_kv = (head_of_lane[:, None] == head_of_dim[None, :]).astype(bf16)   # (SH, D)
    mask_e = (head_of_lane[:, None] == head_of_lane[None, :]).astype(bf16)   # (SH, SH)

    wq, wk = p['wq'].astype(bf16), p['wk'].astype(bf16)
    wv, wo = p['wv'].astype(bf16), p['wo'].astype(bf16)
    w1, w2 = p['w1'].astype(bf16), p['w2'].astype(bf16)

    def rep(arr):       # layer-invariant operand: fetched once, stays resident
        nd = arr.ndim
        return pl.BlockSpec(arr.shape, lambda l, _nd=nd: (0,) * _nd)

    def per_layer(arr):  # (N_LAYERS, ...) stack: one layer slice per grid step
        nd = arr.ndim - 1
        return pl.BlockSpec((None,) + arr.shape[1:],
                            lambda l, _nd=nd: (l,) + (0,) * _nd)

    operands = (x_in, wemb, add, mask_kv, mask_e,
                wq, p['bq'], wk, p['bk'], wv, p['bv'], wo, p['bo'],
                p['ln1g'], p['ln1b'], w1, p['b1'], w2, p['b2'],
                p['ln2g'], p['ln2b'],
                p['hg'], p['hb'], p['wh'], p['bh'])
    in_specs = [rep(x_in), rep(wemb), rep(add), rep(mask_kv), rep(mask_e),
                per_layer(wq), per_layer(p['bq']), per_layer(wk), per_layer(p['bk']),
                per_layer(wv), per_layer(p['bv']), per_layer(wo), per_layer(p['bo']),
                per_layer(p['ln1g']), per_layer(p['ln1b']),
                per_layer(w1), per_layer(p['b1']), per_layer(w2), per_layer(p['b2']),
                per_layer(p['ln2g']), per_layer(p['ln2b']),
                rep(p['hg']), rep(p['hb']), rep(p['wh']), rep(p['bh'])]

    kern = functools.partial(transformer_kernel, batch=B, seq=S)
    # TODO(synk): on v7x the batch could additionally be split across the two
    # TensorCores (leading "parallel" batch axis / core_map); left single-core
    # here since with B=2 the kernel is weight-DMA bound and the split would
    # duplicate the per-layer weight traffic.
    return pl.pallas_call(
        kern,
        out_shape=jax.ShapeDtypeStruct((B, NUM_CLASSES), jnp.float32),
        grid_spec=pltpu.PrefetchScalarGridSpec(
            num_scalar_prefetch=0,
            grid=(N_LAYERS,),
            in_specs=in_specs,
            out_specs=pl.BlockSpec((B, NUM_CLASSES), lambda l: (0, 0)),
            scratch_shapes=[pltpu.VMEM((M, D_MODEL), jnp.float32)],
        ),
        compiler_params=pltpu.CompilerParams(
            dimension_semantics=("arbitrary",),
            vmem_limit_bytes=32 * 1024 * 1024),
    )(*operands)


# ---------------------------------------------------------------------------
# Deterministic synthetic parameters (no checkpoint loading).
# ---------------------------------------------------------------------------
def make_params(key, max_len):
    keys = iter(jax.random.split(key, 32))

    def nrm(shape, scale):
        return scale * jax.random.normal(next(keys), shape, jnp.float32)

    p = {}
    p['w_emb'] = nrm((PATCH_DIM, D_MODEL), 1.0 / math.sqrt(PATCH_DIM))
    p['b_emb'] = nrm((D_MODEL,), 0.02)
    p['cls'] = nrm((D_MODEL,), 1.0)

    p['wq'] = nrm((N_LAYERS, D_MODEL, D_MODEL), 1.0 / math.sqrt(D_MODEL))
    p['bq'] = nrm((N_LAYERS, 1, D_MODEL), 0.02)
    p['wk'] = nrm((N_LAYERS, D_MODEL, D_MODEL), 1.0 / math.sqrt(D_MODEL))
    p['bk'] = nrm((N_LAYERS, 1, D_MODEL), 0.02)
    p['wv'] = nrm((N_LAYERS, D_MODEL, D_MODEL), 1.0 / math.sqrt(D_MODEL))
    p['bv'] = nrm((N_LAYERS, 1, D_MODEL), 0.02)
    p['wo'] = nrm((N_LAYERS, D_MODEL, D_MODEL), 1.0 / math.sqrt(D_MODEL))
    p['bo'] = nrm((N_LAYERS, 1, D_MODEL), 0.02)

    p['ln1g'] = 1.0 + nrm((N_LAYERS, 1, D_MODEL), 0.05)
    p['ln1b'] = nrm((N_LAYERS, 1, D_MODEL), 0.05)
    p['w1'] = nrm((N_LAYERS, D_MODEL, D_FF), 1.0 / math.sqrt(D_MODEL))
    p['b1'] = nrm((N_LAYERS, 1, D_FF), 0.02)
    p['w2'] = nrm((N_LAYERS, D_FF, D_MODEL), 1.0 / math.sqrt(D_FF))
    p['b2'] = nrm((N_LAYERS, 1, D_MODEL), 0.02)
    p['ln2g'] = 1.0 + nrm((N_LAYERS, 1, D_MODEL), 0.05)
    p['ln2b'] = nrm((N_LAYERS, 1, D_MODEL), 0.05)

    p['hg'] = 1.0 + nrm((1, D_MODEL), 0.05)
    p['hb'] = nrm((1, D_MODEL), 0.05)
    p['wh'] = nrm((D_MODEL, NUM_CLASSES), 1.0 / math.sqrt(D_MODEL))
    p['bh'] = nrm((1, NUM_CLASSES), 0.02)

    # Sin/cos positional encoding, exactly as in the PyTorch module.
    pos = jnp.arange(max_len, dtype=jnp.float32)[:, None]
    div = jnp.exp(jnp.arange(0, D_MODEL, 2, dtype=jnp.float32)
                  * (-math.log(10000.0) / D_MODEL))
    pe = jnp.zeros((max_len, D_MODEL), jnp.float32)
    pe = pe.at[:, 0::2].set(jnp.sin(pos * div))
    pe = pe.at[:, 1::2].set(jnp.cos(pos * div))
    p['pe'] = pe
    return p


# ---------------------------------------------------------------------------
# Pure-JAX reference mirroring the kernel's numerics policy (bf16 matmul
# operands, f32 accumulation / LayerNorm / softmax) but with standard per-head
# attention — validates the block-diagonal restructuring and layer plumbing.
# ---------------------------------------------------------------------------
def ref_forward(x, p):
    f32, bf16 = jnp.float32, jnp.bfloat16
    B, C, L = x.shape
    P = L // PATCH
    S = P + 1

    def ln(v, g, b):
        mu = jnp.mean(v, -1, keepdims=True)
        var = jnp.mean((v - mu) ** 2, -1, keepdims=True)
        return (v - mu) * lax.rsqrt(var + LN_EPS) * g + b

    def bdot(a, w):
        return jnp.dot(a.astype(bf16), w.astype(bf16), preferred_element_type=f32)

    tok = x.reshape(B, C, P, PATCH).transpose(0, 2, 1, 3).reshape(B, P, C * PATCH)
    h = bdot(tok, p['w_emb']) + p['b_emb']
    cls = jnp.broadcast_to(p['cls'], (B, 1, D_MODEL))
    h = jnp.concatenate([cls, h], axis=1) + p['pe'][:S][None]

    for l in range(N_LAYERS):
        q = (bdot(h, p['wq'][l]) + p['bq'][l]).reshape(B, S, N_HEAD, HEAD_DIM)
        k = (bdot(h, p['wk'][l]) + p['bk'][l]).reshape(B, S, N_HEAD, HEAD_DIM)
        v = (bdot(h, p['wv'][l]) + p['bv'][l]).reshape(B, S, N_HEAD, HEAD_DIM)
        s = jnp.einsum('bshe,bthe->bhst', q.astype(bf16), k.astype(bf16),
                       preferred_element_type=f32) / math.sqrt(HEAD_DIM)
        a = jax.nn.softmax(s, axis=-1)
        o = jnp.einsum('bhst,bthe->bshe', a.astype(bf16), v.astype(bf16),
                       preferred_element_type=f32).reshape(B, S, D_MODEL)
        o = bdot(o, p['wo'][l]) + p['bo'][l]
        h = ln(h + o, p['ln1g'][l], p['ln1b'][l])
        f = bdot(jax.nn.relu(bdot(h, p['w1'][l]) + p['b1'][l]), p['w2'][l]) + p['b2'][l]
        h = ln(h + f, p['ln2g'][l], p['ln2b'][l])

    c = ln(h[:, 0], p['hg'], p['hb'])
    return jnp.dot(c, p['wh']) + p['bh']


if __name__ == "__main__":
    key = jax.random.PRNGKey(0)
    kx, kp = jax.random.split(key)

    # Small shapes consistent with the module: batch=2, 2 channels,
    # 15 patches of 90 samples -> seq len 16 (cls + 15 patches).
    B, C, P = 2, 2, 15
    L = P * PATCH                               # 1350
    x = jax.random.normal(kx, (B, C, L), jnp.float32)

    params = make_params(kp, max_len=P + 1)

    out = jax.block_until_ready(jax.jit(transformer_forward)(x, params))
    assert out.shape == (B, NUM_CLASSES), out.shape

    ref = jax.block_until_ready(jax.jit(ref_forward)(x, params))
    assert jnp.allclose(out, ref, rtol=5e-2, atol=5e-2), (out, ref)

    print("KERNEL_OK")
</pallas_src>

<mosaic_0001>
module attributes {stable_mosaic.version = 11 : i64} {
  func.func @transformer_kernel(%arg0: i32, %arg1: memref<32x256xbf16, #tpu.memory_space<vmem>>, %arg2: memref<256x128xbf16, #tpu.memory_space<vmem>>, %arg3: memref<32x128xf32, #tpu.memory_space<vmem>>, %arg4: memref<128x128xbf16, #tpu.memory_space<vmem>>, %arg5: memref<128x128xbf16, #tpu.memory_space<vmem>>, %arg6: memref<1x128x128xbf16, #tpu.memory_space<vmem>>, %arg7: memref<1x1x128xf32, #tpu.memory_space<vmem>>, %arg8: memref<1x128x128xbf16, #tpu.memory_space<vmem>>, %arg9: memref<1x1x128xf32, #tpu.memory_space<vmem>>, %arg10: memref<1x128x128xbf16, #tpu.memory_space<vmem>>, %arg11: memref<1x1x128xf32, #tpu.memory_space<vmem>>, %arg12: memref<1x128x128xbf16, #tpu.memory_space<vmem>>, %arg13: memref<1x1x128xf32, #tpu.memory_space<vmem>>, %arg14: memref<1x1x128xf32, #tpu.memory_space<vmem>>, %arg15: memref<1x1x128xf32, #tpu.memory_space<vmem>>, %arg16: memref<1x128x512xbf16, #tpu.memory_space<vmem>>, %arg17: memref<1x1x512xf32, #tpu.memory_space<vmem>>, %arg18: memref<1x512x128xbf16, #tpu.memory_space<vmem>>, %arg19: memref<1x1x128xf32, #tpu.memory_space<vmem>>, %arg20: memref<1x1x128xf32, #tpu.memory_space<vmem>>, %arg21: memref<1x1x128xf32, #tpu.memory_space<vmem>>, %arg22: memref<1x128xf32, #tpu.memory_space<vmem>>, %arg23: memref<1x128xf32, #tpu.memory_space<vmem>>, %arg24: memref<128x1xf32, #tpu.memory_space<vmem>>, %arg25: memref<1x1xf32, #tpu.memory_space<vmem>>, %arg26: memref<2x1xf32, #tpu.memory_space<vmem>>, %arg27: memref<32x128xf32, #tpu.memory_space<vmem>>) attributes {dimension_semantics = [#tpu.dimension_semantics<arbitrary>], iteration_bounds = array<i64: 6>, scalar_prefetch = 0 : i64, scratch_operands = 1 : i64, tpu.core_type = #tpu.core_type<tc>, window_params = [{pipeline_mode = #tpu.pipeline_mode<synchronous>, transform_indices = @transform_0, window_bounds = array<i64: 32, 256>}, {pipeline_mode = #tpu.pipeline_mode<synchronous>, transform_indices = @transform_1, window_bounds = array<i64: 256, 128>}, {pipeline_mode = #tpu.pipeline_mode<synchronous>, transform_indices = @transform_2, window_bounds = array<i64: 32, 128>}, {pipeline_mode = #tpu.pipeline_mode<synchronous>, transform_indices = @transform_3, window_bounds = array<i64: 128, 128>}, {pipeline_mode = #tpu.pipeline_mode<synchronous>, transform_indices = @transform_4, window_bounds = array<i64: 128, 128>}, {transform_indices = @transform_5, window_bounds = array<i64: 1, 128, 128>}, {transform_indices = @transform_6, window_bounds = array<i64: 1, 1, 128>}, {transform_indices = @transform_7, window_bounds = array<i64: 1, 128, 128>}, {transform_indices = @transform_8, window_bounds = array<i64: 1, 1, 128>}, {transform_indices = @transform_9, window_bounds = array<i64: 1, 128, 128>}, {transform_indices = @transform_10, window_bounds = array<i64: 1, 1, 128>}, {transform_indices = @transform_11, window_bounds = array<i64: 1, 128, 128>}, {transform_indices = @transform_12, window_bounds = array<i64: 1, 1, 128>}, {transform_indices = @transform_13, window_bounds = array<i64: 1, 1, 128>}, {transform_indices = @transform_14, window_bounds = array<i64: 1, 1, 128>}, {transform_indices = @transform_15, window_bounds = array<i64: 1, 128, 512>}, {transform_indices = @transform_16, window_bounds = array<i64: 1, 1, 512>}, {transform_indices = @transform_17, window_bounds = array<i64: 1, 512, 128>}, {transform_indices = @transform_18, window_bounds = array<i64: 1, 1, 128>}, {transform_indices = @transform_19, window_bounds = array<i64: 1, 1, 128>}, {transform_indices = @transform_20, window_bounds = array<i64: 1, 1, 128>}, {pipeline_mode = #tpu.pipeline_mode<synchronous>, transform_indices = @transform_21, window_bounds = array<i64: 1, 128>}, {pipeline_mode = #tpu.pipeline_mode<synchronous>, transform_indices = @transform_22, window_bounds = array<i64: 1, 128>}, {pipeline_mode = #tpu.pipeline_mode<synchronous>, transform_indices = @transform_23, window_bounds = array<i64: 128, 1>}, {pipeline_mode = #tpu.pipeline_mode<synchronous>, transform_indices = @transform_24, window_bounds = array<i64: 1, 1>}, {pipeline_mode = #tpu.pipeline_mode<synchronous>, transform_indices = @transform_25, window_bounds = array<i64: 2, 1>}]} {
    %c0_i32 = arith.constant 0 : i32
    %0 = arith.cmpi eq, %arg0, %c0_i32 : i32
    %1 = arith.extui %0 : i1 to i32
    %c0_i32_0 = arith.constant 0 : i32
    %2 = arith.cmpi ne, %1, %c0_i32_0 : i32
    scf.if %2 {
      %c0_83 = arith.constant 0 : index
      %c0_84 = arith.constant 0 : index
      %157 = vector.load %arg1[%c0_83, %c0_84] : memref<32x256xbf16, #tpu.memory_space<vmem>>, vector<32x256xbf16>
      %c0_85 = arith.constant 0 : index
      %c0_86 = arith.constant 0 : index
      %158 = vector.load %arg2[%c0_85, %c0_86] : memref<256x128xbf16, #tpu.memory_space<vmem>>, vector<256x128xbf16>
      %cst_87 = arith.constant dense<0.000000e+00> : vector<32x128xf32>
      %159 = tpu.matmul %157, %158, %cst_87 {dimension_numbers = #tpu.dot_dimension_numbers<[1], [0], [0], [1], [0, 0, 1, 1], [], []>} : vector<32x256xbf16>, vector<256x128xbf16>, vector<32x128xf32> -> vector<32x128xf32>
      %c0_88 = arith.constant 0 : index
      %c0_89 = arith.constant 0 : index
      %160 = vector.load %arg3[%c0_88, %c0_89] : memref<32x128xf32, #tpu.memory_space<vmem>>, vector<32x128xf32>
      %161 = arith.addf %159, %160 : vector<32x128xf32>
      %c0_90 = arith.constant 0 : index
      %c0_91 = arith.constant 0 : index
      %162 = vector.load %arg27[%c0_90, %c0_91] : memref<32x128xf32, #tpu.memory_space<vmem>>, vector<32x128xf32>
      tpu.vector_store %arg27[%c0_90, %c0_91], %161 {strides = array<i32>} : memref<32x128xf32, #tpu.memory_space<vmem>>, vector<32x128xf32>,
    } else {
    }
    %c0 = arith.constant 0 : index
    %c0_1 = arith.constant 0 : index
    %3 = vector.load %arg27[%c0, %c0_1] : memref<32x128xf32, #tpu.memory_space<vmem>>, vector<32x128xf32>
    %4 = arith.truncf %3 : vector<32x128xf32> to vector<32x128xbf16>
    %c0_2 = arith.constant 0 : index
    %c0_3 = arith.constant 0 : index
    %c0_4 = arith.constant 0 : index
    %5 = vector.load %arg6[%c0_2, %c0_3, %c0_4] : memref<1x128x128xbf16, #tpu.memory_space<vmem>>, vector<1x128x128xbf16>
    %6 = vector.shape_cast %5 : vector<1x128x128xbf16> to vector<128x128xbf16>
    %cst = arith.constant dense<0.000000e+00> : vector<32x128xf32>
    %7 = tpu.matmul %4, %6, %cst {dimension_numbers = #tpu.dot_dimension_numbers<[1], [0], [0], [1], [0, 0, 1, 1], [], []>} : vector<32x128xbf16>, vector<128x128xbf16>, vector<32x128xf32> -> vector<32x128xf32>
    %c0_5 = arith.constant 0 : index
    %c0_6 = arith.constant 0 : index
    %c0_7 = arith.constant 0 : index
    %8 = vector.load %arg7[%c0_5, %c0_6, %c0_7] : memref<1x1x128xf32, #tpu.memory_space<vmem>>, vector<1x1x128xf32>
    %9 = vector.shape_cast %8 : vector<1x1x128xf32> to vector<1x128xf32>
    %10 = vector.broadcast %9 : vector<1x128xf32> to vector<32x128xf32>
    %11 = arith.addf %7, %10 : vector<32x128xf32>
    %c0_8 = arith.constant 0 : index
    %c0_9 = arith.constant 0 : index
    %c0_10 = arith.constant 0 : index
    %12 = vector.load %arg8[%c0_8, %c0_9, %c0_10] : memref<1x128x128xbf16, #tpu.memory_space<vmem>>, vector<1x128x128xbf16>
    %13 = vector.shape_cast %12 : vector<1x128x128xbf16> to vector<128x128xbf16>
    %cst_11 = arith.constant dense<0.000000e+00> : vector<32x128xf32>
    %14 = tpu.matmul %4, %13, %cst_11 {dimension_numbers = #tpu.dot_dimension_numbers<[1], [0], [0], [1], [0, 0, 1, 1], [], []>} : vector<32x128xbf16>, vector<128x128xbf16>, vector<32x128xf32> -> vector<32x128xf32>
    %c0_12 = arith.constant 0 : index
    %c0_13 = arith.constant 0 : index
    %c0_14 = arith.constant 0 : index
    %15 = vector.load %arg9[%c0_12, %c0_13, %c0_14] : memref<1x1x128xf32, #tpu.memory_space<vmem>>, vector<1x1x128xf32>
    %16 = vector.shape_cast %15 : vector<1x1x128xf32> to vector<1x128xf32>
    %17 = vector.broadcast %16 : vector<1x128xf32> to vector<32x128xf32>
    %18 = arith.addf %14, %17 : vector<32x128xf32>
    %c0_15 = arith.constant 0 : index
    %c0_16 = arith.constant 0 : index
    %c0_17 = arith.constant 0 : index
    %19 = vector.load %arg10[%c0_15, %c0_16, %c0_17] : memref<1x128x128xbf16, #tpu.memory_space<vmem>>, vector<1x128x128xbf16>
    %20 = vector.shape_cast %19 : vector<1x128x128xbf16> to vector<128x128xbf16>
    %cst_18 = arith.constant dense<0.000000e+00> : vector<32x128xf32>
    %21 = tpu.matmul %4, %20, %cst_18 {dimension_numbers = #tpu.dot_dimension_numbers<[1], [0], [0], [1], [0, 0, 1, 1], [], []>} : vector<32x128xbf16>, vector<128x128xbf16>, vector<32x128xf32> -> vector<32x128xf32>
    %c0_19 = arith.constant 0 : index
    %c0_20 = arith.constant 0 : index
    %c0_21 = arith.constant 0 : index
    %22 = vector.load %arg11[%c0_19, %c0_20, %c0_21] : memref<1x1x128xf32, #tpu.memory_space<vmem>>, vector<1x1x128xf32>
    %23 = vector.shape_cast %22 : vector<1x1x128xf32> to vector<1x128xf32>
    %24 = vector.broadcast %23 : vector<1x128xf32> to vector<32x128xf32>
    %25 = arith.addf %21, %24 : vector<32x128xf32>
    %c0_22 = arith.constant 0 : index
    %c0_23 = arith.constant 0 : index
    %26 = vector.load %arg4[%c0_22, %c0_23] : memref<128x128xbf16, #tpu.memory_space<vmem>>, vector<128x128xbf16>
    %c0_24 = arith.constant 0 : index
    %c0_25 = arith.constant 0 : index
    %27 = vector.load %arg5[%c0_24, %c0_25] : memref<128x128xbf16, #tpu.memory_space<vmem>>, vector<128x128xbf16>
    %28 = vector.extract_strided_slice %11 {offsets = [0, 0], sizes = [16, 128], strides = [1, 1]} : vector<32x128xf32> to vector<16x128xf32>
    %29 = arith.truncf %28 : vector<16x128xf32> to vector<16x128xbf16>
    %30 = vector.extract_strided_slice %18 {offsets = [0, 0], sizes = [16, 128], strides = [1, 1]} : vector<32x128xf32> to vector<16x128xf32>
    %31 = arith.truncf %30 : vector<16x128xf32> to vector<16x128xbf16>
    %32 = vector.extract_strided_slice %25 {offsets = [0, 0], sizes = [16, 128], strides = [1, 1]} : vector<32x128xf32> to vector<16x128xf32>
    %33 = arith.truncf %32 : vector<16x128xf32> to vector<16x128xbf16>
    %34 = tpu.concatenate %31, %31, %31, %31, %31, %31, %31, %31 in 0 : vector<16x128xbf16>, vector<16x128xbf16>, vector<16x128xbf16>, vector<16x128xbf16>, vector<16x128xbf16>, vector<16x128xbf16>, vector<16x128xbf16>, vector<16x128xbf16> -> vector<128x128xbf16>
    %35 = arith.mulf %34, %26 : vector<128x128xbf16>
    %36 = tpu.concatenate %33, %33, %33, %33, %33, %33, %33, %33 in 0 : vector<16x128xbf16>, vector<16x128xbf16>, vector<16x128xbf16>, vector<16x128xbf16>, vector<16x128xbf16>, vector<16x128xbf16>, vector<16x128xbf16>, vector<16x128xbf16> -> vector<128x128xbf16>
    %37 = arith.mulf %36, %26 : vector<128x128xbf16>
    %cst_26 = arith.constant dense<0.000000e+00> : vector<16x128xf32>
    %38 = tpu.matmul %29, %35, %cst_26 {dimension_numbers = #tpu.dot_dimension_numbers<[1], [1], [0], [0], [0, 0, 1, 0], [], []>} : vector<16x128xbf16>, vector<128x128xbf16>, vector<16x128xf32> -> vector<16x128xf32>
    %cst_27 = arith.constant 2.500000e-01 : f32
    %39 = vector.broadcast %cst_27 : f32 to vector<16x128xf32>
    %40 = arith.mulf %38, %39 : vector<16x128xf32>
    %cst_28 = arith.constant dense<0xFF800000> : vector<16xf32>
    %41 = vector.multi_reduction <maximumf>, %40, %cst_28 [1] : vector<16x128xf32> to vector<16xf32>
    %42 = vector.shape_cast %41 : vector<16xf32> to vector<16x1xf32>
    %43 = vector.broadcast %42 : vector<16x1xf32> to vector<16x128xf32>
    %44 = arith.subf %40, %43 : vector<16x128xf32>
    %45 = math.exp %44 : vector<16x128xf32>
    %46 = arith.truncf %45 : vector<16x128xf32> to vector<16x128xbf16>
    %cst_29 = arith.constant dense<0.000000e+00> : vector<16x128xf32>
    %47 = tpu.matmul %46, %27, %cst_29 {dimension_numbers = #tpu.dot_dimension_numbers<[1], [0], [0], [1], [0, 0, 1, 1], [], []>} : vector<16x128xbf16>, vector<128x128xbf16>, vector<16x128xf32> -> vector<16x128xf32>
    %48 = tpu.reciprocal %47 {approx = true} : vector<16x128xf32> -> vector<16x128xf32>
    %49 = arith.mulf %45, %48 : vector<16x128xf32>
    %50 = arith.truncf %49 : vector<16x128xf32> to vector<16x128xbf16>
    %cst_30 = arith.constant dense<0.000000e+00> : vector<16x128xf32>
    %51 = tpu.matmul %50, %37, %cst_30 {dimension_numbers = #tpu.dot_dimension_numbers<[1], [0], [0], [1], [0, 0, 1, 1], [], []>} : vector<16x128xbf16>, vector<128x128xbf16>, vector<16x128xf32> -> vector<16x128xf32>
    %52 = vector.extract_strided_slice %11 {offsets = [16, 0], sizes = [16, 128], strides = [1, 1]} : vector<32x128xf32> to vector<16x128xf32>
    %53 = arith.truncf %52 : vector<16x128xf32> to vector<16x128xbf16>
    %54 = vector.extract_strided_slice %18 {offsets = [16, 0], sizes = [16, 128], strides = [1, 1]} : vector<32x128xf32> to vector<16x128xf32>
    %55 = arith.truncf %54 : vector<16x128xf32> to vector<16x128xbf16>
    %56 = vector.extract_strided_slice %25 {offsets = [16, 0], sizes = [16, 128], strides = [1, 1]} : vector<32x128xf32> to vector<16x128xf32>
    %57 = arith.truncf %56 : vector<16x128xf32> to vector<16x128xbf16>
    %58 = tpu.concatenate %55, %55, %55, %55, %55, %55, %55, %55 in 0 : vector<16x128xbf16>, vector<16x128xbf16>, vector<16x128xbf16>, vector<16x128xbf16>, vector<16x128xbf16>, vector<16x128xbf16>, vector<16x128xbf16>, vector<16x128xbf16> -> vector<128x128xbf16>
    %59 = arith.mulf %58, %26 : vector<128x128xbf16>
    %60 = tpu.concatenate %57, %57, %57, %57, %57, %57, %57, %57 in 0 : vector<16x128xbf16>, vector<16x128xbf16>, vector<16x128xbf16>, vector<16x128xbf16>, vector<16x128xbf16>, vector<16x128xbf16>, vector<16x128xbf16>, vector<16x128xbf16> -> vector<128x128xbf16>
    %61 = arith.mulf %60, %26 : vector<128x128xbf16>
    %cst_31 = arith.constant dense<0.000000e+00> : vector<16x128xf32>
    %62 = tpu.matmul %53, %59, %cst_31 {dimension_numbers = #tpu.dot_dimension_numbers<[1], [1], [0], [0], [0, 0, 1, 0], [], []>} : vector<16x128xbf16>, vector<128x128xbf16>, vector<16x128xf32> -> vector<16x128xf32>
    %cst_32 = arith.constant 2.500000e-01 : f32
    %63 = vector.broadcast %cst_32 : f32 to vector<16x128xf32>
    %64 = arith.mulf %62, %63 : vector<16x128xf32>
    %cst_33 = arith.constant dense<0xFF800000> : vector<16xf32>
    %65 = vector.multi_reduction <maximumf>, %64, %cst_33 [1] : vector<16x128xf32> to vector<16xf32>
    %66 = vector.shape_cast %65 : vector<16xf32> to vector<16x1xf32>
    %67 = vector.broadcast %66 : vector<16x1xf32> to vector<16x128xf32>
    %68 = arith.subf %64, %67 : vector<16x128xf32>
    %69 = math.exp %68 : vector<16x128xf32>
    %70 = arith.truncf %69 : vector<16x128xf32> to vector<16x128xbf16>
    %cst_34 = arith.constant dense<0.000000e+00> : vector<16x128xf32>
    %71 = tpu.matmul %70, %27, %cst_34 {dimension_numbers = #tpu.dot_dimension_numbers<[1], [0], [0], [1], [0, 0, 1, 1], [], []>} : vector<16x128xbf16>, vector<128x128xbf16>, vector<16x128xf32> -> vector<16x128xf32>
    %72 = tpu.reciprocal %71 {approx = true} : vector<16x128xf32> -> vector<16x128xf32>
    %73 = arith.mulf %69, %72 : vector<16x128xf32>
    %74 = arith.truncf %73 : vector<16x128xf32> to vector<16x128xbf16>
    %cst_35 = arith.constant dense<0.000000e+00> : vector<16x128xf32>
    %75 = tpu.matmul %74, %61, %cst_35 {dimension_numbers = #tpu.dot_dimension_numbers<[1], [0], [0], [1], [0, 0, 1, 1], [], []>} : vector<16x128xbf16>, vector<128x128xbf16>, vector<16x128xf32> -> vector<16x128xf32>
    %76 = tpu.concatenate %51, %75 in 0 : vector<16x128xf32>, vector<16x128xf32> -> vector<32x128xf32>
    %77 = arith.truncf %76 : vector<32x128xf32> to vector<32x128xbf16>
    %c0_36 = arith.constant 0 : index
    %c0_37 = arith.constant 0 : index
    %c0_38 = arith.constant 0 : index
    %78 = vector.load %arg12[%c0_36, %c0_37, %c0_38] : memref<1x128x128xbf16, #tpu.memory_space<vmem>>, vector<1x128x128xbf16>
    %79 = vector.shape_cast %78 : vector<1x128x128xbf16> to vector<128x128xbf16>
    %cst_39 = arith.constant dense<0.000000e+00> : vector<32x128xf32>
    %80 = tpu.matmul %77, %79, %cst_39 {dimension_numbers = #tpu.dot_dimension_numbers<[1], [0], [0], [1], [0, 0, 1, 1], [], []>} : vector<32x128xbf16>, vector<128x128xbf16>, vector<32x128xf32> -> vector<32x128xf32>
    %c0_40 = arith.constant 0 : index
    %c0_41 = arith.constant 0 : index
    %c0_42 = arith.constant 0 : index
    %81 = vector.load %arg13[%c0_40, %c0_41, %c0_42] : memref<1x1x128xf32, #tpu.memory_space<vmem>>, vector<1x1x128xf32>
    %82 = vector.shape_cast %81 : vector<1x1x128xf32> to vector<1x128xf32>
    %83 = vector.broadcast %82 : vector<1x128xf32> to vector<32x128xf32>
    %84 = arith.addf %80, %83 : vector<32x128xf32>
    %85 = arith.addf %3, %84 : vector<32x128xf32>
    %c0_43 = arith.constant 0 : index
    %c0_44 = arith.constant 0 : index
    %c0_45 = arith.constant 0 : index
    %86 = vector.load %arg14[%c0_43, %c0_44, %c0_45] : memref<1x1x128xf32, #tpu.memory_space<vmem>>, vector<1x1x128xf32>
    %87 = vector.shape_cast %86 : vector<1x1x128xf32> to vector<1x128xf32>
    %c0_46 = arith.constant 0 : index
    %c0_47 = arith.constant 0 : index
    %c0_48 = arith.constant 0 : index
    %88 = vector.load %arg15[%c0_46, %c0_47, %c0_48] : memref<1x1x128xf32, #tpu.memory_space<vmem>>, vector<1x1x128xf32>
    %89 = vector.shape_cast %88 : vector<1x1x128xf32> to vector<1x128xf32>
    %cst_49 = arith.constant dense<0.000000e+00> : vector<32xf32>
    %90 = vector.multi_reduction <add>, %85, %cst_49 [1] : vector<32x128xf32> to vector<32xf32>
    %91 = vector.shape_cast %90 : vector<32xf32> to vector<32x1xf32>
    %cst_50 = arith.constant 1.280000e+02 : f32
    %92 = vector.broadcast %cst_50 : f32 to vector<32x1xf32>
    %93 = arith.divf %91, %92 : vector<32x1xf32>
    %94 = vector.broadcast %93 : vector<32x1xf32> to vector<32x128xf32>
    %95 = arith.subf %85, %94 : vector<32x128xf32>
    %96 = arith.mulf %95, %95 : vector<32x128xf32>
    %cst_51 = arith.constant dense<0.000000e+00> : vector<32xf32>
    %97 = vector.multi_reduction <add>, %96, %cst_51 [1] : vector<32x128xf32> to vector<32xf32>
    %98 = vector.shape_cast %97 : vector<32xf32> to vector<32x1xf32>
    %cst_52 = arith.constant 1.280000e+02 : f32
    %99 = vector.broadcast %cst_52 : f32 to vector<32x1xf32>
    %100 = arith.divf %98, %99 : vector<32x1xf32>
    %cst_53 = arith.constant 9.99999974E-6 : f32
    %101 = vector.broadcast %cst_53 : f32 to vector<32x1xf32>
    %102 = arith.addf %100, %101 : vector<32x1xf32>
    %103 = math.rsqrt %102 : vector<32x1xf32>
    %104 = vector.broadcast %103 : vector<32x1xf32> to vector<32x128xf32>
    %105 = arith.mulf %95, %104 : vector<32x128xf32>
    %106 = vector.broadcast %87 : vector<1x128xf32> to vector<32x128xf32>
    %107 = arith.mulf %105, %106 : vector<32x128xf32>
    %108 = vector.broadcast %89 : vector<1x128xf32> to vector<32x128xf32>
    %109 = arith.addf %107, %108 : vector<32x128xf32>
    %110 = arith.truncf %109 : vector<32x128xf32> to vector<32x128xbf16>
    %c0_54 = arith.constant 0 : index
    %c0_55 = arith.constant 0 : index
    %c0_56 = arith.constant 0 : index
    %111 = vector.load %arg16[%c0_54, %c0_55, %c0_56] : memref<1x128x512xbf16, #tpu.memory_space<vmem>>, vector<1x128x512xbf16>
    %112 = vector.shape_cast %111 : vector<1x128x512xbf16> to vector<128x512xbf16>
    %cst_57 = arith.constant dense<0.000000e+00> : vector<32x512xf32>
    %113 = tpu.matmul %110, %112, %cst_57 {dimension_numbers = #tpu.dot_dimension_numbers<[1], [0], [0], [1], [0, 0, 1, 1], [], []>} : vector<32x128xbf16>, vector<128x512xbf16>, vector<32x512xf32> -> vector<32x512xf32>
    %c0_58 = arith.constant 0 : index
    %c0_59 = arith.constant 0 : index
    %c0_60 = arith.constant 0 : index
    %114 = vector.load %arg17[%c0_58, %c0_59, %c0_60] : memref<1x1x512xf32, #tpu.memory_space<vmem>>, vector<1x1x512xf32>
    %115 = vector.shape_cast %114 : vector<1x1x512xf32> to vector<1x512xf32>
    %116 = vector.broadcast %115 : vector<1x512xf32> to vector<32x512xf32>
    %117 = arith.addf %113, %116 : vector<32x512xf32>
    %cst_61 = arith.constant 0.000000e+00 : f32
    %118 = vector.broadcast %cst_61 : f32 to vector<32x512xf32>
    %119 = arith.maximumf %117, %118 : vector<32x512xf32>
    %120 = arith.truncf %119 : vector<32x512xf32> to vector<32x512xbf16>
    %c0_62 = arith.constant 0 : index
    %c0_63 = arith.constant 0 : index
    %c0_64 = arith.constant 0 : index
    %121 = vector.load %arg18[%c0_62, %c0_63, %c0_64] : memref<1x512x128xbf16, #tpu.memory_space<vmem>>, vector<1x512x128xbf16>
    %122 = vector.shape_cast %121 : vector<1x512x128xbf16> to vector<512x128xbf16>
    %cst_65 = arith.constant dense<0.000000e+00> : vector<32x128xf32>
    %123 = tpu.matmul %120, %122, %cst_65 {dimension_numbers = #tpu.dot_dimension_numbers<[1], [0], [0], [1], [0, 0, 1, 1], [], []>} : vector<32x512xbf16>, vector<512x128xbf16>, vector<32x128xf32> -> vector<32x128xf32>
    %c0_66 = arith.constant 0 : index
    %c0_67 = arith.constant 0 : index
    %c0_68 = arith.constant 0 : index
    %124 = vector.load %arg19[%c0_66, %c0_67, %c0_68] : memref<1x1x128xf32, #tpu.memory_space<vmem>>, vector<1x1x128xf32>
    %125 = vector.shape_cast %124 : vector<1x1x128xf32> to vector<1x128xf32>
    %126 = vector.broadcast %125 : vector<1x128xf32> to vector<32x128xf32>
    %127 = arith.addf %123, %126 : vector<32x128xf32>
    %128 = arith.addf %109, %127 : vector<32x128xf32>
    %c0_69 = arith.constant 0 : index
    %c0_70 = arith.constant 0 : index
    %c0_71 = arith.constant 0 : index
    %129 = vector.load %arg20[%c0_69, %c0_70, %c0_71] : memref<1x1x128xf32, #tpu.memory_space<vmem>>, vector<1x1x128xf32>
    %130 = vector.shape_cast %129 : vector<1x1x128xf32> to vector<1x128xf32>
    %c0_72 = arith.constant 0 : index
    %c0_73 = arith.constant 0 : index
    %c0_74 = arith.constant 0 : index
    %131 = vector.load %arg21[%c0_72, %c0_73, %c0_74] : memref<1x1x128xf32, #tpu.memory_space<vmem>>, vector<1x1x128xf32>
    %132 = vector.shape_cast %131 : vector<1x1x128xf32> to vector<1x128xf32>
    %cst_75 = arith.constant dense<0.000000e+00> : vector<32xf32>
    %133 = vector.multi_reduction <add>, %128, %cst_75 [1] : vector<32x128xf32> to vector<32xf32>
    %134 = vector.shape_cast %133 : vector<32xf32> to vector<32x1xf32>
    %cst_76 = arith.constant 1.280000e+02 : f32
    %135 = vector.broadcast %cst_76 : f32 to vector<32x1xf32>
    %136 = arith.divf %134, %135 : vector<32x1xf32>
    %137 = vector.broadcast %136 : vector<32x1xf32> to vector<32x128xf32>
    %138 = arith.subf %128, %137 : vector<32x128xf32>
    %139 = arith.mulf %138, %138 : vector<32x128xf32>
    %cst_77 = arith.constant dense<0.000000e+00> : vector<32xf32>
    %140 = vector.multi_reduction <add>, %139, %cst_77 [1] : vector<32x128xf32> to vector<32xf32>
    %141 = vector.shape_cast %140 : vector<32xf32> to vector<32x1xf32>
    %cst_78 = arith.constant 1.280000e+02 : f32
    %142 = vector.broadcast %cst_78 : f32 to vector<32x1xf32>
    %143 = arith.divf %141, %142 : vector<32x1xf32>
    %cst_79 = arith.constant 9.99999974E-6 : f32
    %144 = vector.broadcast %cst_79 : f32 to vector<32x1xf32>
    %145 = arith.addf %143, %144 : vector<32x1xf32>
    %146 = math.rsqrt %145 : vector<32x1xf32>
    %147 = vector.broadcast %146 : vector<32x1xf32> to vector<32x128xf32>
    %148 = arith.mulf %138, %147 : vector<32x128xf32>
    %149 = vector.broadcast %130 : vector<1x128xf32> to vector<32x128xf32>
    %150 = arith.mulf %148, %149 : vector<32x128xf32>
    %151 = vector.broadcast %132 : vector<1x128xf32> to vector<32x128xf32>
    %152 = arith.addf %150, %151 : vector<32x128xf32>
    %c0_80 = arith.constant 0 : index
    %c0_81 = arith.constant 0 : index
    %153 = vector.load %arg27[%c0_80, %c0_81] : memref<32x128xf32, #tpu.memory_space<vmem>>, vector<32x128xf32>
    tpu.vector_store %arg27[%c0_80, %c0_81], %152 {strides = array<i32>} : memref<32x128xf32, #tpu.memory_space<vmem>>, vector<32x128xf32>,
    %c5_i32 = arith.constant 5 : i32
    %154 = arith.cmpi eq, %arg0, %c5_i32 : i32
    %155 = arith.extui %154 : i1 to i32
    %c0_i32_82 = arith.constant 0 : i32
    %156 = arith.cmpi ne, %155, %c0_i32_82 : i32
    scf.if %156 {
      %157 = vector.extract_strided_slice %152 {offsets = [0, 0], sizes = [1, 128], strides = [1, 1]} : vector<32x128xf32> to vector<1x128xf32>
      %158 = vector.extract_strided_slice %152 {offsets = [16, 0], sizes = [1, 128], strides = [1, 1]} : vector<32x128xf32> to vector<1x128xf32>
      %159 = tpu.concatenate %157, %158 in 0 : vector<1x128xf32>, vector<1x128xf32> -> vector<2x128xf32>
      %c0_83 = arith.constant 0 : index
      %c0_84 = arith.constant 0 : index
      %160 = vector.load %arg22[%c0_83, %c0_84] : memref<1x128xf32, #tpu.memory_space<vmem>>, vector<1x128xf32>
      %c0_85 = arith.constant 0 : index
      %c0_86 = arith.constant 0 : index
      %161 = vector.load %arg23[%c0_85, %c0_86] : memref<1x128xf32, #tpu.memory_space<vmem>>, vector<1x128xf32>
      %cst_87 = arith.constant dense<0.000000e+00> : vector<2xf32>
      %162 = vector.multi_reduction <add>, %159, %cst_87 [1] : vector<2x128xf32> to vector<2xf32>
      %163 = vector.shape_cast %162 : vector<2xf32> to vector<2x1xf32>
      %cst_88 = arith.constant 1.280000e+02 : f32
      %164 = vector.broadcast %cst_88 : f32 to vector<2x1xf32>
      %165 = arith.divf %163, %164 : vector<2x1xf32>
      %166 = vector.broadcast %165 : vector<2x1xf32> to vector<2x128xf32>
      %167 = arith.subf %159, %166 : vector<2x128xf32>
      %168 = arith.mulf %167, %167 : vector<2x128xf32>
      %cst_89 = arith.constant dense<0.000000e+00> : vector<2xf32>
      %169 = vector.multi_reduction <add>, %168, %cst_89 [1] : vector<2x128xf32> to vector<2xf32>
      %170 = vector.shape_cast %169 : vector<2xf32> to vector<2x1xf32>
      %cst_90 = arith.constant 1.280000e+02 : f32
      %171 = vector.broadcast %cst_90 : f32 to vector<2x1xf32>
      %172 = arith.divf %170, %171 : vector<2x1xf32>
      %cst_91 = arith.constant 9.99999974E-6 : f32
      %173 = vector.broadcast %cst_91 : f32 to vector<2x1xf32>
      %174 = arith.addf %172, %173 : vector<2x1xf32>
      %175 = math.rsqrt %174 : vector<2x1xf32>
      %176 = vector.broadcast %175 : vector<2x1xf32> to vector<2x128xf32>
      %177 = arith.mulf %167, %176 : vector<2x128xf32>
      %178 = vector.broadcast %160 : vector<1x128xf32> to vector<2x128xf32>
      %179 = arith.mulf %177, %178 : vector<2x128xf32>
      %180 = vector.broadcast %161 : vector<1x128xf32> to vector<2x128xf32>
      %181 = arith.addf %179, %180 : vector<2x128xf32>
      %c0_92 = arith.constant 0 : index
      %c0_93 = arith.constant 0 : index
      %182 = vector.load %arg24[%c0_92, %c0_93] : memref<128x1xf32, #tpu.memory_space<vmem>>, vector<128x1xf32>
      %cst_94 = arith.constant dense<0.000000e+00> : vector<2x1xf32>
      %183 = tpu.matmul %181, %182, %cst_94 {dimension_numbers = #tpu.dot_dimension_numbers<[1], [0], [0], [1], [0, 0, 1, 1], [], []>} : vector<2x128xf32>, vector<128x1xf32>, vector<2x1xf32> -> vector<2x1xf32>
      %c0_95 = arith.constant 0 : index
      %c0_96 = arith.constant 0 : index
      %184 = vector.load %arg25[%c0_95, %c0_96] : memref<1x1xf32, #tpu.memory_space<vmem>>, vector<1x1xf32>
      %185 = vector.broadcast %184 : vector<1x1xf32> to vector<2x1xf32>
      %186 = arith.addf %183, %185 : vector<2x1xf32>
      %c0_97 = arith.constant 0 : index
      %c0_98 = arith.constant 0 : index
      %187 = vector.load %arg26[%c0_97, %c0_98] : memref<2x1xf32, #tpu.memory_space<vmem>>, vector<2x1xf32>
      tpu.vector_store %arg26[%c0_97, %c0_98], %186 {strides = array<i32>} : memref<2x1xf32, #tpu.memory_space<vmem>>, vector<2x1xf32>,
    } else {
    }
    return
  }
  func.func @transform_0(%arg0: i32) -> (i32, i32) {
    %c0_i32 = arith.constant 0 : i32
    %c0_i32_0 = arith.constant 0 : i32
    %c0_i32_1 = arith.constant 0 : i32
    return %c0_i32, %c0_i32_0 : i32, i32
  }
  func.func @transform_1(%arg0: i32) -> (i32, i32) {
    %c0_i32 = arith.constant 0 : i32
    %c0_i32_0 = arith.constant 0 : i32
    %c0_i32_1 = arith.constant 0 : i32
    return %c0_i32, %c0_i32_0 : i32, i32
  }
  func.func @transform_2(%arg0: i32) -> (i32, i32) {
    %c0_i32 = arith.constant 0 : i32
    %c0_i32_0 = arith.constant 0 : i32
    %c0_i32_1 = arith.constant 0 : i32
    return %c0_i32, %c0_i32_0 : i32, i32
  }
  func.func @transform_3(%arg0: i32) -> (i32, i32) {
    %c0_i32 = arith.constant 0 : i32
    %c0_i32_0 = arith.constant 0 : i32
    %c0_i32_1 = arith.constant 0 : i32
    return %c0_i32, %c0_i32_0 : i32, i32
  }
  func.func @transform_4(%arg0: i32) -> (i32, i32) {
    %c0_i32 = arith.constant 0 : i32
    %c0_i32_0 = arith.constant 0 : i32
    %c0_i32_1 = arith.constant 0 : i32
    return %c0_i32, %c0_i32_0 : i32, i32
  }
  func.func @transform_5(%arg0: i32) -> (i32, i32, i32) {
    %c0_i32 = arith.constant 0 : i32
    %c0_i32_0 = arith.constant 0 : i32
    %c0_i32_1 = arith.constant 0 : i32
    return %arg0, %c0_i32, %c0_i32_0 : i32, i32, i32
  }
  func.func @transform_6(%arg0: i32) -> (i32, i32, i32) {
    %c0_i32 = arith.constant 0 : i32
    %c0_i32_0 = arith.constant 0 : i32
    %c0_i32_1 = arith.constant 0 : i32
    return %arg0, %c0_i32, %c0_i32_0 : i32, i32, i32
  }
  func.func @transform_7(%arg0: i32) -> (i32, i32, i32) {
    %c0_i32 = arith.constant 0 : i32
    %c0_i32_0 = arith.constant 0 : i32
    %c0_i32_1 = arith.constant 0 : i32
    return %arg0, %c0_i32, %c0_i32_0 : i32, i32, i32
  }
  func.func @transform_8(%arg0: i32) -> (i32, i32, i32) {
    %c0_i32 = arith.constant 0 : i32
    %c0_i32_0 = arith.constant 0 : i32
    %c0_i32_1 = arith.constant 0 : i32
    return %arg0, %c0_i32, %c0_i32_0 : i32, i32, i32
  }
  func.func @transform_9(%arg0: i32) -> (i32, i32, i32) {
    %c0_i32 = arith.constant 0 : i32
    %c0_i32_0 = arith.constant 0 : i32
    %c0_i32_1 = arith.constant 0 : i32
    return %arg0, %c0_i32, %c0_i32_0 : i32, i32, i32
  }
  func.func @transform_10(%arg0: i32) -> (i32, i32, i32) {
    %c0_i32 = arith.constant 0 : i32
    %c0_i32_0 = arith.constant 0 : i32
    %c0_i32_1 = arith.constant 0 : i32
    return %arg0, %c0_i32, %c0_i32_0 : i32, i32, i32
  }
  func.func @transform_11(%arg0: i32) -> (i32, i32, i32) {
    %c0_i32 = arith.constant 0 : i32
    %c0_i32_0 = arith.constant 0 : i32
    %c0_i32_1 = arith.constant 0 : i32
    return %arg0, %c0_i32, %c0_i32_0 : i32, i32, i32
  }
  func.func @transform_12(%arg0: i32) -> (i32, i32, i32) {
    %c0_i32 = arith.constant 0 : i32
    %c0_i32_0 = arith.constant 0 : i32
    %c0_i32_1 = arith.constant 0 : i32
    return %arg0, %c0_i32, %c0_i32_0 : i32, i32, i32
  }
  func.func @transform_13(%arg0: i32) -> (i32, i32, i32) {
    %c0_i32 = arith.constant 0 : i32
    %c0_i32_0 = arith.constant 0 : i32
    %c0_i32_1 = arith.constant 0 : i32
    return %arg0, %c0_i32, %c0_i32_0 : i32, i32, i32
  }
  func.func @transform_14(%arg0: i32) -> (i32, i32, i32) {
    %c0_i32 = arith.constant 0 : i32
    %c0_i32_0 = arith.constant 0 : i32
    %c0_i32_1 = arith.constant 0 : i32
    return %arg0, %c0_i32, %c0_i32_0 : i32, i32, i32
  }
  func.func @transform_15(%arg0: i32) -> (i32, i32, i32) {
    %c0_i32 = arith.constant 0 : i32
    %c0_i32_0 = arith.constant 0 : i32
    %c0_i32_1 = arith.constant 0 : i32
    return %arg0, %c0_i32, %c0_i32_0 : i32, i32, i32
  }
  func.func @transform_16(%arg0: i32) -> (i32, i32, i32) {
    %c0_i32 = arith.constant 0 : i32
    %c0_i32_0 = arith.constant 0 : i32
    %c0_i32_1 = arith.constant 0 : i32
    return %arg0, %c0_i32, %c0_i32_0 : i32, i32, i32
  }
  func.func @transform_17(%arg0: i32) -> (i32, i32, i32) {
    %c0_i32 = arith.constant 0 : i32
    %c0_i32_0 = arith.constant 0 : i32
    %c0_i32_1 = arith.constant 0 : i32
    return %arg0, %c0_i32, %c0_i32_0 : i32, i32, i32
  }
  func.func @transform_18(%arg0: i32) -> (i32, i32, i32) {
    %c0_i32 = arith.constant 0 : i32
    %c0_i32_0 = arith.constant 0 : i32
    %c0_i32_1 = arith.constant 0 : i32
    return %arg0, %c0_i32, %c0_i32_0 : i32, i32, i32
  }
  func.func @transform_19(%arg0: i32) -> (i32, i32, i32) {
    %c0_i32 = arith.constant 0 : i32
    %c0_i32_0 = arith.constant 0 : i32
    %c0_i32_1 = arith.constant 0 : i32
    return %arg0, %c0_i32, %c0_i32_0 : i32, i32, i32
  }
  func.func @transform_20(%arg0: i32) -> (i32, i32, i32) {
    %c0_i32 = arith.constant 0 : i32
    %c0_i32_0 = arith.constant 0 : i32
    %c0_i32_1 = arith.constant 0 : i32
    return %arg0, %c0_i32, %c0_i32_0 : i32, i32, i32
  }
  func.func @transform_21(%arg0: i32) -> (i32, i32) {
    %c0_i32 = arith.constant 0 : i32
    %c0_i32_0 = arith.constant 0 : i32
    %c0_i32_1 = arith.constant 0 : i32
    return %c0_i32, %c0_i32_0 : i32, i32
  }
  func.func @transform_22(%arg0: i32) -> (i32, i32) {
    %c0_i32 = arith.constant 0 : i32
    %c0_i32_0 = arith.constant 0 : i32
    %c0_i32_1 = arith.constant 0 : i32
    return %c0_i32, %c0_i32_0 : i32, i32
  }
  func.func @transform_23(%arg0: i32) -> (i32, i32) {
    %c0_i32 = arith.constant 0 : i32
    %c0_i32_0 = arith.constant 0 : i32
    %c0_i32_1 = arith.constant 0 : i32
    return %c0_i32, %c0_i32_0 : i32, i32
  }
  func.func @transform_24(%arg0: i32) -> (i32, i32) {
    %c0_i32 = arith.constant 0 : i32
    %c0_i32_0 = arith.constant 0 : i32
    %c0_i32_1 = arith.constant 0 : i32
    return %c0_i32, %c0_i32_0 : i32, i32
  }
  func.func @transform_25(%arg0: i32) -> (i32, i32) {
    %c0_i32 = arith.constant 0 : i32
    %c0_i32_0 = arith.constant 0 : i32
    %c0_i32_1 = arith.constant 0 : i32
    return %c0_i32, %c0_i32_0 : i32, i32
  }
}

</mosaic_0001>

<llo_original>
// kernel: transformer_forward.1
$region0: #{transformer_forward.1}
  #allocation0 [shape = 'u32[]', space=smem, size = 0x4, offset = 0x4, fixed_abs, tag = 'smem constant byte address 0x4 - core index']
  #allocation1 [shape = 'u32[144,128]{1,0:T(1,128)}', space=vmem, size = 0x12000, scoped, tag = 'internal scratch']
  #allocation2 [shape = 'f32[32,128]{1,0:T(8,128)}', space=vmem, size = 0x4000, scoped, tag = 'scratch operand']
  #allocation3 [shape = 'f32[1,1]{1,0:T(1,128)S(1)}', space=vmem, size = 0x200, scoped, tag = 'scoped memory for transformer_forward.1']
  %s0 = inlined_call_operand.vmem [shape: bf16[32,256], index: 0, kind: input, shape index: {}]
  %s1 = inlined_call_operand.vmem [shape: bf16[256,128], index: 1, kind: input, shape index: {}]
  %s2 = inlined_call_operand.vmem [shape: f32[32,128], index: 2, kind: input, shape index: {}]
  %s3 = inlined_call_operand.vmem [shape: bf16[128,128], index: 3, kind: input, shape index: {}, may-alias: {3,4}]
  %s4 = inlined_call_operand.vmem [shape: bf16[128,128], index: 4, kind: input, shape index: {}, may-alias: {3,4}]
  %s5 = inlined_call_operand.vmem [shape: bf16[6,128,128], index: 5, kind: input, shape index: {}]
  %s6 = inlined_call_operand.vmem [shape: f32[6,1,128], index: 6, kind: input, shape index: {}]
  %s7 = inlined_call_operand.vmem [shape: bf16[6,128,128], index: 7, kind: input, shape index: {}]
  %s8 = inlined_call_operand.vmem [shape: f32[6,1,128], index: 8, kind: input, shape index: {}]
  %s9 = inlined_call_operand.vmem [shape: bf16[6,128,128], index: 9, kind: input, shape index: {}]
  %s10 = inlined_call_operand.vmem [shape: f32[6,1,128], index: 10, kind: input, shape index: {}]
  %s11 = inlined_call_operand.vmem [shape: bf16[6,128,128], index: 11, kind: input, shape index: {}]
  %s12 = inlined_call_operand.vmem [shape: f32[6,1,128], index: 12, kind: input, shape index: {}]
  %s13 = inlined_call_operand.vmem [shape: f32[6,1,128], index: 13, kind: input, shape index: {}]
  %s14 = inlined_call_operand.vmem [shape: f32[6,1,128], index: 14, kind: input, shape index: {}]
  %s15 = inlined_call_operand.vmem [shape: bf16[6,128,512], index: 15, kind: input, shape index: {}]
  %s16 = inlined_call_operand.vmem [shape: f32[6,1,512], index: 16, kind: input, shape index: {}]
  %s17 = inlined_call_operand.vmem [shape: bf16[6,512,128], index: 17, kind: input, shape index: {}]
  %s18 = inlined_call_operand.vmem [shape: f32[6,1,128], index: 18, kind: input, shape index: {}]
  %s19 = inlined_call_operand.vmem [shape: f32[6,1,128], index: 19, kind: input, shape index: {}]
  %s20 = inlined_call_operand.vmem [shape: f32[6,1,128], index: 20, kind: input, shape index: {}]
  %s21 = inlined_call_operand.vmem [shape: f32[1,128], index: 21, kind: input, shape index: {}]
  %s22 = inlined_call_operand.vmem [shape: f32[1,128], index: 22, kind: input, shape index: {}]
  %s23 = inlined_call_operand.vmem [shape: f32[128,1], index: 23, kind: input, shape index: {}]
  %s24 = inlined_call_operand.<no memory space> [shape: f32[1,1], index: 24, kind: input, shape index: {}]
  %s25 = inlined_call_operand.vmem [shape: f32[2,1], index: 25, kind: output, shape index: {}]
  %s26 = sld [smem:[#allocation0]]
  $region141: #{transformer_forward.1} parent=0
    _
  %s28 = ssub.s32 1, %s26
  %s29 = scalar_select 0, %s28, %s26
  %v30 = vstv %s24
  %31 = vst [vmem:[#allocation3] sm:$0x1] %v30
  loop: start=0, step=1, limit=8
  $region2: #{transformer_forward.1} parent=0 // loop_pre_header
    _
  $region3: #{transformer_forward.1} parent=0 // loop_header
    %s33 = sphi 0, %s37
    %p34 = scmp.ge.s32.totalorder %s33, 8
    %s41 = sphi 0, %s41
    %s43 = sphi 0, %s41
    %s44 = sphi 0, %s43
    %s58 = sphi 0, %s44
    %s62 = sphi 0, %s62
    %s64 = sphi 0, %s62
    %s65 = sphi 0, %s64
    %s79 = sphi 0, %s65
    %s83 = sphi 0, %s83
    %s85 = sphi 0, %s83
    %s86 = sphi 0, %s85
    %s100 = sphi 0, %s86
    %s104 = sphi 0, %s104
    %s106 = sphi 0, %s104
    %s107 = sphi 0, %s106
    %s121 = sphi 0, %s107
    %s125 = sphi 0, %s125
    %s127 = sphi 0, %s125
    %s128 = sphi 0, %s127
    %s142 = sphi 0, %s128
    %s148 = sphi 0, %s150
    %s151 = sphi 0, %s148
    %s152 = sphi 0, %s151
    %s168 = sphi 0, %s152
    %s174 = sphi 0, %s176
    %s177 = sphi 0, %s174
    %s178 = sphi 0, %s177
    %s194 = sphi 0, %s178
    %s200 = sphi 0, %s202
    %s203 = sphi 0, %s200
    %s204 = sphi 0, %s203
    %s220 = sphi 0, %s204
    %s226 = sphi 0, %s228
    %s229 = sphi 0, %s226
    %s230 = sphi 0, %s229
    %s246 = sphi 0, %s230
    %s252 = sphi 0, %s254
    %s255 = sphi 0, %s252
    %s256 = sphi 0, %s255
    %s272 = sphi 0, %s256
    %s278 = sphi 0, %s280
    %s281 = sphi 0, %s278
    %s282 = sphi 0, %s281
    %s298 = sphi 0, %s282
    %s304 = sphi 0, %s306
    %s307 = sphi 0, %s304
    %s308 = sphi 0, %s307
    %s324 = sphi 0, %s308
    %s330 = sphi 0, %s332
    %s333 = sphi 0, %s330
    %s334 = sphi 0, %s333
    %s350 = sphi 0, %s334
    %s356 = sphi 0, %s358
    %s359 = sphi 0, %s356
    %s360 = sphi 0, %s359
    %s376 = sphi 0, %s360
    %s382 = sphi 0, %s384
    %s385 = sphi 0, %s382
    %s386 = sphi 0, %s385
    %s402 = sphi 0, %s386
    %s408 = sphi 0, %s410
    %s411 = sphi 0, %s408
    %s412 = sphi 0, %s411
    %s428 = sphi 0, %s412
    %s434 = sphi 0, %s436
    %s437 = sphi 0, %s434
    %s438 = sphi 0, %s437
    %s454 = sphi 0, %s438
    %s460 = sphi 0, %s462
    %s463 = sphi 0, %s460
    %s464 = sphi 0, %s463
    %s480 = sphi 0, %s464
    %s486 = sphi 0, %s488
    %s489 = sphi 0, %s486
    %s490 = sphi 0, %s489
    %s506 = sphi 0, %s490
    %s512 = sphi 0, %s514
    %s515 = sphi 0, %s512
    %s516 = sphi 0, %s515
    %s532 = sphi 0, %s516
    %s538 = sphi 0, %s540
    %s541 = sphi 0, %s538
    %s542 = sphi 0, %s541
    %s558 = sphi 0, %s542
    %s562 = sphi 0, %s562
    %s564 = sphi 0, %s562
    %s565 = sphi 0, %s564
    %s579 = sphi 0, %s565
    %s583 = sphi 0, %s583
    %s585 = sphi 0, %s583
    %s586 = sphi 0, %s585
    %s600 = sphi 0, %s586
    %s604 = sphi 0, %s604
    %s606 = sphi 0, %s604
    %s607 = sphi 0, %s606
    %s621 = sphi 0, %s607
    %s625 = sphi 0, %s625
    %s627 = sphi 0, %s625
    %s628 = sphi 0, %s627
    %s642 = sphi 0, %s628
    %s646 = sphi 0, %s646
    %s648 = sphi 0, %s646
    %s649 = sphi 0, %s648
    %s663 = sphi 0, %s649
  $region4: #{transformer_forward.1} parent=0 // loop_header_branch
    %36 = sbr.rel (%p34) target = $region8
  $region5: #{transformer_forward.1} parent=0 // loop_body
    %s38 = ssub.s32 %s33, 1
    %s39 = ssub.s32 %s33, 2
    %s40 = sadd.s32 %s33, 1
    %s42 = sadd.s32 %s41, 1
    %p45 = scmp.eq.s32.totalorder %s33, 5
    %p46 = scmp.ne.s32.totalorder %s41, %s43
    %p47 = scmp.eq.s32.totalorder %s33, 0
    %p48 = por %p46, %p47
    %p49 = scmp.ne.s32.totalorder %s41, %s43
    %p50 = scmp.eq.s32.totalorder %s38, 5
    %p51 = por %p49, %p50
    %p52 = scmp.ne.s32.totalorder %s43, %s44
    %p53 = scmp.eq.s32.totalorder %s38, 0
    %p54 = por %p52, %p53
    %p55 = scmp.ne.s32.totalorder %s43, %s44
    %p56 = scmp.eq.s32.totalorder %s39, 5
    %p57 = por %p55, %p56
    %p59 = scmp.ne.s32.totalorder %s44, %s58
    %p60 = scmp.eq.s32.totalorder %s39, 0
    %p61 = por %p59, %p60
    %s63 = sadd.s32 %s62, 1
    %p66 = scmp.eq.s32.totalorder %s33, 5
    %p67 = scmp.ne.s32.totalorder %s62, %s64
    %p68 = scmp.eq.s32.totalorder %s33, 0
    %p69 = por %p67, %p68
    %p70 = scmp.ne.s32.totalorder %s62, %s64
    %p71 = scmp.eq.s32.totalorder %s38, 5
    %p72 = por %p70, %p71
    %p73 = scmp.ne.s32.totalorder %s64, %s65
    %p74 = scmp.eq.s32.totalorder %s38, 0
    %p75 = por %p73, %p74
    %p76 = scmp.ne.s32.totalorder %s64, %s65
    %p77 = scmp.eq.s32.totalorder %s39, 5
    %p78 = por %p76, %p77
    %p80 = scmp.ne.s32.totalorder %s65, %s79
    %p81 = scmp.eq.s32.totalorder %s39, 0
    %p82 = por %p80, %p81
    %s84 = sadd.s32 %s83, 1
    %p87 = scmp.eq.s32.totalorder %s33, 5
    %p88 = scmp.ne.s32.totalorder %s83, %s85
    %p89 = scmp.eq.s32.totalorder %s33, 0
    %p90 = por %p88, %p89
    %p91 = scmp.ne.s32.totalorder %s83, %s85
    %p92 = scmp.eq.s32.totalorder %s38, 5
    %p93 = por %p91, %p92
    %p94 = scmp.ne.s32.totalorder %s85, %s86
    %p95 = scmp.eq.s32.totalorder %s38, 0
    %p96 = por %p94, %p95
    %p97 = scmp.ne.s32.totalorder %s85, %s86
    %p98 = scmp.eq.s32.totalorder %s39, 5
    %p99 = por %p97, %p98
    %p101 = scmp.ne.s32.totalorder %s86, %s100
    %p102 = scmp.eq.s32.totalorder %s39, 0
    %p103 = por %p101, %p102
    %s105 = sadd.s32 %s104, 1
    %p108 = scmp.eq.s32.totalorder %s33, 5
    %p109 = scmp.ne.s32.totalorder %s104, %s106
    %p110 = scmp.eq.s32.totalorder %s33, 0
    %p111 = por %p109, %p110
    %p112 = scmp.ne.s32.totalorder %s104, %s106
    %p113 = scmp.eq.s32.totalorder %s38, 5
    %p114 = por %p112, %p113
    %p115 = scmp.ne.s32.totalorder %s106, %s107
    %p116 = scmp.eq.s32.totalorder %s38, 0
    %p117 = por %p115, %p116
    %p118 = scmp.ne.s32.totalorder %s106, %s107
    %p119 = scmp.eq.s32.totalorder %s39, 5
    %p120 = por %p118, %p119
    %p122 = scmp.ne.s32.totalorder %s107, %s121
    %p123 = scmp.eq.s32.totalorder %s39, 0
    %p124 = por %p122, %p123
    %s126 = sadd.s32 %s125, 1
    %p129 = scmp.eq.s32.totalorder %s33, 5
    %p130 = scmp.ne.s32.totalorder %s125, %s127
    %p131 = scmp.eq.s32.totalorder %s33, 0
    %p132 = por %p130, %p131
    %p133 = scmp.ne.s32.totalorder %s125, %s127
    %p134 = scmp.eq.s32.totalorder %s38, 5
    %p135 = por %p133, %p134
    %p136 = scmp.ne.s32.totalorder %s127, %s128
    %p137 = scmp.eq.s32.totalorder %s38, 0
    %p138 = por %p136, %p137
    %p139 = scmp.ne.s32.totalorder %s127, %s128
    %p140 = scmp.eq.s32.totalorder %s39, 5
    %p141 = por %p139, %p140
    %p143 = scmp.ne.s32.totalorder %s128, %s142
    %p144 = scmp.eq.s32.totalorder %s39, 0
    %p145 = por %p143, %p144
    %s146 = ssub.s32 %s33, %s40
    %p147 = scmp.eq.s32.totalorder %s146, 0
    %s149 = sadd.s32 %s148, 1
    %s150 = scalar_select %p147, %s148, %s149
    %p153 = pneg %p147
    %p154 = scmp.eq.s32.totalorder %s33, 5
    %p155 = por %p153, %p154
    %p156 = scmp.ne.s32.totalorder %s148, %s151
    %p157 = scmp.eq.s32.totalorder %s33, 0
    %p158 = por %p156, %p157
    %p159 = scmp.ne.s32.totalorder %s148, %s151
    %p160 = scmp.eq.s32.totalorder %s38, 5
    %p161 = por %p159, %p160
    %p162 = scmp.ne.s32.totalorder %s151, %s152
    %p163 = scmp.eq.s32.totalorder %s38, 0
    %p164 = por %p162, %p163
    %p165 = scmp.ne.s32.totalorder %s151, %s152
    %p166 = scmp.eq.s32.totalorder %s39, 5
    %p167 = por %p165, %p166
    %p169 = scmp.ne.s32.totalorder %s152, %s168
    %p170 = scmp.eq.s32.totalorder %s39, 0
    %p171 = por %p169, %p170
    %s172 = ssub.s32 %s33, %s40
    %p173 = scmp.eq.s32.totalorder %s172, 0
    %s175 = sadd.s32 %s174, 1
    %s176 = scalar_select %p173, %s174, %s175
    %p179 = pneg %p173
    %p180 = scmp.eq.s32.totalorder %s33, 5
    %p181 = por %p179, %p180
    %p182 = scmp.ne.s32.totalorder %s174, %s177
    %p183 = scmp.eq.s32.totalorder %s33, 0
    %p184 = por %p182, %p183
    %p185 = scmp.ne.s32.totalorder %s174, %s177
    %p186 = scmp.eq.s32.totalorder %s38, 5
    %p187 = por %p185, %p186
    %p188 = scmp.ne.s32.totalorder %s177, %s178
    %p189 = scmp.eq.s32.totalorder %s38, 0
    %p190 = por %p188, %p189
    %p191 = scmp.ne.s32.totalorder %s177, %s178
    %p192 = scmp.eq.s32.totalorder %s39, 5
    %p193 = por %p191, %p192
    %p195 = scmp.ne.s32.totalorder %s178, %s194
    %p196 = scmp.eq.s32.totalorder %s39, 0
    %p197 = por %p195, %p196
    %s198 = ssub.s32 %s33, %s40
    %p199 = scmp.eq.s32.totalorder %s198, 0
    %s201 = sadd.s32 %s200, 1
    %s202 = scalar_select %p199, %s200, %s201
    %p205 = pneg %p199
    %p206 = scmp.eq.s32.totalorder %s33, 5
    %p207 = por %p205, %p206
    %p208 = scmp.ne.s32.totalorder %s200, %s203
    %p209 = scmp.eq.s32.totalorder %s33, 0
    %p210 = por %p208, %p209
    %p211 = scmp.ne.s32.totalorder %s200, %s203
    %p212 = scmp.eq.s32.totalorder %s38, 5
    %p213 = por %p211, %p212
    %p214 = scmp.ne.s32.totalorder %s203, %s204
    %p215 = scmp.eq.s32.totalorder %s38, 0
    %p216 = por %p214, %p215
    %p217 = scmp.ne.s32.totalorder %s203, %s204
    %p218 = scmp.eq.s32.totalorder %s39, 5
    %p219 = por %p217, %p218
    %p221 = scmp.ne.s32.totalorder %s204, %s220
    %p222 = scmp.eq.s32.totalorder %s39, 0
    %p223 = por %p221, %p222
    %s224 = ssub.s32 %s33, %s40
    %p225 = scmp.eq.s32.totalorder %s224, 0
    %s227 = sadd.s32 %s226, 1
    %s228 = scalar_select %p225, %s226, %s227
    %p231 = pneg %p225
    %p232 = scmp.eq.s32.totalorder %s33, 5
    %p233 = por %p231, %p232
    %p234 = scmp.ne.s32.totalorder %s226, %s229
    %p235 = scmp.eq.s32.totalorder %s33, 0
    %p236 = por %p234, %p235
    %p237 = scmp.ne.s32.totalorder %s226, %s229
    %p238 = scmp.eq.s32.totalorder %s38, 5
    %p239 = por %p237, %p238
    %p240 = scmp.ne.s32.totalorder %s229, %s230
    %p241 = scmp.eq.s32.totalorder %s38, 0
    %p242 = por %p240, %p241
    %p243 = scmp.ne.s32.totalorder %s229, %s230
    %p244 = scmp.eq.s32.totalorder %s39, 5
    %p245 = por %p243, %p244
    %p247 = scmp.ne.s32.totalorder %s230, %s246
    %p248 = scmp.eq.s32.totalorder %s39, 0
    %p249 = por %p247, %p248
    %s250 = ssub.s32 %s33, %s40
    %p251 = scmp.eq.s32.totalorder %s250, 0
    %s253 = sadd.s32 %s252, 1
    %s254 = scalar_select %p251, %s252, %s253
    %p257 = pneg %p251
    %p258 = scmp.eq.s32.totalorder %s33, 5
    %p259 = por %p257, %p258
    %p260 = scmp.ne.s32.totalorder %s252, %s255
    %p261 = scmp.eq.s32.totalorder %s33, 0
    %p262 = por %p260, %p261
    %p263 = scmp.ne.s32.totalorder %s252, %s255
    %p264 = scmp.eq.s32.totalorder %s38, 5
    %p265 = por %p263, %p264
    %p266 = scmp.ne.s32.totalorder %s255, %s256
    %p267 = scmp.eq.s32.totalorder %s38, 0
    %p268 = por %p266, %p267
    %p269 = scmp.ne.s32.totalorder %s255, %s256
    %p270 = scmp.eq.s32.totalorder %s39, 5
    %p271 = por %p269, %p270
    %p273 = scmp.ne.s32.totalorder %s256, %s272
    %p274 = scmp.eq.s32.totalorder %s39, 0
    %p275 = por %p273, %p274
    %s276 = ssub.s32 %s33, %s40
    %p277 = scmp.eq.s32.totalorder %s276, 0
    %s279 = sadd.s32 %s278, 1
    %s280 = scalar_select %p277, %s278, %s279
    %p283 = pneg %p277
    %p284 = scmp.eq.s32.totalorder %s33, 5
    %p285 = por %p283, %p284
    %p286 = scmp.ne.s32.totalorder %s278, %s281
    %p287 = scmp.eq.s32.totalorder %s33, 0
    %p288 = por %p286, %p287
    %p289 = scmp.ne.s32.totalorder %s278, %s281
    %p290 = scmp.eq.s32.totalorder %s38, 5
    %p291 = por %p289, %p290
    %p292 = scmp.ne.s32.totalorder %s281, %s282
    %p293 = scmp.eq.s32.totalorder %s38, 0
    %p294 = por %p292, %p293
    %p295 = scmp.ne.s32.totalorder %s281, %s282
    %p296 = scmp.eq.s32.totalorder %s39, 5
    %p297 = por %p295, %p296
    %p299 = scmp.ne.s32.totalorder %s282, %s298
    %p300 = scmp.eq.s32.totalorder %s39, 0
    %p301 = por %p299, %p300
    %s302 = ssub.s32 %s33, %s40
    %p303 = scmp.eq.s32.totalorder %s302, 0
    %s305 = sadd.s32 %s304, 1
    %s306 = scalar_select %p303, %s304, %s305
    %p309 = pneg %p303
    %p310 = scmp.eq.s32.totalorder %s33, 5
    %p311 = por %p309, %p310
    %p312 = scmp.ne.s32.totalorder %s304, %s307
    %p313 = scmp.eq.s32.totalorder %s33, 0
    %p314 = por %p312, %p313
    %p315 = scmp.ne.s32.totalorder %s304, %s307
    %p316 = scmp.eq.s32.totalorder %s38, 5
    %p317 = por %p315, %p316
    %p318 = scmp.ne.s32.totalorder %s307, %s308
    %p319 = scmp.eq.s32.totalorder %s38, 0
    %p320 = por %p318, %p319
    %p321 = scmp.ne.s32.totalorder %s307, %s308
    %p322 = scmp.eq.s32.totalorder %s39, 5
    %p323 = por %p321, %p322
    %p325 = scmp.ne.s32.totalorder %s308, %s324
    %p326 = scmp.eq.s32.totalorder %s39, 0
    %p327 = por %p325, %p326
    %s328 = ssub.s32 %s33, %s40
    %p329 = scmp.eq.s32.totalorder %s328, 0
    %s331 = sadd.s32 %s330, 1
    %s332 = scalar_select %p329, %s330, %s331
    %p335 = pneg %p329
    %p336 = scmp.eq.s32.totalorder %s33, 5
    %p337 = por %p335, %p336
    %p338 = scmp.ne.s32.totalorder %s330, %s333
    %p339 = scmp.eq.s32.totalorder %s33, 0
    %p340 = por %p338, %p339
    %p341 = scmp.ne.s32.totalorder %s330, %s333
    %p342 = scmp.eq.s32.totalorder %s38, 5
    %p343 = por %p341, %p342
    %p344 = scmp.ne.s32.totalorder %s333, %s334
    %p345 = scmp.eq.s32.totalorder %s38, 0
    %p346 = por %p344, %p345
    %p347 = scmp.ne.s32.totalorder %s333, %s334
    %p348 = scmp.eq.s32.totalorder %s39, 5
    %p349 = por %p347, %p348
    %p351 = scmp.ne.s32.totalorder %s334, %s350
    %p352 = scmp.eq.s32.totalorder %s39, 0
    %p353 = por %p351, %p352
    %s354 = ssub.s32 %s33, %s40
    %p355 = scmp.eq.s32.totalorder %s354, 0
    %s357 = sadd.s32 %s356, 1
    %s358 = scalar_select %p355, %s356, %s357
    %p361 = pneg %p355
    %p362 = scmp.eq.s32.totalorder %s33, 5
    %p363 = por %p361, %p362
    %p364 = scmp.ne.s32.totalorder %s356, %s359
    %p365 = scmp.eq.s32.totalorder %s33, 0
    %p366 = por %p364, %p365
    %p367 = scmp.ne.s32.totalorder %s356, %s359
    %p368 = scmp.eq.s32.totalorder %s38, 5
    %p369 = por %p367, %p368
    %p370 = scmp.ne.s32.totalorder %s359, %s360
    %p371 = scmp.eq.s32.totalorder %s38, 0
    %p372 = por %p370, %p371
    %p373 = scmp.ne.s32.totalorder %s359, %s360
    %p374 = scmp.eq.s32.totalorder %s39, 5
    %p375 = por %p373, %p374
    %p377 = scmp.ne.s32.totalorder %s360, %s376
    %p378 = scmp.eq.s32.totalorder %s39, 0
    %p379 = por %p377, %p378
    %s380 = ssub.s32 %s33, %s40
    %p381 = scmp.eq.s32.totalorder %s380, 0
    %s383 = sadd.s32 %s382, 1
    %s384 = scalar_select %p381, %s382, %s383
    %p387 = pneg %p381
    %p388 = scmp.eq.s32.totalorder %s33, 5
    %p389 = por %p387, %p388
    %p390 = scmp.ne.s32.totalorder %s382, %s385
    %p391 = scmp.eq.s32.totalorder %s33, 0
    %p392 = por %p390, %p391
    %p393 = scmp.ne.s32.totalorder %s382, %s385
    %p394 = scmp.eq.s32.totalorder %s38, 5
    %p395 = por %p393, %p394
    %p396 = scmp.ne.s32.totalorder %s385, %s386
    %p397 = scmp.eq.s32.totalorder %s38, 0
    %p398 = por %p396, %p397
    %p399 = scmp.ne.s32.totalorder %s385, %s386
    %p400 = scmp.eq.s32.totalorder %s39, 5
    %p401 = por %p399, %p400
    %p403 = scmp.ne.s32.totalorder %s386, %s402
    %p404 = scmp.eq.s32.totalorder %s39, 0
    %p405 = por %p403, %p404
    %s406 = ssub.s32 %s33, %s40
    %p407 = scmp.eq.s32.totalorder %s406, 0
    %s409 = sadd.s32 %s408, 1
    %s410 = scalar_select %p407, %s408, %s409
    %p413 = pneg %p407
    %p414 = scmp.eq.s32.totalorder %s33, 5
    %p415 = por %p413, %p414
    %p416 = scmp.ne.s32.totalorder %s408, %s411
    %p417 = scmp.eq.s32.totalorder %s33, 0
    %p418 = por %p416, %p417
    %p419 = scmp.ne.s32.totalorder %s408, %s411
    %p420 = scmp.eq.s32.totalorder %s38, 5
    %p421 = por %p419, %p420
    %p422 = scmp.ne.s32.totalorder %s411, %s412
    %p423 = scmp.eq.s32.totalorder %s38, 0
    %p424 = por %p422, %p423
    %p425 = scmp.ne.s32.totalorder %s411, %s412
    %p426 = scmp.eq.s32.totalorder %s39, 5
    %p427 = por %p425, %p426
    %p429 = scmp.ne.s32.totalorder %s412, %s428
    %p430 = scmp.eq.s32.totalorder %s39, 0
    %p431 = por %p429, %p430
    %s432 = ssub.s32 %s33, %s40
    %p433 = scmp.eq.s32.totalorder %s432, 0
    %s435 = sadd.s32 %s434, 1
    %s436 = scalar_select %p433, %s434, %s435
    %p439 = pneg %p433
    %p440 = scmp.eq.s32.totalorder %s33, 5
    %p441 = por %p439, %p440
    %p442 = scmp.ne.s32.totalorder %s434, %s437
    %p443 = scmp.eq.s32.totalorder %s33, 0
    %p444 = por %p442, %p443
    %p445 = scmp.ne.s32.totalorder %s434, %s437
    %p446 = scmp.eq.s32.totalorder %s38, 5
    %p447 = por %p445, %p446
    %p448 = scmp.ne.s32.totalorder %s437, %s438
    %p449 = scmp.eq.s32.totalorder %s38, 0
    %p450 = por %p448, %p449
    %p451 = scmp.ne.s32.totalorder %s437, %s438
    %p452 = scmp.eq.s32.totalorder %s39, 5
    %p453 = por %p451, %p452
    %p455 = scmp.ne.s32.totalorder %s438, %s454
    %p456 = scmp.eq.s32.totalorder %s39, 0
    %p457 = por %p455, %p456
    %s458 = ssub.s32 %s33, %s40
    %p459 = scmp.eq.s32.totalorder %s458, 0
    %s461 = sadd.s32 %s460, 1
    %s462 = scalar_select %p459, %s460, %s461
    %p465 = pneg %p459
    %p466 = scmp.eq.s32.totalorder %s33, 5
    %p467 = por %p465, %p466
    %p468 = scmp.ne.s32.totalorder %s460, %s463
    %p469 = scmp.eq.s32.totalorder %s33, 0
    %p470 = por %p468, %p469
    %p471 = scmp.ne.s32.totalorder %s460, %s463
    %p472 = scmp.eq.s32.totalorder %s38, 5
    %p473 = por %p471, %p472
    %p474 = scmp.ne.s32.totalorder %s463, %s464
    %p475 = scmp.eq.s32.totalorder %s38, 0
    %p476 = por %p474, %p475
    %p477 = scmp.ne.s32.totalorder %s463, %s464
    %p478 = scmp.eq.s32.totalorder %s39, 5
    %p479 = por %p477, %p478
    %p481 = scmp.ne.s32.totalorder %s464, %s480
    %p482 = scmp.eq.s32.totalorder %s39, 0
    %p483 = por %p481, %p482
    %s484 = ssub.s32 %s33, %s40
    %p485 = scmp.eq.s32.totalorder %s484, 0
    %s487 = sadd.s32 %s486, 1
    %s488 = scalar_select %p485, %s486, %s487
    %p491 = pneg %p485
    %p492 = scmp.eq.s32.totalorder %s33, 5
    %p493 = por %p491, %p492
    %p494 = scmp.ne.s32.totalorder %s486, %s489
    %p495 = scmp.eq.s32.totalorder %s33, 0
    %p496 = por %p494, %p495
    %p497 = scmp.ne.s32.totalorder %s486, %s489
    %p498 = scmp.eq.s32.totalorder %s38, 5
    %p499 = por %p497, %p498
    %p500 = scmp.ne.s32.totalorder %s489, %s490
    %p501 = scmp.eq.s32.totalorder %s38, 0
    %p502 = por %p500, %p501
    %p503 = scmp.ne.s32.totalorder %s489, %s490
    %p504 = scmp.eq.s32.totalorder %s39, 5
    %p505 = por %p503, %p504
    %p507 = scmp.ne.s32.totalorder %s490, %s506
    %p508 = scmp.eq.s32.totalorder %s39, 0
    %p509 = por %p507, %p508
    %s510 = ssub.s32 %s33, %s40
    %p511 = scmp.eq.s32.totalorder %s510, 0
    %s513 = sadd.s32 %s512, 1
    %s514 = scalar_select %p511, %s512, %s513
    %p517 = pneg %p511
    %p518 = scmp.eq.s32.totalorder %s33, 5
    %p519 = por %p517, %p518
    %p520 = scmp.ne.s32.totalorder %s512, %s515
    %p521 = scmp.eq.s32.totalorder %s33, 0
    %p522 = por %p520, %p521
    %p523 = scmp.ne.s32.totalorder %s512, %s515
    %p524 = scmp.eq.s32.totalorder %s38, 5
    %p525 = por %p523, %p524
    %p526 = scmp.ne.s32.totalorder %s515, %s516
    %p527 = scmp.eq.s32.totalorder %s38, 0
    %p528 = por %p526, %p527
    %p529 = scmp.ne.s32.totalorder %s515, %s516
    %p530 = scmp.eq.s32.totalorder %s39, 5
    %p531 = por %p529, %p530
    %p533 = scmp.ne.s32.totalorder %s516, %s532
    %p534 = scmp.eq.s32.totalorder %s39, 0
    %p535 = por %p533, %p534
    %s536 = ssub.s32 %s33, %s40
    %p537 = scmp.eq.s32.totalorder %s536, 0
    %s539 = sadd.s32 %s538, 1
    %s540 = scalar_select %p537, %s538, %s539
    %p543 = pneg %p537
    %p544 = scmp.eq.s32.totalorder %s33, 5
    %p545 = por %p543, %p544
    %p546 = scmp.ne.s32.totalorder %s538, %s541
    %p547 = scmp.eq.s32.totalorder %s33, 0
    %p548 = por %p546, %p547
    %p549 = scmp.ne.s32.totalorder %s538, %s541
    %p550 = scmp.eq.s32.totalorder %s38, 5
    %p551 = por %p549, %p550
    %p552 = scmp.ne.s32.totalorder %s541, %s542
    %p553 = scmp.eq.s32.totalorder %s38, 0
    %p554 = por %p552, %p553
    %p555 = scmp.ne.s32.totalorder %s541, %s542
    %p556 = scmp.eq.s32.totalorder %s39, 5
    %p557 = por %p555, %p556
    %p559 = scmp.ne.s32.totalorder %s542, %s558
    %p560 = scmp.eq.s32.totalorder %s39, 0
    %p561 = por %p559, %p560
    %s563 = sadd.s32 %s562, 1
    %p566 = scmp.eq.s32.totalorder %s33, 5
    %p567 = scmp.ne.s32.totalorder %s562, %s564
    %p568 = scmp.eq.s32.totalorder %s33, 0
    %p569 = por %p567, %p568
    %p570 = scmp.ne.s32.totalorder %s562, %s564
    %p571 = scmp.eq.s32.totalorder %s38, 5
    %p572 = por %p570, %p571
    %p573 = scmp.ne.s32.totalorder %s564, %s565
    %p574 = scmp.eq.s32.totalorder %s38, 0
    %p575 = por %p573, %p574
    %p576 = scmp.ne.s32.totalorder %s564, %s565
    %p577 = scmp.eq.s32.totalorder %s39, 5
    %p578 = por %p576, %p577
    %p580 = scmp.ne.s32.totalorder %s565, %s579
    %p581 = scmp.eq.s32.totalorder %s39, 0
    %p582 = por %p580, %p581
    %s584 = sadd.s32 %s583, 1
    %p587 = scmp.eq.s32.totalorder %s33, 5
    %p588 = scmp.ne.s32.totalorder %s583, %s585
    %p589 = scmp.eq.s32.totalorder %s33, 0
    %p590 = por %p588, %p589
    %p591 = scmp.ne.s32.totalorder %s583, %s585
    %p592 = scmp.eq.s32.totalorder %s38, 5
    %p593 = por %p591, %p592
    %p594 = scmp.ne.s32.totalorder %s585, %s586
    %p595 = scmp.eq.s32.totalorder %s38, 0
    %p596 = por %p594, %p595
    %p597 = scmp.ne.s32.totalorder %s585, %s586
    %p598 = scmp.eq.s32.totalorder %s39, 5
    %p599 = por %p597, %p598
    %p601 = scmp.ne.s32.totalorder %s586, %s600
    %p602 = scmp.eq.s32.totalorder %s39, 0
    %p603 = por %p601, %p602
    %s605 = sadd.s32 %s604, 1
    %p608 = scmp.eq.s32.totalorder %s33, 5
    %p609 = scmp.ne.s32.totalorder %s604, %s606
    %p610 = scmp.eq.s32.totalorder %s33, 0
    %p611 = por %p609, %p610
    %p612 = scmp.ne.s32.totalorder %s604, %s606
    %p613 = scmp.eq.s32.totalorder %s38, 5
    %p614 = por %p612, %p613
    %p615 = scmp.ne.s32.totalorder %s606, %s607
    %p616 = scmp.eq.s32.totalorder %s38, 0
    %p617 = por %p615, %p616
    %p618 = scmp.ne.s32.totalorder %s606, %s607
    %p619 = scmp.eq.s32.totalorder %s39, 5
    %p620 = por %p618, %p619
    %p622 = scmp.ne.s32.totalorder %s607, %s621
    %p623 = scmp.eq.s32.totalorder %s39, 0
    %p624 = por %p622, %p623
    %s626 = sadd.s32 %s625, 1
    %p629 = scmp.eq.s32.totalorder %s33, 5
    %p630 = scmp.ne.s32.totalorder %s625, %s627
    %p631 = scmp.eq.s32.totalorder %s33, 0
    %p632 = por %p630, %p631
    %p633 = scmp.ne.s32.totalorder %s625, %s627
    %p634 = scmp.eq.s32.totalorder %s38, 5
    %p635 = por %p633, %p634
    %p636 = scmp.ne.s32.totalorder %s627, %s628
    %p637 = scmp.eq.s32.totalorder %s38, 0
    %p638 = por %p636, %p637
    %p639 = scmp.ne.s32.totalorder %s627, %s628
    %p640 = scmp.eq.s32.totalorder %s39, 5
    %p641 = por %p639, %p640
    %p643 = scmp.ne.s32.totalorder %s628, %s642
    %p644 = scmp.eq.s32.totalorder %s39, 0
    %p645 = por %p643, %p644
    %s647 = sadd.s32 %s646, 1
    %p650 = scmp.eq.s32.totalorder %s33, 5
    %p651 = scmp.ne.s32.totalorder %s646, %s648
    %p652 = scmp.eq.s32.totalorder %s33, 0
    %p653 = por %p651, %p652
    %p654 = scmp.ne.s32.totalorder %s646, %s648
    %p655 = scmp.eq.s32.totalorder %s38, 5
    %p656 = por %p654, %p655
    %p657 = scmp.ne.s32.totalorder %s648, %s649
    %p658 = scmp.eq.s32.totalorder %s38, 0
    %p659 = por %p657, %p658
    %p660 = scmp.ne.s32.totalorder %s648, %s649
    %p661 = scmp.eq.s32.totalorder %s39, 5
    %p662 = por %p660, %p661
    %p664 = scmp.ne.s32.totalorder %s649, %s663
    %p665 = scmp.eq.s32.totalorder %s39, 0
    %p666 = por %p664, %p665
    %p667 = scmp.le.s32.totalorder 1, %s33
    %p668 = scmp.lt.s32.totalorder %s33, 7
    %p669 = pnand %p667, %p668
    %p670 = pneg %p669
    // Predicated region
    $region9: #{transformer_forward.1} parent=5 // pred_check
      _
    $region10: #{transformer_forward.1} parent=5 // pred_check_branch
      %672 = sbr.rel (%p669) target = $region12
    $region11: #{transformer_forward.1} parent=5 // pred_region
      %s673 = ssub.s32 %s33, 1
      // Predicated region
      $region13: #{transformer_forward.1} parent=11 // pred_check
        %p674 = pneg %p54
      $region14: #{transformer_forward.1} parent=11 // pred_check_branch
        %676 = sbr.rel (%p674) target = $region16
      $region15: #{transformer_forward.1} parent=11 // pred_region
        _
      $region16: #{transformer_forward.1} parent=11 // pred_fallthru
        _
      // Predicated region
      $region17: #{transformer_forward.1} parent=11 // pred_check
        %p677 = pneg %p75
      $region18: #{transformer_forward.1} parent=11 // pred_check_branch
        %679 = sbr.rel (%p677) target = $region20
      $region19: #{transformer_forward.1} parent=11 // pred_region
        _
      $region20: #{transformer_forward.1} parent=11 // pred_fallthru
        _
      // Predicated region
      $region21: #{transformer_forward.1} parent=11 // pred_check
        %p680 = pneg %p96
      $region22: #{transformer_forward.1} parent=11 // pred_check_branch
        %682 = sbr.rel (%p680) target = $region24
      $region23: #{transformer_forward.1} parent=11 // pred_region
        _
      $region24: #{transformer_forward.1} parent=11 // pred_fallthru
        _
      // Predicated region
      $region25: #{transformer_forward.1} parent=11 // pred_check
        %p683 = pneg %p117
      $region26: #{transformer_forward.1} parent=11 // pred_check_branch
        %685 = sbr.rel (%p683) target = $region28
      $region27: #{transformer_forward.1} parent=11 // pred_region
        _
      $region28: #{transformer_forward.1} parent=11 // pred_fallthru
        _
      // Predicated region
      $region29: #{transformer_forward.1} parent=11 // pred_check
        %p686 = pneg %p138
      $region30: #{transformer_forward.1} parent=11 // pred_check_branch
        %688 = sbr.rel (%p686) target = $region32
      $region31: #{transformer_forward.1} parent=11 // pred_region
        _
      $region32: #{transformer_forward.1} parent=11 // pred_fallthru
        _
      // Predicated region
      $region33: #{transformer_forward.1} parent=11 // pred_check
        %p689 = pneg %p575
      $region34: #{transformer_forward.1} parent=11 // pred_check_branch
        %691 = sbr.rel (%p689) target = $region36
      $region35: #{transformer_forward.1} parent=11 // pred_region
        _
      $region36: #{transformer_forward.1} parent=11 // pred_fallthru
        _
      // Predicated region
      $region37: #{transformer_forward.1} parent=11 // pred_check
        %p692 = pneg %p596
      $region38: #{transformer_forward.1} parent=11 // pred_check_branch
        %694 = sbr.rel (%p692) target = $region40
      $region39: #{transformer_forward.1} parent=11 // pred_region
        _
      $region40: #{transformer_forward.1} parent=11 // pred_fallthru
        _
      // Predicated region
      $region41: #{transformer_forward.1} parent=11 // pred_check
        %p695 = pneg %p617
      $region42: #{transformer_forward.1} parent=11 // pred_check_branch
        %697 = sbr.rel (%p695) target = $region44
      $region43: #{transformer_forward.1} parent=11 // pred_region
        _
      $region44: #{transformer_forward.1} parent=11 // pred_fallthru
        _
      // Predicated region
      $region45: #{transformer_forward.1} parent=11 // pred_check
        %p698 = pneg %p638
      $region46: #{transformer_forward.1} parent=11 // pred_check_branch
        %700 = sbr.rel (%p698) target = $region48
      $region47: #{transformer_forward.1} parent=11 // pred_region
        _
      $region48: #{transformer_forward.1} parent=11 // pred_fallthru
        _
    $region12: #{transformer_forward.1} parent=5 // pred_fallthru
      _
    %p701 = scmp.lt.s32.totalorder %s33, 6
    // Predicated region
    $region49: #{transformer_forward.1} parent=5 // pred_check
      %p702 = pneg %p701
    $region50: #{transformer_forward.1} parent=5 // pred_check_branch
      %704 = sbr.rel (%p702) target = $region52
    $region51: #{transformer_forward.1} parent=5 // pred_region
      // Predicated region
      $region53: #{transformer_forward.1} parent=51 // pred_check
        %p705 = pneg %p158
      $region54: #{transformer_forward.1} parent=51 // pred_check_branch
        %707 = sbr.rel (%p705) target = $region56
      $region55: #{transformer_forward.1} parent=51 // pred_region
        %p708 = scmp.lt.s32.totalorder %s33, 5
        %s709 = scalar_select %p708, %s33, 5
        %s710 = smul.addr %s709, 16
        %s711 = smul.addr %s710, 4
        %s712 = scalar_lea.vmem %s5, %s711
      $region56: #{transformer_forward.1} parent=51 // pred_fallthru
        _
      // Predicated region
      $region57: #{transformer_forward.1} parent=51 // pred_check
        %p713 = pneg %p184
      $region58: #{transformer_forward.1} parent=51 // pred_check_branch
        %715 = sbr.rel (%p713) target = $region60
      $region59: #{transformer_forward.1} parent=51 // pred_region
        %p716 = scmp.lt.s32.totalorder %s33, 5
        %s717 = scalar_select %p716, %s33, 5
        %s718 = scalar_lea.vmem %s6, %s717
      $region60: #{transformer_forward.1} parent=51 // pred_fallthru
        _
      // Predicated region
      $region61: #{transformer_forward.1} parent=51 // pred_check
        %p719 = pneg %p210
      $region62: #{transformer_forward.1} parent=51 // pred_check_branch
        %721 = sbr.rel (%p719) target = $region64
      $region63: #{transformer_forward.1} parent=51 // pred_region
        %p722 = scmp.lt.s32.totalorder %s33, 5
        %s723 = scalar_select %p722, %s33, 5
        %s724 = smul.addr %s723, 16
        %s725 = smul.addr %s724, 4
        %s726 = scalar_lea.vmem %s7, %s725
      $region64: #{transformer_forward.1} parent=51 // pred_fallthru
        _
      // Predicated region
      $region65: #{transformer_forward.1} parent=51 // pred_check
        %p727 = pneg %p236
      $region66: #{transformer_forward.1} parent=51 // pred_check_branch
        %729 = sbr.rel (%p727) target = $region68
      $region67: #{transformer_forward.1} parent=51 // pred_region
        %p730 = scmp.lt.s32.totalorder %s33, 5
        %s731 = scalar_select %p730, %s33, 5
        %s732 = scalar_lea.vmem %s8, %s731
      $region68: #{transformer_forward.1} parent=51 // pred_fallthru
        _
      // Predicated region
      $region69: #{transformer_forward.1} parent=51 // pred_check
        %p733 = pneg %p262
      $region70: #{transformer_forward.1} parent=51 // pred_check_branch
        %735 = sbr.rel (%p733) target = $region72
      $region71: #{transformer_forward.1} parent=51 // pred_region
        %p736 = scmp.lt.s32.totalorder %s33, 5
        %s737 = scalar_select %p736, %s33, 5
        %s738 = smul.addr %s737, 16
        %s739 = smul.addr %s738, 4
        %s740 = scalar_lea.vmem %s9, %s739
      $region72: #{transformer_forward.1} parent=51 // pred_fallthru
        _
      // Predicated region
      $region73: #{transformer_forward.1} parent=51 // pred_check
        %p741 = pneg %p288
      $region74: #{transformer_forward.1} parent=51 // pred_check_branch
        %743 = sbr.rel (%p741) target = $region76
      $region75: #{transformer_forward.1} parent=51 // pred_region
        %p744 = scmp.lt.s32.totalorder %s33, 5
        %s745 = scalar_select %p744, %s33, 5
        %s746 = scalar_lea.vmem %s10, %s745
      $region76: #{transformer_forward.1} parent=51 // pred_fallthru
        _
      // Predicated region
      $region77: #{transformer_forward.1} parent=51 // pred_check
        %p747 = pneg %p314
      $region78: #{transformer_forward.1} parent=51 // pred_check_branch
        %749 = sbr.rel (%p747) target = $region80
      $region79: #{transformer_forward.1} parent=51 // pred_region
        %p750 = scmp.lt.s32.totalorder %s33, 5
        %s751 = scalar_select %p750, %s33, 5
        %s752 = smul.addr %s751, 16
        %s753 = smul.addr %s752, 4
        %s754 = scalar_lea.vmem %s11, %s753
      $region80: #{transformer_forward.1} parent=51 // pred_fallthru
        _
      // Predicated region
      $region81: #{transformer_forward.1} parent=51 // pred_check
        %p755 = pneg %p340
      $region82: #{transformer_forward.1} parent=51 // pred_check_branch
        %757 = sbr.rel (%p755) target = $region84
      $region83: #{transformer_forward.1} parent=51 // pred_region
        %p758 = scmp.lt.s32.totalorder %s33, 5
        %s759 = scalar_select %p758, %s33, 5
        %s760 = scalar_lea.vmem %s12, %s759
      $region84: #{transformer_forward.1} parent=51 // pred_fallthru
        _
      // Predicated region
      $region85: #{transformer_forward.1} parent=51 // pred_check
        %p761 = pneg %p366
      $region86: #{transformer_forward.1} parent=51 // pred_check_branch
        %763 = sbr.rel (%p761) target = $region88
      $region87: #{transformer_forward.1} parent=51 // pred_region
        %p764 = scmp.lt.s32.totalorder %s33, 5
        %s765 = scalar_select %p764, %s33, 5
        %s766 = scalar_lea.vmem %s13, %s765
      $region88: #{transformer_forward.1} parent=51 // pred_fallthru
        _
      // Predicated region
      $region89: #{transformer_forward.1} parent=51 // pred_check
        %p767 = pneg %p392
      $region90: #{transformer_forward.1} parent=51 // pred_check_branch
        %769 = sbr.rel (%p767) target = $region92
      $region91: #{transformer_forward.1} parent=51 // pred_region
        %p770 = scmp.lt.s32.totalorder %s33, 5
        %s771 = scalar_select %p770, %s33, 5
        %s772 = scalar_lea.vmem %s14, %s771
      $region92: #{transformer_forward.1} parent=51 // pred_fallthru
        _
      // Predicated region
      $region93: #{transformer_forward.1} parent=51 // pred_check
        %p773 = pneg %p418
      $region94: #{transformer_forward.1} parent=51 // pred_check_branch
        %775 = sbr.rel (%p773) target = $region96
      $region95: #{transformer_forward.1} parent=51 // pred_region
        %p776 = scmp.lt.s32.totalorder %s33, 5
        %s777 = scalar_select %p776, %s33, 5
        %s778 = smul.addr %s777, 64
        %s779 = smul.addr %s778, 4
        %s780 = scalar_lea.vmem %s15, %s779
      $region96: #{transformer_forward.1} parent=51 // pred_fallthru
        _
      // Predicated region
      $region97: #{transformer_forward.1} parent=51 // pred_check
        %p781 = pneg %p444
      $region98: #{transformer_forward.1} parent=51 // pred_check_branch
        %783 = sbr.rel (%p781) target = $region100
      $region99: #{transformer_forward.1} parent=51 // pred_region
        %p784 = scmp.lt.s32.totalorder %s33, 5
        %s785 = scalar_select %p784, %s33, 5
        %s786 = smul.addr %s785, 4
        %s787 = scalar_lea.vmem %s16, %s786
      $region100: #{transformer_forward.1} parent=51 // pred_fallthru
        _
      // Predicated region
      $region101: #{transformer_forward.1} parent=51 // pred_check
        %p788 = pneg %p470
      $region102: #{transformer_forward.1} parent=51 // pred_check_branch
        %790 = sbr.rel (%p788) target = $region104
      $region103: #{transformer_forward.1} parent=51 // pred_region
        %p791 = scmp.lt.s32.totalorder %s33, 5
        %s792 = scalar_select %p791, %s33, 5
        %s793 = smul.addr %s792, 64
        %s794 = smul.addr %s793, 4
        %s795 = scalar_lea.vmem %s17, %s794
      $region104: #{transformer_forward.1} parent=51 // pred_fallthru
        _
      // Predicated region
      $region105: #{transformer_forward.1} parent=51 // pred_check
        %p796 = pneg %p496
      $region106: #{transformer_forward.1} parent=51 // pred_check_branch
        %798 = sbr.rel (%p796) target = $region108
      $region107: #{transformer_forward.1} parent=51 // pred_region
        %p799 = scmp.lt.s32.totalorder %s33, 5
        %s800 = scalar_select %p799, %s33, 5
        %s801 = scalar_lea.vmem %s18, %s800
      $region108: #{transformer_forward.1} parent=51 // pred_fallthru
        _
      // Predicated region
      $region109: #{transformer_forward.1} parent=51 // pred_check
        %p802 = pneg %p522
      $region110: #{transformer_forward.1} parent=51 // pred_check_branch
        %804 = sbr.rel (%p802) target = $region112
      $region111: #{transformer_forward.1} parent=51 // pred_region
        %p805 = scmp.lt.s32.totalorder %s33, 5
        %s806 = scalar_select %p805, %s33, 5
        %s807 = scalar_lea.vmem %s19, %s806
      $region112: #{transformer_forward.1} parent=51 // pred_fallthru
        _
      // Predicated region
      $region113: #{transformer_forward.1} parent=51 // pred_check
        %p808 = pneg %p548
      $region114: #{transformer_forward.1} parent=51 // pred_check_branch
        %810 = sbr.rel (%p808) target = $region116
      $region115: #{transformer_forward.1} parent=51 // pred_region
        %p811 = scmp.lt.s32.totalorder %s33, 5
        %s812 = scalar_select %p811, %s33, 5
        %s813 = scalar_lea.vmem %s20, %s812
      $region116: #{transformer_forward.1} parent=51 // pred_fallthru
        _
    $region52: #{transformer_forward.1} parent=5 // pred_fallthru
      _
    %p814 = scmp.le.s32.totalorder 1, %s33
    %p815 = scmp.lt.s32.totalorder %s33, 7
    %p816 = pnand %p814, %p815
    %p817 = pneg %p816
    // Predicated region
    $region117: #{transformer_forward.1} parent=5 // pred_check
      _
    $region118: #{transformer_forward.1} parent=5 // pred_check_branch
      %819 = sbr.rel (%p816) target = $region120
    $region119: #{transformer_forward.1} parent=5 // pred_region
      %s820 = ssub.s32 %s33, 1
      %p821 = pneg %p54
      %p822 = pneg %p51
      %p823 = pneg %p75
      %p824 = pneg %p72
      %p825 = pneg %p96
      %p826 = pneg %p93
      %p827 = pneg %p117
      %p828 = pneg %p114
      %p829 = pneg %p138
      %p830 = pneg %p135
      %p831 = scmp.lt.s32.totalorder %s38, 5
      %s832 = scalar_select %p831, %s38, 5
      %s833 = smul.addr %s832, 16
      %s834 = smul.addr %s833, 4
      %s835 = scalar_lea.vmem %s5, %s834
      %p836 = pneg %p164
      %p837 = pneg %p161
      %p838 = scmp.lt.s32.totalorder %s38, 5
      %s839 = scalar_select %p838, %s38, 5
      %s840 = scalar_lea.vmem %s6, %s839
      %p841 = pneg %p190
      %p842 = pneg %p187
      %p843 = scmp.lt.s32.totalorder %s38, 5
      %s844 = scalar_select %p843, %s38, 5
      %s845 = smul.addr %s844, 16
      %s846 = smul.addr %s845, 4
      %s847 = scalar_lea.vmem %s7, %s846
      %p848 = pneg %p216
      %p849 = pneg %p213
      %p850 = scmp.lt.s32.totalorder %s38, 5
      %s851 = scalar_select %p850, %s38, 5
      %s852 = scalar_lea.vmem %s8, %s851
      %p853 = pneg %p242
      %p854 = pneg %p239
      %p855 = scmp.lt.s32.totalorder %s38, 5
      %s856 = scalar_select %p855, %s38, 5
      %s857 = smul.addr %s856, 16
      %s858 = smul.addr %s857, 4
      %s859 = scalar_lea.vmem %s9, %s858
      %p860 = pneg %p268
      %p861 = pneg %p265
      %p862 = scmp.lt.s32.totalorder %s38, 5
      %s863 = scalar_select %p862, %s38, 5
      %s864 = scalar_lea.vmem %s10, %s863
      %p865 = pneg %p294
      %p866 = pneg %p291
      %p867 = scmp.lt.s32.totalorder %s38, 5
      %s868 = scalar_select %p867, %s38, 5
      %s869 = smul.addr %s868, 16
      %s870 = smul.addr %s869, 4
      %s871 = scalar_lea.vmem %s11, %s870
      %p872 = pneg %p320
      %p873 = pneg %p317
      %p874 = scmp.lt.s32.totalorder %s38, 5
      %s875 = scalar_select %p874, %s38, 5
      %s876 = scalar_lea.vmem %s12, %s875
      %p877 = pneg %p346
      %p878 = pneg %p343
      %p879 = scmp.lt.s32.totalorder %s38, 5
      %s880 = scalar_select %p879, %s38, 5
      %s881 = scalar_lea.vmem %s13, %s880
      %p882 = pneg %p372
      %p883 = pneg %p369
      %p884 = scmp.lt.s32.totalorder %s38, 5
      %s885 = scalar_select %p884, %s38, 5
      %s886 = scalar_lea.vmem %s14, %s885
      %p887 = pneg %p398
      %p888 = pneg %p395
      %p889 = scmp.lt.s32.totalorder %s38, 5
      %s890 = scalar_select %p889, %s38, 5
      %s891 = smul.addr %s890, 64
      %s892 = smul.addr %s891, 4
      %s893 = scalar_lea.vmem %s15, %s892
      %p894 = pneg %p424
      %p895 = pneg %p421
      %p896 = scmp.lt.s32.totalorder %s38, 5
      %s897 = scalar_select %p896, %s38, 5
      %s898 = smul.addr %s897, 4
      %s899 = scalar_lea.vmem %s16, %s898
      %p900 = pneg %p450
      %p901 = pneg %p447
      %p902 = scmp.lt.s32.totalorder %s38, 5
      %s903 = scalar_select %p902, %s38, 5
      %s904 = smul.addr %s903, 64
      %s905 = smul.addr %s904, 4
      %s906 = scalar_lea.vmem %s17, %s905
      %p907 = pneg %p476
      %p908 = pneg %p473
      %p909 = scmp.lt.s32.totalorder %s38, 5
      %s910 = scalar_select %p909, %s38, 5
      %s911 = scalar_lea.vmem %s18, %s910
      %p912 = pneg %p502
      %p913 = pneg %p499
      %p914 = scmp.lt.s32.totalorder %s38, 5
      %s915 = scalar_select %p914, %s38, 5
      %s916 = scalar_lea.vmem %s19, %s915
      %p917 = pneg %p528
      %p918 = pneg %p525
      %p919 = scmp.lt.s32.totalorder %s38, 5
      %s920 = scalar_select %p919, %s38, 5
      %s921 = scalar_lea.vmem %s20, %s920
      %p922 = pneg %p554
      %p923 = pneg %p551
      %p924 = pneg %p575
      %p925 = pneg %p572
      %p926 = pneg %p596
      %p927 = pneg %p593
      %p928 = pneg %p617
      %p929 = pneg %p614
      %p930 = pneg %p638
      %p931 = pneg %p635
      %p932 = pneg %p659
      %p933 = pneg %p656
      %p934 = scmp.lt.s32.totalorder %s38, 5
      %s935 = scalar_select %p934, %s38, 5
      %s936 = smul.addr %s935, 16
      %s937 = smul.addr %s936, 4
      %s938 = scalar_lea.vmem %s5, %s937
      %p939 = scmp.lt.s32.totalorder %s38, 5
      %s940 = scalar_select %p939, %s38, 5
      %s941 = scalar_lea.vmem %s6, %s940
      %p942 = scmp.lt.s32.totalorder %s38, 5
      %s943 = scalar_select %p942, %s38, 5
      %s944 = smul.addr %s943, 16
      %s945 = smul.addr %s944, 4
      %s946 = scalar_lea.vmem %s7, %s945
      %p947 = scmp.lt.s32.totalorder %s38, 5
      %s948 = scalar_select %p947, %s38, 5
      %s949 = scalar_lea.vmem %s8, %s948
      %p950 = scmp.lt.s32.totalorder %s38, 5
      %s951 = scalar_select %p950, %s38, 5
      %s952 = smul.addr %s951, 16
      %s953 = smul.addr %s952, 4
      %s954 = scalar_lea.vmem %s9, %s953
      %p955 = scmp.lt.s32.totalorder %s38, 5
      %s956 = scalar_select %p955, %s38, 5
      %s957 = scalar_lea.vmem %s10, %s956
      %p958 = scmp.lt.s32.totalorder %s38, 5
      %s959 = scalar_select %p958, %s38, 5
      %s960 = smul.addr %s959, 16
      %s961 = smul.addr %s960, 4
      %s962 = scalar_lea.vmem %s11, %s961
      %p963 = scmp.lt.s32.totalorder %s38, 5
      %s964 = scalar_select %p963, %s38, 5
      %s965 = scalar_lea.vmem %s12, %s964
      %p966 = scmp.lt.s32.totalorder %s38, 5
      %s967 = scalar_select %p966, %s38, 5
      %s968 = scalar_lea.vmem %s13, %s967
      %p969 = scmp.lt.s32.totalorder %s38, 5
      %s970 = scalar_select %p969, %s38, 5
      %s971 = scalar_lea.vmem %s14, %s970
      %p972 = scmp.lt.s32.totalorder %s38, 5
      %s973 = scalar_select %p972, %s38, 5
      %s974 = smul.addr %s973, 64
      %s975 = smul.addr %s974, 4
      %s976 = scalar_lea.vmem %s15, %s975
      %p977 = scmp.lt.s32.totalorder %s38, 5
      %s978 = scalar_select %p977, %s38, 5
      %s979 = smul.addr %s978, 4
      %s980 = scalar_lea.vmem %s16, %s979
      %p981 = scmp.lt.s32.totalorder %s38, 5
      %s982 = scalar_select %p981, %s38, 5
      %s983 = smul.addr %s982, 64
      %s984 = smul.addr %s983, 4
      %s985 = scalar_lea.vmem %s17, %s984
      %p986 = scmp.lt.s32.totalorder %s38, 5
      %s987 = scalar_select %p986, %s38, 5
      %s988 = scalar_lea.vmem %s18, %s987
      %p989 = scmp.lt.s32.totalorder %s38, 5
      %s990 = scalar_select %p989, %s38, 5
      %s991 = scalar_lea.vmem %s19, %s990
      %p992 = scmp.lt.s32.totalorder %s38, 5
      %s993 = scalar_select %p992, %s38, 5
      %s994 = scalar_lea.vmem %s20, %s993
      %p996 = scmp.eq.s32.totalorder %s38, 0
      // Predicated region
      $region121: #{transformer_forward.1} parent=119 // pred_check
        %p997 = pneg %p996
      $region122: #{transformer_forward.1} parent=119 // pred_check_branch
        %999 = sbr.rel (%p997) target = $region124
      $region123: #{transformer_forward.1} parent=119 // pred_region
        %v1000 = vld [vmem:[%s0] sm:$0xff]
        %v1001 = vld [vmem:[%s0 + $0x8] sm:$0xff]
        %v1002 = vld [vmem:[%s0 + $0x10] sm:$0xff]
        %v1003 = vld [vmem:[%s0 + $0x18] sm:$0xff]
        %v1004 = vld [vmem:[%s1] sm:$0xf]
        %v1005 = vld [vmem:[%s1 + $0x4] sm:$0xf]
        %v1006 = vld [vmem:[%s1 + $0x8] sm:$0xf]
        %v1007 = vld [vmem:[%s1 + $0xc] sm:$0xf]
        %v1008 = vld [vmem:[%s1 + $0x10] sm:$0xf]
        %v1009 = vld [vmem:[%s1 + $0x14] sm:$0xf]
        %v1010 = vld [vmem:[%s1 + $0x18] sm:$0xf]
        %v1011 = vld [vmem:[%s1 + $0x1c] sm:$0xf]
        %v1012 = vld [vmem:[%s1 + $0x20] sm:$0xf]
        %v1013 = vld [vmem:[%s1 + $0x24] sm:$0xf]
        %v1014 = vld [vmem:[%s1 + $0x28] sm:$0xf]
        %v1015 = vld [vmem:[%s1 + $0x2c] sm:$0xf]
        %v1016 = vld [vmem:[%s1 + $0x30] sm:$0xf]
        %v1017 = vld [vmem:[%s1 + $0x34] sm:$0xf]
        %v1018 = vld [vmem:[%s1 + $0x38] sm:$0xf]
        %v1019 = vld [vmem:[%s1 + $0x3c] sm:$0xf]
        %v1020 = vld [vmem:[%s1 + $0x40] sm:$0xf]
        %v1021 = vld [vmem:[%s1 + $0x44] sm:$0xf]
        %v1022 = vld [vmem:[%s1 + $0x48] sm:$0xf]
        %v1023 = vld [vmem:[%s1 + $0x4c] sm:$0xf]
        %v1024 = vld [vmem:[%s1 + $0x50] sm:$0xf]
        %v1025 = vld [vmem:[%s1 + $0x54] sm:$0xf]
        %v1026 = vld [vmem:[%s1 + $0x58] sm:$0xf]
        %v1027 = vld [vmem:[%s1 + $0x5c] sm:$0xf]
        %v1028 = vld [vmem:[%s1 + $0x60] sm:$0xf]
        %v1029 = vld [vmem:[%s1 + $0x64] sm:$0xf]
        %v1030 = vld [vmem:[%s1 + $0x68] sm:$0xf]
        %v1031 = vld [vmem:[%s1 + $0x6c] sm:$0xf]
        %v1032 = vld [vmem:[%s1 + $0x70] sm:$0xf]
        %v1033 = vld [vmem:[%s1 + $0x74] sm:$0xf]
        %v1034 = vld [vmem:[%s1 + $0x78] sm:$0xf]
        %v1035 = vld [vmem:[%s1 + $0x7c] sm:$0xf]
        %v1036 = vld [vmem:[%s2] sm:$0xff]
        %v1037 = vld [vmem:[%s2 + $0x8] sm:$0xff]
        %v1038 = vld [vmem:[%s2 + $0x10] sm:$0xff]
        %v1039 = vld [vmem:[%s2 + $0x18] sm:$0xff]
        %v1044 = vunpack.c.l.b16 %v1000
        %v1045 = vunpack.c.h.b16 %v1000
        %v1046 = vunpack.c.l.b16 %v1001
        %v1047 = vunpack.c.h.b16 %v1001
        %v1048 = vunpack.c.l.b16 %v1002
        %v1049 = vunpack.c.h.b16 %v1002
        %v1050 = vunpack.c.l.b16 %v1003
        %v1051 = vunpack.c.h.b16 %v1003
        %v1052 = vpack.c.b16 %v1046, %v1044
        %v1053 = vpack.c.b16 %v1047, %v1045
        %v1054 = vpack.c.b16 %v1050, %v1048
        %v1055 = vpack.c.b16 %v1051, %v1049
        %v1092 = vunpack.c.l.b16 %v1004
        %v1093 = vunpack.c.l.b16 %v1005
        %v1094 = vunpack.c.l.b16 %v1006
        %v1095 = vunpack.c.l.b16 %v1007
        %v1096 = vunpack.c.l.b16 %v1008
        %v1097 = vunpack.c.l.b16 %v1009
        %v1098 = vunpack.c.l.b16 %v1010
        %v1099 = vunpack.c.l.b16 %v1011
        %v1100 = vunpack.c.l.b16 %v1012
        %v1101 = vunpack.c.l.b16 %v1013
        %v1102 = vunpack.c.l.b16 %v1014
        %v1103 = vunpack.c.l.b16 %v1015
        %v1104 = vunpack.c.l.b16 %v1016
        %v1105 = vunpack.c.l.b16 %v1017
        %v1106 = vunpack.c.l.b16 %v1018
        %v1107 = vunpack.c.l.b16 %v1019
        %v1108 = vunpack.c.l.b16 %v1020
        %v1109 = vunpack.c.l.b16 %v1021
        %v1110 = vunpack.c.l.b16 %v1022
        %v1111 = vunpack.c.l.b16 %v1023
        %v1112 = vunpack.c.l.b16 %v1024
        %v1113 = vunpack.c.l.b16 %v1025
        %v1114 = vunpack.c.l.b16 %v1026
        %v1115 = vunpack.c.l.b16 %v1027
        %v1116 = vunpack.c.l.b16 %v1028
        %v1117 = vunpack.c.l.b16 %v1029
        %v1118 = vunpack.c.l.b16 %v1030
        %v1119 = vunpack.c.l.b16 %v1031
        %v1120 = vunpack.c.l.b16 %v1032
        %v1121 = vunpack.c.l.b16 %v1033
        %v1122 = vunpack.c.l.b16 %v1034
        %v1123 = vunpack.c.l.b16 %v1035
        %v1124 = vpack.c.b16 %v1093, %v1092
        %v1125 = vpack.c.b16 %v1095, %v1094
        %v1126 = vpack.c.b16 %v1097, %v1096
        %v1127 = vpack.c.b16 %v1099, %v1098
        %v1128 = vpack.c.b16 %v1101, %v1100
        %v1129 = vpack.c.b16 %v1103, %v1102
        %v1130 = vpack.c.b16 %v1105, %v1104
        %v1131 = vpack.c.b16 %v1107, %v1106
        %v1132 = vpack.c.b16 %v1109, %v1108
        %v1133 = vpack.c.b16 %v1111, %v1110
        %v1134 = vpack.c.b16 %v1113, %v1112
        %v1135 = vpack.c.b16 %v1115, %v1114
        %v1136 = vpack.c.b16 %v1117, %v1116
        %v1137 = vpack.c.b16 %v1119, %v1118
        %v1138 = vpack.c.b16 %v1121, %v1120
        %v1139 = vpack.c.b16 %v1123, %v1122
        %1156 = vmatprep.subr.bf16.mxu0 0
        %1157 = vmatpush1.bf16.msra.mxu0 %v1131
        %1158 = vmatprep.subr.bf16.mxu0 0
        %1159 = vmatpush1.bf16.msra.mxu0 %v1130
        %1160 = vmatprep.subr.bf16.mxu0 0
        %1161 = vmatpush1.bf16.msra.mxu0 %v1129
        %1162 = vmatprep.subr.bf16.mxu0 0
        %1163 = vmatpush1.bf16.msra.mxu0 %v1128
        %1164 = vmatprep.subr.bf16.mxu0 0
        %1165 = vmatpush1.bf16.msra.mxu0 %v1127
        %1166 = vmatprep.subr.bf16.mxu0 0
        %1167 = vmatpush1.bf16.msra.mxu0 %v1126
        %1168 = vmatprep.subr.bf16.mxu0 0
        %1169 = vmatpush1.bf16.msra.mxu0 %v1125
        %1170 = vmatprep.subr.bf16.mxu0 0
        %1171 = vmatpush1.bf16.msra.mxu0 %v1124
        %1172 = vmatprep.subr.bf16.mxu0 0
        %1173 = vmatpush2.bf16.msra.mxu0 %v1139
        %1174 = vmatprep.subr.bf16.mxu0 0
        %1175 = vmatpush2.bf16.msra.mxu0 %v1138
        %1176 = vmatprep.subr.bf16.mxu0 0
        %1177 = vmatpush2.bf16.msra.mxu0 %v1137
        %1178 = vmatprep.subr.bf16.mxu0 0
        %1179 = vmatpush2.bf16.msra.mxu0 %v1136
        %1180 = vmatprep.subr.bf16.mxu0 0
        %1181 = vmatpush2.bf16.msra.mxu0 %v1135
        %1182 = vmatprep.subr.bf16.mxu0 0
        %1183 = vmatpush2.bf16.msra.mxu0 %v1134
        %1184 = vmatprep.subr.bf16.mxu0 0
        %1185 = vmatpush2.bf16.msra.mxu0 %v1133
        %1186 = vmatprep.subr.bf16.mxu0 0
        %1187 = vmatpush2.bf16.msra.mxu0 %v1132
        %1188 = vmatprep.mubr.bf16.mxu0 %v1053
        %1189 = vmatmul.mubr.bf16.gmra.mxu0 %v1052
        %v1190 = vpop.f32.mrf.mxu0
        %v1191 = vadd.f32 %v1036, %v1190
        %v1192 = vpop.f32.mrf.mxu0
        %v1193 = vpop.f32.mrf.mxu0
        %v1194 = vadd.f32 %v1037, %v1193
        %v1195 = vpop.f32.mrf.mxu0
        %1196 = vmatprep.mubr.bf16.mxu0 %v1055
        %1197 = vmatmul.mubr.bf16.gmra.mxu0 %v1054
        %v1198 = vpop.f32.mrf.mxu0
        %v1199 = vadd.f32 %v1038, %v1198
        %v1200 = vpop.f32.mrf.mxu0
        %v1201 = vpop.f32.mrf.mxu0
        %v1202 = vadd.f32 %v1039, %v1201
        %v1203 = vpop.f32.mrf.mxu0
        %1204 = vdwg.mxu0
        %1205 = vst [vmem:[#allocation2] sm:$0xff] %v1191
        %1206 = vst [vmem:[#allocation2 + $0x8] sm:$0xff] %v1194
        %1207 = vst [vmem:[#allocation2 + $0x10] sm:$0xff] %v1199
        %1208 = vst [vmem:[#allocation2 + $0x18] sm:$0xff] %v1202
      $region124: #{transformer_forward.1} parent=119 // pred_fallthru
        _
      %v1209 = vld [vmem:[#allocation2] sm:$0xff]
      %v1210 = vld [vmem:[#allocation2 + $0x8] sm:$0xff]
      %v1211 = vld [vmem:[#allocation2 + $0x10] sm:$0xff]
      %v1212 = vld [vmem:[#allocation2 + $0x18] sm:$0xff]
      %v1213 = vpack.c.bf16 %v1210, %v1209
      %v1214 = vpack.c.bf16 %v1212, %v1211
      %v1215 = vld [vmem:[%s938] sm:$0xf]
      %v1216 = vld [vmem:[%s938 + $0x4] sm:$0xf]
      %v1217 = vld [vmem:[%s938 + $0x8] sm:$0xf]
      %v1218 = vld [vmem:[%s938 + $0xc] sm:$0xf]
      %v1219 = vld [vmem:[%s938 + $0x10] sm:$0xf]
      %v1220 = vld [vmem:[%s938 + $0x14] sm:$0xf]
      %v1221 = vld [vmem:[%s938 + $0x18] sm:$0xf]
      %v1222 = vld [vmem:[%s938 + $0x1c] sm:$0xf]
      %v1223 = vld [vmem:[%s938 + $0x20] sm:$0xf]
      %v1224 = vld [vmem:[%s938 + $0x24] sm:$0xf]
      %v1225 = vld [vmem:[%s938 + $0x28] sm:$0xf]
      %v1226 = vld [vmem:[%s938 + $0x2c] sm:$0xf]
      %v1227 = vld [vmem:[%s938 + $0x30] sm:$0xf]
      %v1228 = vld [vmem:[%s938 + $0x34] sm:$0xf]
      %v1229 = vld [vmem:[%s938 + $0x38] sm:$0xf]
      %v1230 = vld [vmem:[%s938 + $0x3c] sm:$0xf]
      %v1231 = vld [vmem:[%s941] sm:$0x1]
      %v1233 = vlaneseq
      %v1234 = vshrl.u32 %v1233, 7
      %v1235 = vsub.s32 0, %v1234
      %v1236 = vrot.slane %v1231, %v1235
      %v1254 = vunpack.c.l.b16 %v1215
      %v1255 = vunpack.c.l.b16 %v1216
      %v1256 = vunpack.c.l.b16 %v1217
      %v1257 = vunpack.c.l.b16 %v1218
      %v1258 = vunpack.c.l.b16 %v1219
      %v1259 = vunpack.c.l.b16 %v1220
      %v1260 = vunpack.c.l.b16 %v1221
      %v1261 = vunpack.c.l.b16 %v1222
      %v1262 = vunpack.c.l.b16 %v1223
      %v1263 = vunpack.c.l.b16 %v1224
      %v1264 = vunpack.c.l.b16 %v1225
      %v1265 = vunpack.c.l.b16 %v1226
      %v1266 = vunpack.c.l.b16 %v1227
      %v1267 = vunpack.c.l.b16 %v1228
      %v1268 = vunpack.c.l.b16 %v1229
      %v1269 = vunpack.c.l.b16 %v1230
      %v1270 = vpack.c.b16 %v1255, %v1254
      %v1271 = vpack.c.b16 %v1257, %v1256
      %v1272 = vpack.c.b16 %v1259, %v1258
      %v1273 = vpack.c.b16 %v1261, %v1260
      %v1274 = vpack.c.b16 %v1263, %v1262
      %v1275 = vpack.c.b16 %v1265, %v1264
      %v1276 = vpack.c.b16 %v1267, %v1266
      %v1277 = vpack.c.b16 %v1269, %v1268
      %1286 = vmatprep.subr.bf16.mxu0 0
      %1287 = vmatpush1.bf16.msra.mxu0 %v1277
      %1288 = vmatprep.subr.bf16.mxu0 0
      %1289 = vmatpush1.bf16.msra.mxu0 %v1276
      %1290 = vmatprep.subr.bf16.mxu0 0
      %1291 = vmatpush1.bf16.msra.mxu0 %v1275
      %1292 = vmatprep.subr.bf16.mxu0 0
      %1293 = vmatpush1.bf16.msra.mxu0 %v1274
      %1294 = vmatprep.subr.bf16.mxu0 0
      %1295 = vmatpush1.bf16.msra.mxu0 %v1273
      %1296 = vmatprep.subr.bf16.mxu0 0
      %1297 = vmatpush1.bf16.msra.mxu0 %v1272
      %1298 = vmatprep.subr.bf16.mxu0 0
      %1299 = vmatpush1.bf16.msra.mxu0 %v1271
      %1300 = vmatprep.subr.bf16.mxu0 0
      %1301 = vmatpush1.bf16.msra.mxu0 %v1270
      %1302 = vmatprep.subr.bf16.mxu0 0
      %1303 = vmatpush2.bf16.msra.mxu0 0
      %1304 = vmatprep.subr.bf16.mxu0 0
      %1305 = vmatpush2.bf16.msra.mxu0 0
      %1306 = vmatprep.subr.bf16.mxu0 0
      %1307 = vmatpush2.bf16.msra.mxu0 0
      %1308 = vmatprep.subr.bf16.mxu0 0
      %1309 = vmatpush2.bf16.msra.mxu0 0
      %1310 = vmatprep.subr.bf16.mxu0 0
      %1311 = vmatpush2.bf16.msra.mxu0 0
      %1312 = vmatprep.subr.bf16.mxu0 0
      %1313 = vmatpush2.bf16.msra.mxu0 0
      %1314 = vmatprep.subr.bf16.mxu0 0
      %1315 = vmatpush2.bf16.msra.mxu0 0
      %1316 = vmatprep.subr.bf16.mxu0 0
      %1317 = vmatpush2.bf16.msra.mxu0 0
      %1318 = vmatprep.mubr.bf16.mxu0 0
      %1319 = vmatmul.mubr.bf16.gmra.mxu0 %v1213
      %v1320 = vpop.f32.mrf.mxu0
      %v1321 = vadd.f32 %v1236, %v1320
      %v1322 = vpop.f32.mrf.mxu0
      %v1323 = vpop.f32.mrf.mxu0
      %v1324 = vadd.f32 %v1236, %v1323
      %v1325 = vpop.f32.mrf.mxu0
      %1326 = vmatprep.mubr.bf16.mxu0 0
      %1327 = vmatmul.mubr.bf16.gmra.mxu0 %v1214
      %v1328 = vpop.f32.mrf.mxu0
      %v1329 = vadd.f32 %v1236, %v1328
      %v1330 = vpop.f32.mrf.mxu0
      %v1331 = vpop.f32.mrf.mxu0
      %v1332 = vadd.f32 %v1236, %v1331
      %v1333 = vpop.f32.mrf.mxu0
      %1334 = vdwg.mxu0
      %v1335 = vld [vmem:[%s946] sm:$0xf]
      %v1336 = vld [vmem:[%s946 + $0x4] sm:$0xf]
      %v1337 = vld [vmem:[%s946 + $0x8] sm:$0xf]
      %v1338 = vld [vmem:[%s946 + $0xc] sm:$0xf]
      %v1339 = vld [vmem:[%s946 + $0x10] sm:$0xf]
      %v1340 = vld [vmem:[%s946 + $0x14] sm:$0xf]
      %v1341 = vld [vmem:[%s946 + $0x18] sm:$0xf]
      %v1342 = vld [vmem:[%s946 + $0x1c] sm:$0xf]
      %v1343 = vld [vmem:[%s946 + $0x20] sm:$0xf]
      %v1344 = vld [vmem:[%s946 + $0x24] sm:$0xf]
      %v1345 = vld [vmem:[%s946 + $0x28] sm:$0xf]
      %v1346 = vld [vmem:[%s946 + $0x2c] sm:$0xf]
      %v1347 = vld [vmem:[%s946 + $0x30] sm:$0xf]
      %v1348 = vld [vmem:[%s946 + $0x34] sm:$0xf]
      %v1349 = vld [vmem:[%s946 + $0x38] sm:$0xf]
      %v1350 = vld [vmem:[%s946 + $0x3c] sm:$0xf]
      %v1351 = vld [vmem:[%s949] sm:$0x1]
      %v1353 = vlaneseq
      %v1354 = vshrl.u32 %v1353, 7
      %v1355 = vsub.s32 0, %v1354
      %v1356 = vrot.slane %v1351, %v1355
      %v1374 = vunpack.c.l.b16 %v1335
      %v1375 = vunpack.c.l.b16 %v1336
      %v1376 = vunpack.c.l.b16 %v1337
      %v1377 = vunpack.c.l.b16 %v1338
      %v1378 = vunpack.c.l.b16 %v1339
      %v1379 = vunpack.c.l.b16 %v1340
      %v1380 = vunpack.c.l.b16 %v1341
      %v1381 = vunpack.c.l.b16 %v1342
      %v1382 = vunpack.c.l.b16 %v1343
      %v1383 = vunpack.c.l.b16 %v1344
      %v1384 = vunpack.c.l.b16 %v1345
      %v1385 = vunpack.c.l.b16 %v1346
      %v1386 = vunpack.c.l.b16 %v1347
      %v1387 = vunpack.c.l.b16 %v1348
      %v1388 = vunpack.c.l.b16 %v1349
      %v1389 = vunpack.c.l.b16 %v1350
      %v1390 = vpack.c.b16 %v1375, %v1374
      %v1391 = vpack.c.b16 %v1377, %v1376
      %v1392 = vpack.c.b16 %v1379, %v1378
      %v1393 = vpack.c.b16 %v1381, %v1380
      %v1394 = vpack.c.b16 %v1383, %v1382
      %v1395 = vpack.c.b16 %v1385, %v1384
      %v1396 = vpack.c.b16 %v1387, %v1386
      %v1397 = vpack.c.b16 %v1389, %v1388
      %1406 = vmatprep.subr.bf16.mxu0 0
      %1407 = vmatpush1.bf16.msra.mxu0 %v1397
      %1408 = vmatprep.subr.bf16.mxu0 0
      %1409 = vmatpush1.bf16.msra.mxu0 %v1396
      %1410 = vmatprep.subr.bf16.mxu0 0
      %1411 = vmatpush1.bf16.msra.mxu0 %v1395
      %1412 = vmatprep.subr.bf16.mxu0 0
      %1413 = vmatpush1.bf16.msra.mxu0 %v1394
      %1414 = vmatprep.subr.bf16.mxu0 0
      %1415 = vmatpush1.bf16.msra.mxu0 %v1393
      %1416 = vmatprep.subr.bf16.mxu0 0
      %1417 = vmatpush1.bf16.msra.mxu0 %v1392
      %1418 = vmatprep.subr.bf16.mxu0 0
      %1419 = vmatpush1.bf16.msra.mxu0 %v1391
      %1420 = vmatprep.subr.bf16.mxu0 0
      %1421 = vmatpush1.bf16.msra.mxu0 %v1390
      %1422 = vmatprep.subr.bf16.mxu0 0
      %1423 = vmatpush2.bf16.msra.mxu0 0
      %1424 = vmatprep.subr.bf16.mxu0 0
      %1425 = vmatpush2.bf16.msra.mxu0 0
      %1426 = vmatprep.subr.bf16.mxu0 0
      %1427 = vmatpush2.bf16.msra.mxu0 0
      %1428 = vmatprep.subr.bf16.mxu0 0
      %1429 = vmatpush2.bf16.msra.mxu0 0
      %1430 = vmatprep.subr.bf16.mxu0 0
      %1431 = vmatpush2.bf16.msra.mxu0 0
      %1432 = vmatprep.subr.bf16.mxu0 0
      %1433 = vmatpush2.bf16.msra.mxu0 0
      %1434 = vmatprep.subr.bf16.mxu0 0
      %1435 = vmatpush2.bf16.msra.mxu0 0
      %1436 = vmatprep.subr.bf16.mxu0 0
      %1437 = vmatpush2.bf16.msra.mxu0 0
      %1438 = vmatprep.mubr.bf16.mxu0 0
      %1439 = vmatmul.mubr.bf16.gmra.mxu0 %v1213
      %v1440 = vpop.f32.mrf.mxu0
      %v1441 = vadd.f32 %v1356, %v1440
      %v1442 = vpop.f32.mrf.mxu0
      %v1443 = vpop.f32.mrf.mxu0
      %v1444 = vadd.f32 %v1356, %v1443
      %v1445 = vpop.f32.mrf.mxu0
      %1446 = vmatprep.mubr.bf16.mxu0 0
      %1447 = vmatmul.mubr.bf16.gmra.mxu0 %v1214
      %v1448 = vpop.f32.mrf.mxu0
      %v1449 = vadd.f32 %v1356, %v1448
      %v1450 = vpop.f32.mrf.mxu0
      %v1451 = vpop.f32.mrf.mxu0
      %v1452 = vadd.f32 %v1356, %v1451
      %v1453 = vpop.f32.mrf.mxu0
      %1454 = vdwg.mxu0
      %v1455 = vld [vmem:[%s954] sm:$0xf]
      %v1456 = vld [vmem:[%s954 + $0x4] sm:$0xf]
      %v1457 = vld [vmem:[%s954 + $0x8] sm:$0xf]
      %v1458 = vld [vmem:[%s954 + $0xc] sm:$0xf]
      %v1459 = vld [vmem:[%s954 + $0x10] sm:$0xf]
      %v1460 = vld [vmem:[%s954 + $0x14] sm:$0xf]
      %v1461 = vld [vmem:[%s954 + $0x18] sm:$0xf]
      %v1462 = vld [vmem:[%s954 + $0x1c] sm:$0xf]
      %v1463 = vld [vmem:[%s954 + $0x20] sm:$0xf]
      %v1464 = vld [vmem:[%s954 + $0x24] sm:$0xf]
      %v1465 = vld [vmem:[%s954 + $0x28] sm:$0xf]
      %v1466 = vld [vmem:[%s954 + $0x2c] sm:$0xf]
      %v1467 = vld [vmem:[%s954 + $0x30] sm:$0xf]
      %v1468 = vld [vmem:[%s954 + $0x34] sm:$0xf]
      %v1469 = vld [vmem:[%s954 + $0x38] sm:$0xf]
      %v1470 = vld [vmem:[%s954 + $0x3c] sm:$0xf]
      %v1471 = vld [vmem:[%s957] sm:$0x1]
      %v1473 = vlaneseq
      %v1474 = vshrl.u32 %v1473, 7
      %v1475 = vsub.s32 0, %v1474
      %v1476 = vrot.slane %v1471, %v1475
      %v1494 = vunpack.c.l.b16 %v1455
      %v1495 = vunpack.c.l.b16 %v1456
      %v1496 = vunpack.c.l.b16 %v1457
      %v1497 = vunpack.c.l.b16 %v1458
      %v1498 = vunpack.c.l.b16 %v1459
      %v1499 = vunpack.c.l.b16 %v1460
      %v1500 = vunpack.c.l.b16 %v1461
      %v1501 = vunpack.c.l.b16 %v1462
      %v1502 = vunpack.c.l.b16 %v1463
      %v1503 = vunpack.c.l.b16 %v1464
      %v1504 = vunpack.c.l.b16 %v1465
      %v1505 = vunpack.c.l.b16 %v1466
      %v1506 = vunpack.c.l.b16 %v1467
      %v1507 = vunpack.c.l.b16 %v1468
      %v1508 = vunpack.c.l.b16 %v1469
      %v1509 = vunpack.c.l.b16 %v1470
      %v1510 = vpack.c.b16 %v1495, %v1494
      %v1511 = vpack.c.b16 %v1497, %v1496
      %v1512 = vpack.c.b16 %v1499, %v1498
      %v1513 = vpack.c.b16 %v1501, %v1500
      %v1514 = vpack.c.b16 %v1503, %v1502
      %v1515 = vpack.c.b16 %v1505, %v1504
      %v1516 = vpack.c.b16 %v1507, %v1506
      %v1517 = vpack.c.b16 %v1509, %v1508
      %1526 = vmatprep.subr.bf16.mxu0 0
      %1527 = vmatpush1.bf16.msra.mxu0 %v1517
      %1528 = vmatprep.subr.bf16.mxu0 0
      %1529 = vmatpush1.bf16.msra.mxu0 %v1516
      %1530 = vmatprep.subr.bf16.mxu0 0
      %1531 = vmatpush1.bf16.msra.mxu0 %v1515
      %1532 = vmatprep.subr.bf16.mxu0 0
      %1533 = vmatpush1.bf16.msra.mxu0 %v1514
      %1534 = vmatprep.subr.bf16.mxu0 0
      %1535 = vmatpush1.bf16.msra.mxu0 %v1513
      %1536 = vmatprep.subr.bf16.mxu0 0
      %1537 = vmatpush1.bf16.msra.mxu0 %v1512
      %1538 = vmatprep.subr.bf16.mxu0 0
      %1539 = vmatpush1.bf16.msra.mxu0 %v1511
      %1540 = vmatprep.subr.bf16.mxu0 0
      %1541 = vmatpush1.bf16.msra.mxu0 %v1510
      %1542 = vmatprep.subr.bf16.mxu0 0
      %1543 = vmatpush2.bf16.msra.mxu0 0
      %1544 = vmatprep.subr.bf16.mxu0 0
      %1545 = vmatpush2.bf16.msra.mxu0 0
      %1546 = vmatprep.subr.bf16.mxu0 0
      %1547 = vmatpush2.bf16.msra.mxu0 0
      %1548 = vmatprep.subr.bf16.mxu0 0
      %1549 = vmatpush2.bf16.msra.mxu0 0
      %1550 = vmatprep.subr.bf16.mxu0 0
      %1551 = vmatpush2.bf16.msra.mxu0 0
      %1552 = vmatprep.subr.bf16.mxu0 0
      %1553 = vmatpush2.bf16.msra.mxu0 0
      %1554 = vmatprep.subr.bf16.mxu0 0
      %1555 = vmatpush2.bf16.msra.mxu0 0
      %1556 = vmatprep.subr.bf16.mxu0 0
      %1557 = vmatpush2.bf16.msra.mxu0 0
      %1558 = vmatprep.mubr.bf16.mxu0 0
      %1559 = vmatmul.mubr.bf16.gmra.mxu0 %v1213
      %v1560 = vpop.f32.mrf.mxu0
      %v1561 = vadd.f32 %v1476, %v1560
      %v1562 = vpop.f32.mrf.mxu0
      %v1563 = vpop.f32.mrf.mxu0
      %v1564 = vadd.f32 %v1476, %v1563
      %v1565 = vpop.f32.mrf.mxu0
      %1566 = vmatprep.mubr.bf16.mxu0 0
      %1567 = vmatmul.mubr.bf16.gmra.mxu0 %v1214
      %v1568 = vpop.f32.mrf.mxu0
      %v1569 = vadd.f32 %v1476, %v1568
      %v1570 = vpop.f32.mrf.mxu0
      %v1571 = vpop.f32.mrf.mxu0
      %v1572 = vadd.f32 %v1476, %v1571
      %v1573 = vpop.f32.mrf.mxu0
      %1574 = vdwg.mxu0
      %v1575 = vld [vmem:[%s3] sm:$0xf]
      %v1576 = vld [vmem:[%s3 + $0x4] sm:$0xf]
      %v1577 = vld [vmem:[%s3 + $0x8] sm:$0xf]
      %v1578 = vld [vmem:[%s3 + $0xc] sm:$0xf]
      %v1579 = vld [vmem:[%s3 + $0x10] sm:$0xf]
      %v1580 = vld [vmem:[%s3 + $0x14] sm:$0xf]
      %v1581 = vld [vmem:[%s3 + $0x18] sm:$0xf]
      %v1582 = vld [vmem:[%s3 + $0x1c] sm:$0xf]
      %v1583 = vld [vmem:[%s3 + $0x20] sm:$0xf]
      %v1584 = vld [vmem:[%s3 + $0x24] sm:$0xf]
      %v1585 = vld [vmem:[%s3 + $0x28] sm:$0xf]
      %v1586 = vld [vmem:[%s3 + $0x2c] sm:$0xf]
      %v1587 = vld [vmem:[%s3 + $0x30] sm:$0xf]
      %v1588 = vld [vmem:[%s3 + $0x34] sm:$0xf]
      %v1589 = vld [vmem:[%s3 + $0x38] sm:$0xf]
      %v1590 = vld [vmem:[%s3 + $0x3c] sm:$0xf]
      %v1591 = vld [vmem:[%s4] sm:$0xf]
      %v1592 = vld [vmem:[%s4 + $0x4] sm:$0xf]
      %v1593 = vld [vmem:[%s4 + $0x8] sm:$0xf]
      %v1594 = vld [vmem:[%s4 + $0xc] sm:$0xf]
      %v1595 = vld [vmem:[%s4 + $0x10] sm:$0xf]
      %v1596 = vld [vmem:[%s4 + $0x14] sm:$0xf]
      %v1597 = vld [vmem:[%s4 + $0x18] sm:$0xf]
      %v1598 = vld [vmem:[%s4 + $0x1c] sm:$0xf]
      %v1599 = vld [vmem:[%s4 + $0x20] sm:$0xf]
      %v1600 = vld [vmem:[%s4 + $0x24] sm:$0xf]
      %v1601 = vld [vmem:[%s4 + $0x28] sm:$0xf]
      %v1602 = vld [vmem:[%s4 + $0x2c] sm:$0xf]
      %v1603 = vld [vmem:[%s4 + $0x30] sm:$0xf]
      %v1604 = vld [vmem:[%s4 + $0x34] sm:$0xf]
      %v1605 = vld [vmem:[%s4 + $0x38] sm:$0xf]
      %v1606 = vld [vmem:[%s4 + $0x3c] sm:$0xf]
      %v1607 = vpack.c.bf16 %v1324, %v1321
      %v1608 = vpack.c.bf16 %v1444, %v1441
      %v1609 = vpack.c.bf16 %v1564, %v1561
      %v1626 = vunpack.c.l.b16 %v1575
      %v1627 = vunpack.c.l.b16 %v1576
      %v1628 = vunpack.c.l.b16 %v1577
      %v1629 = vunpack.c.l.b16 %v1578
      %v1630 = vunpack.c.l.b16 %v1579
      %v1631 = vunpack.c.l.b16 %v1580
      %v1632 = vunpack.c.l.b16 %v1581
      %v1633 = vunpack.c.l.b16 %v1582
      %v1634 = vunpack.c.l.b16 %v1583
      %v1635 = vunpack.c.l.b16 %v1584
      %v1636 = vunpack.c.l.b16 %v1585
      %v1637 = vunpack.c.l.b16 %v1586
      %v1638 = vunpack.c.l.b16 %v1587
      %v1639 = vunpack.c.l.b16 %v1588
      %v1640 = vunpack.c.l.b16 %v1589
      %v1641 = vunpack.c.l.b16 %v1590
      %v1642 = vpack.c.b16 %v1627, %v1626
      %v1643 = vpack.c.b16 %v1629, %v1628
      %v1644 = vpack.c.b16 %v1631, %v1630
      %v1645 = vpack.c.b16 %v1633, %v1632
      %v1646 = vpack.c.b16 %v1635, %v1634
      %v1647 = vpack.c.b16 %v1637, %v1636
      %v1648 = vpack.c.b16 %v1639, %v1638
      %v1649 = vpack.c.b16 %v1641, %v1640
      %v1658 = vmul.bf16 %v1608, %v1642
      %v1659 = vmul.bf16 %v1608, %v1643
      %v1660 = vmul.bf16 %v1608, %v1644
      %v1661 = vmul.bf16 %v1608, %v1645
      %v1662 = vmul.bf16 %v1608, %v1646
      %v1663 = vmul.bf16 %v1608, %v1647
      %v1664 = vmul.bf16 %v1608, %v1648
      %v1665 = vmul.bf16 %v1608, %v1649
      %v1666 = vmul.bf16 %v1609, %v1642
      %v1667 = vmul.bf16 %v1609, %v1643
      %v1668 = vmul.bf16 %v1609, %v1644
      %v1669 = vmul.bf16 %v1609, %v1645
      %v1670 = vmul.bf16 %v1609, %v1646
      %v1671 = vmul.bf16 %v1609, %v1647
      %v1672 = vmul.bf16 %v1609, %v1648
      %v1673 = vmul.bf16 %v1609, %v1649
      %1674 = vmatprep.subr.bf16.mxu0 0
      %1675 = vmatpush1.bf16.xpose.msra.mxu0 %v1665
      %1676 = vmatprep.subr.bf16.mxu0 0
      %1677 = vmatpush1.bf16.xpose.msra.mxu0 %v1664
      %1678 = vmatprep.subr.bf16.mxu0 0
      %1679 = vmatpush1.bf16.xpose.msra.mxu0 %v1663
      %1680 = vmatprep.subr.bf16.mxu0 0
      %1681 = vmatpush1.bf16.xpose.msra.mxu0 %v1662
      %1682 = vmatprep.subr.bf16.mxu0 0
      %1683 = vmatpush1.bf16.xpose.msra.mxu0 %v1661
      %1684 = vmatprep.subr.bf16.mxu0 0
      %1685 = vmatpush1.bf16.xpose.msra.mxu0 %v1660
      %1686 = vmatprep.subr.bf16.mxu0 0
      %1687 = vmatpush1.bf16.xpose.msra.mxu0 %v1659
      %1688 = vmatprep.subr.bf16.mxu0 0
      %1689 = vmatpush1.bf16.xpose.msra.mxu0 %v1658
      %1690 = vmatprep.subr.bf16.mxu0 0
      %1691 = vmatpush2.bf16.xpose.msra.mxu0 0
      %1692 = vmatprep.subr.bf16.mxu0 0
      %1693 = vmatpush2.bf16.xpose.msra.mxu0 0
      %1694 = vmatprep.subr.bf16.mxu0 0
      %1695 = vmatpush2.bf16.xpose.msra.mxu0 0
      %1696 = vmatprep.subr.bf16.mxu0 0
      %1697 = vmatpush2.bf16.xpose.msra.mxu0 0
      %1698 = vmatprep.subr.bf16.mxu0 0
      %1699 = vmatpush2.bf16.xpose.msra.mxu0 0
      %1700 = vmatprep.subr.bf16.mxu0 0
      %1701 = vmatpush2.bf16.xpose.msra.mxu0 0
      %1702 = vmatprep.subr.bf16.mxu0 0
      %1703 = vmatpush2.bf16.xpose.msra.mxu0 0
      %1704 = vmatprep.subr.bf16.mxu0 0
      %1705 = vmatpush2.bf16.xpose.msra.mxu0 0
      %1706 = vmatprep.mubr.bf16.mxu0 0
      %1707 = vmatmul.mubr.bf16.gmra.mxu0 %v1607
      %v1708 = vpop.f32.mrf.mxu0
      %v1709 = vadd.f32 0.0, %v1708
      %v1710 = vpop.f32.mrf.mxu0
      %v1711 = vpop.f32.mrf.mxu0
      %v1712 = vadd.f32 0.0, %v1711
      %v1713 = vpop.f32.mrf.mxu0
      %1714 = vdwg.mxu0
      %v1715 = vmul.f32 %v1709, 0.25
      %v1716 = vmul.f32 %v1712, 0.25
      %1717 = vmax.xlane.f32.xlu0 %v1715
      %v1718 = vpop.xlane.xlu0 %1717
      %1719 = vmax.xlane.f32.xlu0 %v1716
      %v1720 = vpop.xlane.xlu0 %1719
      %v1721 = vsub.f32 %v1715, %v1718
      %v1722 = vsub.f32 %v1716, %v1720
      %v1723 = vmul.f32 %v1721, 1.442695
      %v1724 = vpow.pop %v1723
      %v1725 = vmul.f32 %v1722, 1.442695
      %v1726 = vpow.pop %v1725
      %v1727 = vpack.c.bf16 %v1726, %v1724
      %v1744 = vunpack.c.l.b16 %v1591
      %v1745 = vunpack.c.l.b16 %v1592
      %v1746 = vunpack.c.l.b16 %v1593
      %v1747 = vunpack.c.l.b16 %v1594
      %v1748 = vunpack.c.l.b16 %v1595
      %v1749 = vunpack.c.l.b16 %v1596
      %v1750 = vunpack.c.l.b16 %v1597
      %v1751 = vunpack.c.l.b16 %v1598
      %v1752 = vunpack.c.l.b16 %v1599
      %v1753 = vunpack.c.l.b16 %v1600
      %v1754 = vunpack.c.l.b16 %v1601
      %v1755 = vunpack.c.l.b16 %v1602
      %v1756 = vunpack.c.l.b16 %v1603
      %v1757 = vunpack.c.l.b16 %v1604
      %v1758 = vunpack.c.l.b16 %v1605
      %v1759 = vunpack.c.l.b16 %v1606
      %v1760 = vpack.c.b16 %v1745, %v1744
      %v1761 = vpack.c.b16 %v1747, %v1746
      %v1762 = vpack.c.b16 %v1749, %v1748
      %v1763 = vpack.c.b16 %v1751, %v1750
      %v1764 = vpack.c.b16 %v1753, %v1752
      %v1765 = vpack.c.b16 %v1755, %v1754
      %v1766 = vpack.c.b16 %v1757, %v1756
      %v1767 = vpack.c.b16 %v1759, %v1758
      %1776 = vmatprep.subr.bf16.mxu0 0
      %1777 = vmatpush1.bf16.msra.mxu0 %v1767
      %1778 = vmatprep.subr.bf16.mxu0 0
      %1779 = vmatpush1.bf16.msra.mxu0 %v1766
      %1780 = vmatprep.subr.bf16.mxu0 0
      %1781 = vmatpush1.bf16.msra.mxu0 %v1765
      %1782 = vmatprep.subr.bf16.mxu0 0
      %1783 = vmatpush1.bf16.msra.mxu0 %v1764
      %1784 = vmatprep.subr.bf16.mxu0 0
      %1785 = vmatpush1.bf16.msra.mxu0 %v1763
      %1786 = vmatprep.subr.bf16.mxu0 0
      %1787 = vmatpush1.bf16.msra.mxu0 %v1762
      %1788 = vmatprep.subr.bf16.mxu0 0
      %1789 = vmatpush1.bf16.msra.mxu0 %v1761
      %1790 = vmatprep.subr.bf16.mxu0 0
      %1791 = vmatpush1.bf16.msra.mxu0 %v1760
      %1792 = vmatprep.subr.bf16.mxu0 0
      %1793 = vmatpush2.bf16.msra.mxu0 0
      %1794 = vmatprep.subr.bf16.mxu0 0
      %1795 = vmatpush2.bf16.msra.mxu0 0
      %1796 = vmatprep.subr.bf16.mxu0 0
      %1797 = vmatpush2.bf16.msra.mxu0 0
      %1798 = vmatprep.subr.bf16.mxu0 0
      %1799 = vmatpush2.bf16.msra.mxu0 0
      %1800 = vmatprep.subr.bf16.mxu0 0
      %1801 = vmatpush2.bf16.msra.mxu0 0
      %1802 = vmatprep.subr.bf16.mxu0 0
      %1803 = vmatpush2.bf16.msra.mxu0 0
      %1804 = vmatprep.subr.bf16.mxu0 0
      %1805 = vmatpush2.bf16.msra.mxu0 0
      %1806 = vmatprep.subr.bf16.mxu0 0
      %1807 = vmatpush2.bf16.msra.mxu0 0
      %1808 = vmatprep.mubr.bf16.mxu0 0
      %1809 = vmatmul.mubr.bf16.gmra.mxu0 %v1727
      %v1810 = vpop.f32.mrf.mxu0
      %v1811 = vadd.f32 0.0, %v1810
      %v1812 = vpop.f32.mrf.mxu0
      %v1813 = vpop.f32.mrf.mxu0
      %v1814 = vadd.f32 0.0, %v1813
      %v1815 = vpop.f32.mrf.mxu0
      %1816 = vdwg.mxu0
      %v1817 = vrcp.pop %v1811
      %v1818 = vrcp.pop %v1814
      %v1819 = vmul.f32 %v1724, %v1817
      %v1820 = vmul.f32 %v1726, %v1818
      %v1821 = vpack.c.bf16 %v1820, %v1819
      %1822 = vmatprep.subr.bf16.mxu0 0
      %1823 = vmatpush1.bf16.msra.mxu0 %v1673
      %1824 = vmatprep.subr.bf16.mxu0 0
      %1825 = vmatpush1.bf16.msra.mxu0 %v1672
      %1826 = vmatprep.subr.bf16.mxu0 0
      %1827 = vmatpush1.bf16.msra.mxu0 %v1671
      %1828 = vmatprep.subr.bf16.mxu0 0
      %1829 = vmatpush1.bf16.msra.mxu0 %v1670
      %1830 = vmatprep.subr.bf16.mxu0 0
      %1831 = vmatpush1.bf16.msra.mxu0 %v1669
      %1832 = vmatprep.subr.bf16.mxu0 0
      %1833 = vmatpush1.bf16.msra.mxu0 %v1668
      %1834 = vmatprep.subr.bf16.mxu0 0
      %1835 = vmatpush1.bf16.msra.mxu0 %v1667
      %1836 = vmatprep.subr.bf16.mxu0 0
      %1837 = vmatpush1.bf16.msra.mxu0 %v1666
      %1838 = vmatprep.subr.bf16.mxu0 0
      %1839 = vmatpush2.bf16.msra.mxu0 0
      %1840 = vmatprep.subr.bf16.mxu0 0
      %1841 = vmatpush2.bf16.msra.mxu0 0
      %1842 = vmatprep.subr.bf16.mxu0 0
      %1843 = vmatpush2.bf16.msra.mxu0 0
      %1844 = vmatprep.subr.bf16.mxu0 0
      %1845 = vmatpush2.bf16.msra.mxu0 0
      %1846 = vmatprep.subr.bf16.mxu0 0
      %1847 = vmatpush2.bf16.msra.mxu0 0
      %1848 = vmatprep.subr.bf16.mxu0 0
      %1849 = vmatpush2.bf16.msra.mxu0 0
      %1850 = vmatprep.subr.bf16.mxu0 0
      %1851 = vmatpush2.bf16.msra.mxu0 0
      %1852 = vmatprep.subr.bf16.mxu0 0
      %1853 = vmatpush2.bf16.msra.mxu0 0
      %1854 = vmatprep.mubr.bf16.mxu0 0
      %1855 = vmatmul.mubr.bf16.gmra.mxu0 %v1821
      %v1856 = vpop.f32.mrf.mxu0
      %v1857 = vadd.f32 0.0, %v1856
      %v1858 = vpop.f32.mrf.mxu0
      %v1859 = vpop.f32.mrf.mxu0
      %v1860 = vadd.f32 0.0, %v1859
      %v1861 = vpop.f32.mrf.mxu0
      %1862 = vdwg.mxu0
      %v1863 = vpack.c.bf16 %v1332, %v1329
      %v1864 = vpack.c.bf16 %v1452, %v1449
      %v1865 = vpack.c.bf16 %v1572, %v1569
      %v1866 = vmul.bf16 %v1864, %v1642
      %v1867 = vmul.bf16 %v1864, %v1643
      %v1868 = vmul.bf16 %v1864, %v1644
      %v1869 = vmul.bf16 %v1864, %v1645
      %v1870 = vmul.bf16 %v1864, %v1646
      %v1871 = vmul.bf16 %v1864, %v1647
      %v1872 = vmul.bf16 %v1864, %v1648
      %v1873 = vmul.bf16 %v1864, %v1649
      %v1874 = vmul.bf16 %v1865, %v1642
      %v1875 = vmul.bf16 %v1865, %v1643
      %v1876 = vmul.bf16 %v1865, %v1644
      %v1877 = vmul.bf16 %v1865, %v1645
      %v1878 = vmul.bf16 %v1865, %v1646
      %v1879 = vmul.bf16 %v1865, %v1647
      %v1880 = vmul.bf16 %v1865, %v1648
      %v1881 = vmul.bf16 %v1865, %v1649
      %1882 = vmatprep.subr.bf16.mxu0 0
      %1883 = vmatpush1.bf16.xpose.msra.mxu0 %v1873
      %1884 = vmatprep.subr.bf16.mxu0 0
      %1885 = vmatpush1.bf16.xpose.msra.mxu0 %v1872
      %1886 = vmatprep.subr.bf16.mxu0 0
      %1887 = vmatpush1.bf16.xpose.msra.mxu0 %v1871
      %1888 = vmatprep.subr.bf16.mxu0 0
      %1889 = vmatpush1.bf16.xpose.msra.mxu0 %v1870
      %1890 = vmatprep.subr.bf16.mxu0 0
      %1891 = vmatpush1.bf16.xpose.msra.mxu0 %v1869
      %1892 = vmatprep.subr.bf16.mxu0 0
      %1893 = vmatpush1.bf16.xpose.msra.mxu0 %v1868
      %1894 = vmatprep.subr.bf16.mxu0 0
      %1895 = vmatpush1.bf16.xpose.msra.mxu0 %v1867
      %1896 = vmatprep.subr.bf16.mxu0 0
      %1897 = vmatpush1.bf16.xpose.msra.mxu0 %v1866
      %1898 = vmatprep.subr.bf16.mxu0 0
      %1899 = vmatpush2.bf16.xpose.msra.mxu0 0
      %1900 = vmatprep.subr.bf16.mxu0 0
      %1901 = vmatpush2.bf16.xpose.msra.mxu0 0
      %1902 = vmatprep.subr.bf16.mxu0 0
      %1903 = vmatpush2.bf16.xpose.msra.mxu0 0
      %1904 = vmatprep.subr.bf16.mxu0 0
      %1905 = vmatpush2.bf16.xpose.msra.mxu0 0
      %1906 = vmatprep.subr.bf16.mxu0 0
      %1907 = vmatpush2.bf16.xpose.msra.mxu0 0
      %1908 = vmatprep.subr.bf16.mxu0 0
      %1909 = vmatpush2.bf16.xpose.msra.mxu0 0
      %1910 = vmatprep.subr.bf16.mxu0 0
      %1911 = vmatpush2.bf16.xpose.msra.mxu0 0
      %1912 = vmatprep.subr.bf16.mxu0 0
      %1913 = vmatpush2.bf16.xpose.msra.mxu0 0
      %1914 = vmatprep.mubr.bf16.mxu0 0
      %1915 = vmatmul.mubr.bf16.gmra.mxu0 %v1863
      %v1916 = vpop.f32.mrf.mxu0
      %v1917 = vadd.f32 0.0, %v1916
      %v1918 = vpop.f32.mrf.mxu0
      %v1919 = vpop.f32.mrf.mxu0
      %v1920 = vadd.f32 0.0, %v1919
      %v1921 = vpop.f32.mrf.mxu0
      %1922 = vdwg.mxu0
      %v1923 = vmul.f32 %v1917, 0.25
      %v1924 = vmul.f32 %v1920, 0.25
      %1925 = vmax.xlane.f32.xlu0 %v1923
      %v1926 = vpop.xlane.xlu0 %1925
      %1927 = vmax.xlane.f32.xlu0 %v1924
      %v1928 = vpop.xlane.xlu0 %1927
      %v1929 = vsub.f32 %v1923, %v1926
      %v1930 = vsub.f32 %v1924, %v1928
      %v1931 = vmul.f32 %v1929, 1.442695
      %v1932 = vpow.pop %v1931
      %v1933 = vmul.f32 %v1930, 1.442695
      %v1934 = vpow.pop %v1933
      %v1935 = vpack.c.bf16 %v1934, %v1932
      %1936 = vmatprep.subr.bf16.mxu0 0
      %1937 = vmatpush1.bf16.msra.mxu0 %v1767
      %1938 = vmatprep.subr.bf16.mxu0 0
      %1939 = vmatpush1.bf16.msra.mxu0 %v1766
      %1940 = vmatprep.subr.bf16.mxu0 0
      %1941 = vmatpush1.bf16.msra.mxu0 %v1765
      %1942 = vmatprep.subr.bf16.mxu0 0
      %1943 = vmatpush1.bf16.msra.mxu0 %v1764
      %1944 = vmatprep.subr.bf16.mxu0 0
      %1945 = vmatpush1.bf16.msra.mxu0 %v1763
      %1946 = vmatprep.subr.bf16.mxu0 0
      %1947 = vmatpush1.bf16.msra.mxu0 %v1762
      %1948 = vmatprep.subr.bf16.mxu0 0
      %1949 = vmatpush1.bf16.msra.mxu0 %v1761
      %1950 = vmatprep.subr.bf16.mxu0 0
      %1951 = vmatpush1.bf16.msra.mxu0 %v1760
      %1952 = vmatprep.subr.bf16.mxu0 0
      %1953 = vmatpush2.bf16.msra.mxu0 0
      %1954 = vmatprep.subr.bf16.mxu0 0
      %1955 = vmatpush2.bf16.msra.mxu0 0
      %1956 = vmatprep.subr.bf16.mxu0 0
      %1957 = vmatpush2.bf16.msra.mxu0 0
      %1958 = vmatprep.subr.bf16.mxu0 0
      %1959 = vmatpush2.bf16.msra.mxu0 0
      %1960 = vmatprep.subr.bf16.mxu0 0
      %1961 = vmatpush2.bf16.msra.mxu0 0
      %1962 = vmatprep.subr.bf16.mxu0 0
      %1963 = vmatpush2.bf16.msra.mxu0 0
      %1964 = vmatprep.subr.bf16.mxu0 0
      %1965 = vmatpush2.bf16.msra.mxu0 0
      %1966 = vmatprep.subr.bf16.mxu0 0
      %1967 = vmatpush2.bf16.msra.mxu0 0
      %1968 = vmatprep.mubr.bf16.mxu0 0
      %1969 = vmatmul.mubr.bf16.gmra.mxu0 %v1935
      %v1970 = vpop.f32.mrf.mxu0
      %v1971 = vadd.f32 0.0, %v1970
      %v1972 = vpop.f32.mrf.mxu0
      %v1973 = vpop.f32.mrf.mxu0
      %v1974 = vadd.f32 0.0, %v1973
      %v1975 = vpop.f32.mrf.mxu0
      %1976 = vdwg.mxu0
      %v1977 = vrcp.pop %v1971
      %v1978 = vrcp.pop %v1974
      %v1979 = vmul.f32 %v1932, %v1977
      %v1980 = vmul.f32 %v1934, %v1978
      %v1981 = vpack.c.bf16 %v1980, %v1979
      %1982 = vmatprep.subr.bf16.mxu0 0
      %1983 = vmatpush1.bf16.msra.mxu0 %v1881
      %1984 = vmatprep.subr.bf16.mxu0 0
      %1985 = vmatpush1.bf16.msra.mxu0 %v1880
      %1986 = vmatprep.subr.bf16.mxu0 0
      %1987 = vmatpush1.bf16.msra.mxu0 %v1879
      %1988 = vmatprep.subr.bf16.mxu0 0
      %1989 = vmatpush1.bf16.msra.mxu0 %v1878
      %1990 = vmatprep.subr.bf16.mxu0 0
      %1991 = vmatpush1.bf16.msra.mxu0 %v1877
      %1992 = vmatprep.subr.bf16.mxu0 0
      %1993 = vmatpush1.bf16.msra.mxu0 %v1876
      %1994 = vmatprep.subr.bf16.mxu0 0
      %1995 = vmatpush1.bf16.msra.mxu0 %v1875
      %1996 = vmatprep.subr.bf16.mxu0 0
      %1997 = vmatpush1.bf16.msra.mxu0 %v1874
      %1998 = vmatprep.subr.bf16.mxu0 0
      %1999 = vmatpush2.bf16.msra.mxu0 0
      %2000 = vmatprep.subr.bf16.mxu0 0
      %2001 = vmatpush2.bf16.msra.mxu0 0
      %2002 = vmatprep.subr.bf16.mxu0 0
      %2003 = vmatpush2.bf16.msra.mxu0 0
      %2004 = vmatprep.subr.bf16.mxu0 0
      %2005 = vmatpush2.bf16.msra.mxu0 0
      %2006 = vmatprep.subr.bf16.mxu0 0
      %2007 = vmatpush2.bf16.msra.mxu0 0
      %2008 = vmatprep.subr.bf16.mxu0 0
      %2009 = vmatpush2.bf16.msra.mxu0 0
      %2010 = vmatprep.subr.bf16.mxu0 0
      %2011 = vmatpush2.bf16.msra.mxu0 0
      %2012 = vmatprep.subr.bf16.mxu0 0
      %2013 = vmatpush2.bf16.msra.mxu0 0
      %2014 = vmatprep.mubr.bf16.mxu0 0
      %2015 = vmatmul.mubr.bf16.gmra.mxu0 %v1981
      %v2016 = vpop.f32.mrf.mxu0
      %v2017 = vadd.f32 0.0, %v2016
      %v2018 = vpop.f32.mrf.mxu0
      %v2019 = vpop.f32.mrf.mxu0
      %v2020 = vadd.f32 0.0, %v2019
      %v2021 = vpop.f32.mrf.mxu0
      %2022 = vdwg.mxu0
      %v2023 = vpack.c.bf16 %v1860, %v1857
      %v2024 = vpack.c.bf16 %v2020, %v2017
      %v2025 = vld [vmem:[%s962] sm:$0xf]
      %v2026 = vld [vmem:[%s962 + $0x4] sm:$0xf]
      %v2027 = vld [vmem:[%s962 + $0x8] sm:$0xf]
      %v2028 = vld [vmem:[%s962 + $0xc] sm:$0xf]
      %v2029 = vld [vmem:[%s962 + $0x10] sm:$0xf]
      %v2030 = vld [vmem:[%s962 + $0x14] sm:$0xf]
      %v2031 = vld [vmem:[%s962 + $0x18] sm:$0xf]
      %v2032 = vld [vmem:[%s962 + $0x1c] sm:$0xf]
      %v2033 = vld [vmem:[%s962 + $0x20] sm:$0xf]
      %v2034 = vld [vmem:[%s962 + $0x24] sm:$0xf]
      %v2035 = vld [vmem:[%s962 + $0x28] sm:$0xf]
      %v2036 = vld [vmem:[%s962 + $0x2c] sm:$0xf]
      %v2037 = vld [vmem:[%s962 + $0x30] sm:$0xf]
      %v2038 = vld [vmem:[%s962 + $0x34] sm:$0xf]
      %v2039 = vld [vmem:[%s962 + $0x38] sm:$0xf]
      %v2040 = vld [vmem:[%s962 + $0x3c] sm:$0xf]
      %v2041 = vld [vmem:[%s965] sm:$0x1]
      %v2043 = vlaneseq
      %v2044 = vshrl.u32 %v2043, 7
      %v2045 = vsub.s32 0, %v2044
      %v2046 = vrot.slane %v2041, %v2045
      %v2064 = vunpack.c.l.b16 %v2025
      %v2065 = vunpack.c.l.b16 %v2026
      %v2066 = vunpack.c.l.b16 %v2027
      %v2067 = vunpack.c.l.b16 %v2028
      %v2068 = vunpack.c.l.b16 %v2029
      %v2069 = vunpack.c.l.b16 %v2030
      %v2070 = vunpack.c.l.b16 %v2031
      %v2071 = vunpack.c.l.b16 %v2032
      %v2072 = vunpack.c.l.b16 %v2033
      %v2073 = vunpack.c.l.b16 %v2034
      %v2074 = vunpack.c.l.b16 %v2035
      %v2075 = vunpack.c.l.b16 %v2036
      %v2076 = vunpack.c.l.b16 %v2037
      %v2077 = vunpack.c.l.b16 %v2038
      %v2078 = vunpack.c.l.b16 %v2039
      %v2079 = vunpack.c.l.b16 %v2040
      %v2080 = vpack.c.b16 %v2065, %v2064
      %v2081 = vpack.c.b16 %v2067, %v2066
      %v2082 = vpack.c.b16 %v2069, %v2068
      %v2083 = vpack.c.b16 %v2071, %v2070
      %v2084 = vpack.c.b16 %v2073, %v2072
      %v2085 = vpack.c.b16 %v2075, %v2074
      %v2086 = vpack.c.b16 %v2077, %v2076
      %v2087 = vpack.c.b16 %v2079, %v2078
      %2096 = vmatprep.subr.bf16.mxu0 0
      %2097 = vmatpush1.bf16.msra.mxu0 %v2087
      %2098 = vmatprep.subr.bf16.mxu0 0
      %2099 = vmatpush1.bf16.msra.mxu0 %v2086
      %2100 = vmatprep.subr.bf16.mxu0 0
      %2101 = vmatpush1.bf16.msra.mxu0 %v2085
      %2102 = vmatprep.subr.bf16.mxu0 0
      %2103 = vmatpush1.bf16.msra.mxu0 %v2084
      %2104 = vmatprep.subr.bf16.mxu0 0
      %2105 = vmatpush1.bf16.msra.mxu0 %v2083
      %2106 = vmatprep.subr.bf16.mxu0 0
      %2107 = vmatpush1.bf16.msra.mxu0 %v2082
      %2108 = vmatprep.subr.bf16.mxu0 0
      %2109 = vmatpush1.bf16.msra.mxu0 %v2081
      %2110 = vmatprep.subr.bf16.mxu0 0
      %2111 = vmatpush1.bf16.msra.mxu0 %v2080
      %2112 = vmatprep.subr.bf16.mxu0 0
      %2113 = vmatpush2.bf16.msra.mxu0 0
      %2114 = vmatprep.subr.bf16.mxu0 0
      %2115 = vmatpush2.bf16.msra.mxu0 0
      %2116 = vmatprep.subr.bf16.mxu0 0
      %2117 = vmatpush2.bf16.msra.mxu0 0
      %2118 = vmatprep.subr.bf16.mxu0 0
      %2119 = vmatpush2.bf16.msra.mxu0 0
      %2120 = vmatprep.subr.bf16.mxu0 0
      %2121 = vmatpush2.bf16.msra.mxu0 0
      %2122 = vmatprep.subr.bf16.mxu0 0
      %2123 = vmatpush2.bf16.msra.mxu0 0
      %2124 = vmatprep.subr.bf16.mxu0 0
      %2125 = vmatpush2.bf16.msra.mxu0 0
      %2126 = vmatprep.subr.bf16.mxu0 0
      %2127 = vmatpush2.bf16.msra.mxu0 0
      %2128 = vmatprep.mubr.bf16.mxu0 0
      %2129 = vmatmul.mubr.bf16.gmra.mxu0 %v2023
      %v2130 = vpop.f32.mrf.mxu0
      %v2131 = vadd.f32 %v2046, %v2130
      %v2132 = vpop.f32.mrf.mxu0
      %v2133 = vpop.f32.mrf.mxu0
      %v2134 = vadd.f32 %v2046, %v2133
      %v2135 = vpop.f32.mrf.mxu0
      %2136 = vmatprep.mubr.bf16.mxu0 0
      %2137 = vmatmul.mubr.bf16.gmra.mxu0 %v2024
      %v2138 = vpop.f32.mrf.mxu0
      %v2139 = vadd.f32 %v2046, %v2138
      %v2140 = vpop.f32.mrf.mxu0
      %v2141 = vpop.f32.mrf.mxu0
      %v2142 = vadd.f32 %v2046, %v2141
      %v2143 = vpop.f32.mrf.mxu0
      %2144 = vdwg.mxu0
      %v2145 = vadd.f32 %v1209, %v2131
      %v2146 = vadd.f32 %v1210, %v2134
      %v2147 = vadd.f32 %v1211, %v2139
      %v2148 = vadd.f32 %v1212, %v2142
      %v2149 = vld [vmem:[%s968] sm:$0x1]
      %v2150 = vld [vmem:[%s971] sm:$0x1]
      %2151 = vadd.xlane.f32.xlu0 %v2145
      %v2152 = vpop.xlane.xlu0 %2151
      %2153 = vadd.xlane.f32.xlu0 %v2146
      %v2154 = vpop.xlane.xlu0 %2153
      %2155 = vadd.xlane.f32.xlu0 %v2147
      %v2156 = vpop.xlane.xlu0 %2155
      %2157 = vadd.xlane.f32.xlu0 %v2148
      %v2158 = vpop.xlane.xlu0 %2157
      %v2159 = vrcp.pop 128.0
      %v2160 = vmul.f32 %v2152, %v2159
      %v2161 = vmul.f32 %v2154, %v2159
      %v2162 = vmul.f32 %v2156, %v2159
      %v2163 = vmul.f32 %v2158, %v2159
      %v2164 = vsub.f32 %v2145, %v2160
      %v2165 = vsub.f32 %v2146, %v2161
      %v2166 = vsub.f32 %v2147, %v2162
      %v2167 = vsub.f32 %v2148, %v2163
      %v2168 = vmul.f32 %v2164, %v2164
      %v2169 = vmul.f32 %v2165, %v2165
      %v2170 = vmul.f32 %v2166, %v2166
      %v2171 = vmul.f32 %v2167, %v2167
      %2172 = vadd.xlane.f32.xlu0 %v2168
      %v2173 = vpop.xlane.xlu0 %2172
      %2174 = vadd.xlane.f32.xlu0 %v2169
      %v2175 = vpop.xlane.xlu0 %2174
      %2176 = vadd.xlane.f32.xlu0 %v2170
      %v2177 = vpop.xlane.xlu0 %2176
      %2178 = vadd.xlane.f32.xlu0 %v2171
      %v2179 = vpop.xlane.xlu0 %2178
      %v2180 = vmul.f32 %v2173, %v2159
      %v2181 = vmul.f32 %v2175, %v2159
      %v2182 = vmul.f32 %v2177, %v2159
      %v2183 = vmul.f32 %v2179, %v2159
      %v2184 = vadd.f32 %v2180, 1e-05
      %v2185 = vadd.f32 %v2181, 1e-05
      %v2186 = vadd.f32 %v2182, 1e-05
      %v2187 = vadd.f32 %v2183, 1e-05
      %v2188 = vrsqrt.pop %v2184
      %v2189 = vrsqrt.pop %v2185
      %v2190 = vrsqrt.pop %v2186
      %v2191 = vrsqrt.pop %v2187
      %v2192 = vmul.f32 %v2164, %v2188
      %v2193 = vmul.f32 %v2165, %v2189
      %v2194 = vmul.f32 %v2166, %v2190
      %v2195 = vmul.f32 %v2167, %v2191
      %v2197 = vlaneseq
      %v2198 = vshrl.u32 %v2197, 7
      %v2199 = vsub.s32 0, %v2198
      %v2200 = vrot.slane %v2149, %v2199
      %v2202 = vmul.f32 %v2192, %v2200
      %v2203 = vmul.f32 %v2193, %v2200
      %v2204 = vmul.f32 %v2194, %v2200
      %v2205 = vmul.f32 %v2195, %v2200
      %v2207 = vlaneseq
      %v2208 = vshrl.u32 %v2207, 7
      %v2209 = vsub.s32 0, %v2208
      %v2210 = vrot.slane %v2150, %v2209
      %v2212 = vadd.f32 %v2202, %v2210
      %v2213 = vadd.f32 %v2203, %v2210
      %v2214 = vadd.f32 %v2204, %v2210
      %v2215 = vadd.f32 %v2205, %v2210
      %v2216 = vpack.c.bf16 %v2213, %v2212
      %v2217 = vpack.c.bf16 %v2215, %v2214
      %v2218 = vld [vmem:[%s976] sm:$0xff]
      %v2219 = vld [vmem:[%s976 + $0x8] sm:$0xff]
      %v2220 = vld [vmem:[%s976 + $0x10] sm:$0xff]
      %v2221 = vld [vmem:[%s976 + $0x18] sm:$0xff]
      %v2222 = vld [vmem:[%s976 + $0x20] sm:$0xff]
      %v2223 = vld [vmem:[%s976 + $0x28] sm:$0xff]
      %v2224 = vld [vmem:[%s976 + $0x30] sm:$0xff]
      %v2225 = vld [vmem:[%s976 + $0x38] sm:$0xff]
      %v2226 = vld [vmem:[%s976 + $0x40] sm:$0xff]
      %v2227 = vld [vmem:[%s976 + $0x48] sm:$0xff]
      %v2228 = vld [vmem:[%s976 + $0x50] sm:$0xff]
      %v2229 = vld [vmem:[%s976 + $0x58] sm:$0xff]
      %v2230 = vld [vmem:[%s976 + $0x60] sm:$0xff]
      %v2231 = vld [vmem:[%s976 + $0x68] sm:$0xff]
      %v2232 = vld [vmem:[%s976 + $0x70] sm:$0xff]
      %v2233 = vld [vmem:[%s976 + $0x78] sm:$0xff]
      %v2234 = vld [vmem:[%s976 + $0x80] sm:$0xff]
      %v2235 = vld [vmem:[%s976 + $0x88] sm:$0xff]
      %v2236 = vld [vmem:[%s976 + $0x90] sm:$0xff]
      %v2237 = vld [vmem:[%s976 + $0x98] sm:$0xff]
      %v2238 = vld [vmem:[%s976 + $0xa0] sm:$0xff]
      %v2239 = vld [vmem:[%s976 + $0xa8] sm:$0xff]
      %v2240 = vld [vmem:[%s976 + $0xb0] sm:$0xff]
      %v2241 = vld [vmem:[%s976 + $0xb8] sm:$0xff]
      %v2242 = vld [vmem:[%s976 + $0xc0] sm:$0xff]
      %v2243 = vld [vmem:[%s976 + $0xc8] sm:$0xff]
      %v2244 = vld [vmem:[%s976 + $0xd0] sm:$0xff]
      %v2245 = vld [vmem:[%s976 + $0xd8] sm:$0xff]
      %v2246 = vld [vmem:[%s976 + $0xe0] sm:$0xff]
      %v2247 = vld [vmem:[%s976 + $0xe8] sm:$0xff]
      %v2248 = vld [vmem:[%s976 + $0xf0] sm:$0xff]
      %v2249 = vld [vmem:[%s976 + $0xf8] sm:$0xff]
      %v2250 = vld [vmem:[%s980] sm:$0xf]
      %v2252 = vlaneseq
      %v2253 = vshrl.u32 %v2252, 7
      %v2254 = vsub.s32 0, %v2253
      %v2255 = vrot.slane %v2250, %v2254
      %v2256 = vlaneseq
      %v2257 = vshrl.u32 %v2256, 7
      %v2258 = vsub.s32 1, %v2257
      %v2259 = vrot.slane %v2250, %v2258
      %v2260 = vlaneseq
      %v2261 = vshrl.u32 %v2260, 7
      %v2262 = vsub.s32 2, %v2261
      %v2263 = vrot.slane %v2250, %v2262
      %v2264 = vlaneseq
      %v2265 = vshrl.u32 %v2264, 7
      %v2266 = vsub.s32 3, %v2265
      %v2267 = vrot.slane %v2250, %v2266
      %v2304 = vunpack.c.l.b16 %v2218
      %v2305 = vunpack.c.h.b16 %v2218
      %v2306 = vunpack.c.l.b16 %v2219
      %v2307 = vunpack.c.h.b16 %v2219
      %v2308 = vunpack.c.l.b16 %v2220
      %v2309 = vunpack.c.h.b16 %v2220
      %v2310 = vunpack.c.l.b16 %v2221
      %v2311 = vunpack.c.h.b16 %v2221
      %v2312 = vunpack.c.l.b16 %v2222
      %v2313 = vunpack.c.h.b16 %v2222
      %v2314 = vunpack.c.l.b16 %v2223
      %v2315 = vunpack.c.h.b16 %v2223
      %v2316 = vunpack.c.l.b16 %v2224
      %v2317 = vunpack.c.h.b16 %v2224
      %v2318 = vunpack.c.l.b16 %v2225
      %v2319 = vunpack.c.h.b16 %v2225
      %v2320 = vunpack.c.l.b16 %v2226
      %v2321 = vunpack.c.h.b16 %v2226
      %v2322 = vunpack.c.l.b16 %v2227
      %v2323 = vunpack.c.h.b16 %v2227
      %v2324 = vunpack.c.l.b16 %v2228
      %v2325 = vunpack.c.h.b16 %v2228
      %v2326 = vunpack.c.l.b16 %v2229
      %v2327 = vunpack.c.h.b16 %v2229
      %v2328 = vunpack.c.l.b16 %v2230
      %v2329 = vunpack.c.h.b16 %v2230
      %v2330 = vunpack.c.l.b16 %v2231
      %v2331 = vunpack.c.h.b16 %v2231
      %v2332 = vunpack.c.l.b16 %v2232
      %v2333 = vunpack.c.h.b16 %v2232
      %v2334 = vunpack.c.l.b16 %v2233
      %v2335 = vunpack.c.h.b16 %v2233
      %v2336 = vunpack.c.l.b16 %v2234
      %v2337 = vunpack.c.h.b16 %v2234
      %v2338 = vunpack.c.l.b16 %v2235
      %v2339 = vunpack.c.h.b16 %v2235
      %v2340 = vunpack.c.l.b16 %v2236
      %v2341 = vunpack.c.h.b16 %v2236
      %v2342 = vunpack.c.l.b16 %v2237
      %v2343 = vunpack.c.h.b16 %v2237
      %v2344 = vunpack.c.l.b16 %v2238
      %v2345 = vunpack.c.h.b16 %v2238
      %v2346 = vunpack.c.l.b16 %v2239
      %v2347 = vunpack.c.h.b16 %v2239
      %v2348 = vunpack.c.l.b16 %v2240
      %v2349 = vunpack.c.h.b16 %v2240
      %v2350 = vunpack.c.l.b16 %v2241
      %v2351 = vunpack.c.h.b16 %v2241
      %v2352 = vunpack.c.l.b16 %v2242
      %v2353 = vunpack.c.h.b16 %v2242
      %v2354 = vunpack.c.l.b16 %v2243
      %v2355 = vunpack.c.h.b16 %v2243
      %v2356 = vunpack.c.l.b16 %v2244
      %v2357 = vunpack.c.h.b16 %v2244
      %v2358 = vunpack.c.l.b16 %v2245
      %v2359 = vunpack.c.h.b16 %v2245
      %v2360 = vunpack.c.l.b16 %v2246
      %v2361 = vunpack.c.h.b16 %v2246
      %v2362 = vunpack.c.l.b16 %v2247
      %v2363 = vunpack.c.h.b16 %v2247
      %v2364 = vunpack.c.l.b16 %v2248
      %v2365 = vunpack.c.h.b16 %v2248
      %v2366 = vunpack.c.l.b16 %v2249
      %v2367 = vunpack.c.h.b16 %v2249
      %v2368 = vpack.c.b16 %v2308, %v2304
      %v2369 = vpack.c.b16 %v2309, %v2305
      %v2370 = vpack.c.b16 %v2310, %v2306
      %v2371 = vpack.c.b16 %v2311, %v2307
      %v2372 = vpack.c.b16 %v2316, %v2312
      %v2373 = vpack.c.b16 %v2317, %v2313
      %v2374 = vpack.c.b16 %v2318, %v2314
      %v2375 = vpack.c.b16 %v2319, %v2315
      %v2376 = vpack.c.b16 %v2324, %v2320
      %v2377 = vpack.c.b16 %v2325, %v2321
      %v2378 = vpack.c.b16 %v2326, %v2322
      %v2379 = vpack.c.b16 %v2327, %v2323
      %v2380 = vpack.c.b16 %v2332, %v2328
      %v2381 = vpack.c.b16 %v2333, %v2329
      %v2382 = vpack.c.b16 %v2334, %v2330
      %v2383 = vpack.c.b16 %v2335, %v2331
      %v2384 = vpack.c.b16 %v2340, %v2336
      %v2385 = vpack.c.b16 %v2341, %v2337
      %v2386 = vpack.c.b16 %v2342, %v2338
      %v2387 = vpack.c.b16 %v2343, %v2339
      %v2388 = vpack.c.b16 %v2348, %v2344
      %v2389 = vpack.c.b16 %v2349, %v2345
      %v2390 = vpack.c.b16 %v2350, %v2346
      %v2391 = vpack.c.b16 %v2351, %v2347
      %v2392 = vpack.c.b16 %v2356, %v2352
      %v2393 = vpack.c.b16 %v2357, %v2353
      %v2394 = vpack.c.b16 %v2358, %v2354
      %v2395 = vpack.c.b16 %v2359, %v2355
      %v2396 = vpack.c.b16 %v2364, %v2360
      %v2397 = vpack.c.b16 %v2365, %v2361
      %v2398 = vpack.c.b16 %v2366, %v2362
      %v2399 = vpack.c.b16 %v2367, %v2363
      %2432 = vmatprep.subr.bf16.mxu0 %v2397
      %2433 = vmatpush1.bf16.msra.mxu0 %v2396
      %2434 = vmatprep.subr.bf16.mxu0 %v2393
      %2435 = vmatpush1.bf16.msra.mxu0 %v2392
      %2436 = vmatprep.subr.bf16.mxu0 %v2389
      %2437 = vmatpush1.bf16.msra.mxu0 %v2388
      %2438 = vmatprep.subr.bf16.mxu0 %v2385
      %2439 = vmatpush1.bf16.msra.mxu0 %v2384
      %2440 = vmatprep.subr.bf16.mxu0 %v2381
      %2441 = vmatpush1.bf16.msra.mxu0 %v2380
      %2442 = vmatprep.subr.bf16.mxu0 %v2377
      %2443 = vmatpush1.bf16.msra.mxu0 %v2376
      %2444 = vmatprep.subr.bf16.mxu0 %v2373
      %2445 = vmatpush1.bf16.msra.mxu0 %v2372
      %2446 = vmatprep.subr.bf16.mxu0 %v2369
      %2447 = vmatpush1.bf16.msra.mxu0 %v2368
      %2448 = vmatprep.subr.bf16.mxu0 0
      %2449 = vmatpush2.bf16.msra.mxu0 0
      %2450 = vmatprep.subr.bf16.mxu0 0
      %2451 = vmatpush2.bf16.msra.mxu0 0
      %2452 = vmatprep.subr.bf16.mxu0 0
      %2453 = vmatpush2.bf16.msra.mxu0 0
      %2454 = vmatprep.subr.bf16.mxu0 0
      %2455 = vmatpush2.bf16.msra.mxu0 0
      %2456 = vmatprep.subr.bf16.mxu0 0
      %2457 = vmatpush2.bf16.msra.mxu0 0
      %2458 = vmatprep.subr.bf16.mxu0 0
      %2459 = vmatpush2.bf16.msra.mxu0 0
      %2460 = vmatprep.subr.bf16.mxu0 0
      %2461 = vmatpush2.bf16.msra.mxu0 0
      %2462 = vmatprep.subr.bf16.mxu0 0
      %2463 = vmatpush2.bf16.msra.mxu0 0
      %2464 = vmatprep.mubr.bf16.mxu0 0
      %2465 = vmatmul.mubr.bf16.gmra.mxu0 %v2216
      %v2466 = vpop.f32.mrf.mxu0
      %v2467 = vadd.f32 %v2255, %v2466
      %v2468 = vpop.f32.mrf.mxu0
      %v2469 = vadd.f32 %v2259, %v2468
      %v2470 = vpop.f32.mrf.mxu0
      %v2471 = vadd.f32 %v2255, %v2470
      %v2472 = vpop.f32.mrf.mxu0
      %v2473 = vadd.f32 %v2259, %v2472
      %2474 = vmatprep.mubr.bf16.mxu0 0
      %2475 = vmatmul.mubr.bf16.gmra.mxu0 %v2217
      %v2476 = vpop.f32.mrf.mxu0
      %v2477 = vadd.f32 %v2255, %v2476
      %v2478 = vpop.f32.mrf.mxu0
      %v2479 = vadd.f32 %v2259, %v2478
      %v2480 = vpop.f32.mrf.mxu0
      %v2481 = vadd.f32 %v2255, %v2480
      %v2482 = vpop.f32.mrf.mxu0
      %v2483 = vadd.f32 %v2259, %v2482
      %2484 = vdwg.mxu0
      %2485 = vmatprep.subr.bf16.mxu0 %v2399
      %2486 = vmatpush1.bf16.msra.mxu0 %v2398
      %2487 = vmatprep.subr.bf16.mxu0 %v2395
      %2488 = vmatpush1.bf16.msra.mxu0 %v2394
      %2489 = vmatprep.subr.bf16.mxu0 %v2391
      %2490 = vmatpush1.bf16.msra.mxu0 %v2390
      %2491 = vmatprep.subr.bf16.mxu0 %v2387
      %2492 = vmatpush1.bf16.msra.mxu0 %v2386
      %2493 = vmatprep.subr.bf16.mxu0 %v2383
      %2494 = vmatpush1.bf16.msra.mxu0 %v2382
      %2495 = vmatprep.subr.bf16.mxu0 %v2379
      %2496 = vmatpush1.bf16.msra.mxu0 %v2378
      %2497 = vmatprep.subr.bf16.mxu0 %v2375
      %2498 = vmatpush1.bf16.msra.mxu0 %v2374
      %2499 = vmatprep.subr.bf16.mxu0 %v2371
      %2500 = vmatpush1.bf16.msra.mxu0 %v2370
      %2501 = vmatprep.subr.bf16.mxu0 0
      %2502 = vmatpush2.bf16.msra.mxu0 0
      %2503 = vmatprep.subr.bf16.mxu0 0
      %2504 = vmatpush2.bf16.msra.mxu0 0
      %2505 = vmatprep.subr.bf16.mxu0 0
      %2506 = vmatpush2.bf16.msra.mxu0 0
      %2507 = vmatprep.subr.bf16.mxu0 0
      %2508 = vmatpush2.bf16.msra.mxu0 0
      %2509 = vmatprep.subr.bf16.mxu0 0
      %2510 = vmatpush2.bf16.msra.mxu0 0
      %2511 = vmatprep.subr.bf16.mxu0 0
      %2512 = vmatpush2.bf16.msra.mxu0 0
      %2513 = vmatprep.subr.bf16.mxu0 0
      %2514 = vmatpush2.bf16.msra.mxu0 0
      %2515 = vmatprep.subr.bf16.mxu0 0
      %2516 = vmatpush2.bf16.msra.mxu0 0
      %2517 = vmatprep.mubr.bf16.mxu0 0
      %2518 = vmatmul.mubr.bf16.gmra.mxu0 %v2216
      %v2519 = vpop.f32.mrf.mxu0
      %v2520 = vadd.f32 %v2263, %v2519
      %v2521 = vpop.f32.mrf.mxu0
      %v2522 = vadd.f32 %v2267, %v2521
      %v2523 = vpop.f32.mrf.mxu0
      %v2524 = vadd.f32 %v2263, %v2523
      %v2525 = vpop.f32.mrf.mxu0
      %v2526 = vadd.f32 %v2267, %v2525
      %2527 = vmatprep.mubr.bf16.mxu0 0
      %2528 = vmatmul.mubr.bf16.gmra.mxu0 %v2217
      %v2529 = vpop.f32.mrf.mxu0
      %v2530 = vadd.f32 %v2263, %v2529
      %v2531 = vpop.f32.mrf.mxu0
      %v2532 = vadd.f32 %v2267, %v2531
      %v2533 = vpop.f32.mrf.mxu0
      %v2534 = vadd.f32 %v2263, %v2533
      %v2535 = vpop.f32.mrf.mxu0
      %v2536 = vadd.f32 %v2267, %v2535
      %2537 = vdwg.mxu0
      %v2538 = vmax.f32 %v2467, 0.0
      %v2539 = vmax.f32 %v2469, 0.0
      %v2540 = vmax.f32 %v2520, 0.0
      %v2541 = vmax.f32 %v2522, 0.0
      %v2542 = vmax.f32 %v2471, 0.0
      %v2543 = vmax.f32 %v2473, 0.0
      %v2544 = vmax.f32 %v2524, 0.0
      %v2545 = vmax.f32 %v2526, 0.0
      %v2546 = vmax.f32 %v2477, 0.0
      %v2547 = vmax.f32 %v2479, 0.0
      %v2548 = vmax.f32 %v2530, 0.0
      %v2549 = vmax.f32 %v2532, 0.0
      %v2550 = vmax.f32 %v2481, 0.0
      %v2551 = vmax.f32 %v2483, 0.0
      %v2552 = vmax.f32 %v2534, 0.0
      %v2553 = vmax.f32 %v2536, 0.0
      %v2554 = vpack.c.bf16 %v2542, %v2538
      %v2555 = vpack.c.bf16 %v2543, %v2539
      %v2556 = vpack.c.bf16 %v2544, %v2540
      %v2557 = vpack.c.bf16 %v2545, %v2541
      %v2558 = vpack.c.bf16 %v2550, %v2546
      %v2559 = vpack.c.bf16 %v2551, %v2547
      %v2560 = vpack.c.bf16 %v2552, %v2548
      %v2561 = vpack.c.bf16 %v2553, %v2549
      %v2562 = vld [vmem:[%s985] sm:$0xf]
      %v2563 = vld [vmem:[%s985 + $0x4] sm:$0xf]
      %v2564 = vld [vmem:[%s985 + $0x8] sm:$0xf]
      %v2565 = vld [vmem:[%s985 + $0xc] sm:$0xf]
      %v2566 = vld [vmem:[%s985 + $0x10] sm:$0xf]
      %v2567 = vld [vmem:[%s985 + $0x14] sm:$0xf]
      %v2568 = vld [vmem:[%s985 + $0x18] sm:$0xf]
      %v2569 = vld [vmem:[%s985 + $0x1c] sm:$0xf]
      %v2570 = vld [vmem:[%s985 + $0x20] sm:$0xf]
      %v2571 = vld [vmem:[%s985 + $0x24] sm:$0xf]
      %v2572 = vld [vmem:[%s985 + $0x28] sm:$0xf]
      %v2573 = vld [vmem:[%s985 + $0x2c] sm:$0xf]
      %v2574 = vld [vmem:[%s985 + $0x30] sm:$0xf]
      %v2575 = vld [vmem:[%s985 + $0x34] sm:$0xf]
      %v2576 = vld [vmem:[%s985 + $0x38] sm:$0xf]
      %v2577 = vld [vmem:[%s985 + $0x3c] sm:$0xf]
      %v2578 = vld [vmem:[%s985 + $0x40] sm:$0xf]
      %v2579 = vld [vmem:[%s985 + $0x44] sm:$0xf]
      %v2580 = vld [vmem:[%s985 + $0x48] sm:$0xf]
      %v2581 = vld [vmem:[%s985 + $0x4c] sm:$0xf]
      %v2582 = vld [vmem:[%s985 + $0x50] sm:$0xf]
      %v2583 = vld [vmem:[%s985 + $0x54] sm:$0xf]
      %v2584 = vld [vmem:[%s985 + $0x58] sm:$0xf]
      %v2585 = vld [vmem:[%s985 + $0x5c] sm:$0xf]
      %v2586 = vld [vmem:[%s985 + $0x60] sm:$0xf]
      %v2587 = vld [vmem:[%s985 + $0x64] sm:$0xf]
      %v2588 = vld [vmem:[%s985 + $0x68] sm:$0xf]
      %v2589 = vld [vmem:[%s985 + $0x6c] sm:$0xf]
      %v2590 = vld [vmem:[%s985 + $0x70] sm:$0xf]
      %v2591 = vld [vmem:[%s985 + $0x74] sm:$0xf]
      %v2592 = vld [vmem:[%s985 + $0x78] sm:$0xf]
      %v2593 = vld [vmem:[%s985 + $0x7c] sm:$0xf]
      %v2594 = vld [vmem:[%s985 + $0x80] sm:$0xf]
      %v2595 = vld [vmem:[%s985 + $0x84] sm:$0xf]
      %v2596 = vld [vmem:[%s985 + $0x88] sm:$0xf]
      %v2597 = vld [vmem:[%s985 + $0x8c] sm:$0xf]
      %v2598 = vld [vmem:[%s985 + $0x90] sm:$0xf]
      %v2599 = vld [vmem:[%s985 + $0x94] sm:$0xf]
      %v2600 = vld [vmem:[%s985 + $0x98] sm:$0xf]
      %v2601 = vld [vmem:[%s985 + $0x9c] sm:$0xf]
      %v2602 = vld [vmem:[%s985 + $0xa0] sm:$0xf]
      %v2603 = vld [vmem:[%s985 + $0xa4] sm:$0xf]
      %v2604 = vld [vmem:[%s985 + $0xa8] sm:$0xf]
      %v2605 = vld [vmem:[%s985 + $0xac] sm:$0xf]
      %v2606 = vld [vmem:[%s985 + $0xb0] sm:$0xf]
      %v2607 = vld [vmem:[%s985 + $0xb4] sm:$0xf]
      %v2608 = vld [vmem:[%s985 + $0xb8] sm:$0xf]
      %v2609 = vld [vmem:[%s985 + $0xbc] sm:$0xf]
      %v2610 = vld [vmem:[%s985 + $0xc0] sm:$0xf]
      %v2611 = vld [vmem:[%s985 + $0xc4] sm:$0xf]
      %v2612 = vld [vmem:[%s985 + $0xc8] sm:$0xf]
      %v2613 = vld [vmem:[%s985 + $0xcc] sm:$0xf]
      %v2614 = vld [vmem:[%s985 + $0xd0] sm:$0xf]
      %v2615 = vld [vmem:[%s985 + $0xd4] sm:$0xf]
      %v2616 = vld [vmem:[%s985 + $0xd8] sm:$0xf]
      %v2617 = vld [vmem:[%s985 + $0xdc] sm:$0xf]
      %v2618 = vld [vmem:[%s985 + $0xe0] sm:$0xf]
      %v2619 = vld [vmem:[%s985 + $0xe4] sm:$0xf]
      %v2620 = vld [vmem:[%s985 + $0xe8] sm:$0xf]
      %v2621 = vld [vmem:[%s985 + $0xec] sm:$0xf]
      %v2622 = vld [vmem:[%s985 + $0xf0] sm:$0xf]
      %v2623 = vld [vmem:[%s985 + $0xf4] sm:$0xf]
      %v2624 = vld [vmem:[%s985 + $0xf8] sm:$0xf]
      %v2625 = vld [vmem:[%s985 + $0xfc] sm:$0xf]
      %v2626 = vld [vmem:[%s988] sm:$0x1]
      %v2628 = vlaneseq
      %v2629 = vshrl.u32 %v2628, 7
      %v2630 = vsub.s32 0, %v2629
      %v2631 = vrot.slane %v2626, %v2630
      %v2697 = vunpack.c.l.b16 %v2562
      %v2698 = vunpack.c.l.b16 %v2563
      %v2699 = vunpack.c.l.b16 %v2564
      %v2700 = vunpack.c.l.b16 %v2565
      %v2701 = vunpack.c.l.b16 %v2566
      %v2702 = vunpack.c.l.b16 %v2567
      %v2703 = vunpack.c.l.b16 %v2568
      %v2704 = vunpack.c.l.b16 %v2569
      %v2705 = vunpack.c.l.b16 %v2570
      %v2706 = vunpack.c.l.b16 %v2571
      %v2707 = vunpack.c.l.b16 %v2572
      %v2708 = vunpack.c.l.b16 %v2573
      %v2709 = vunpack.c.l.b16 %v2574
      %v2710 = vunpack.c.l.b16 %v2575
      %v2711 = vunpack.c.l.b16 %v2576
      %v2712 = vunpack.c.l.b16 %v2577
      %v2713 = vunpack.c.l.b16 %v2578
      %v2714 = vunpack.c.l.b16 %v2579
      %v2715 = vunpack.c.l.b16 %v2580
      %v2716 = vunpack.c.l.b16 %v2581
      %v2717 = vunpack.c.l.b16 %v2582
      %v2718 = vunpack.c.l.b16 %v2583
      %v2719 = vunpack.c.l.b16 %v2584
      %v2720 = vunpack.c.l.b16 %v2585
      %v2721 = vunpack.c.l.b16 %v2586
      %v2722 = vunpack.c.l.b16 %v2587
      %v2723 = vunpack.c.l.b16 %v2588
      %v2724 = vunpack.c.l.b16 %v2589
      %v2725 = vunpack.c.l.b16 %v2590
      %v2726 = vunpack.c.l.b16 %v2591
      %v2727 = vunpack.c.l.b16 %v2592
      %v2728 = vunpack.c.l.b16 %v2593
      %v2729 = vunpack.c.l.b16 %v2594
      %v2730 = vunpack.c.l.b16 %v2595
      %v2731 = vunpack.c.l.b16 %v2596
      %v2732 = vunpack.c.l.b16 %v2597
      %v2733 = vunpack.c.l.b16 %v2598
      %v2734 = vunpack.c.l.b16 %v2599
      %v2735 = vunpack.c.l.b16 %v2600
      %v2736 = vunpack.c.l.b16 %v2601
      %v2737 = vunpack.c.l.b16 %v2602
      %v2738 = vunpack.c.l.b16 %v2603
      %v2739 = vunpack.c.l.b16 %v2604
      %v2740 = vunpack.c.l.b16 %v2605
      %v2741 = vunpack.c.l.b16 %v2606
      %v2742 = vunpack.c.l.b16 %v2607
      %v2743 = vunpack.c.l.b16 %v2608
      %v2744 = vunpack.c.l.b16 %v2609
      %v2745 = vunpack.c.l.b16 %v2610
      %v2746 = vunpack.c.l.b16 %v2611
      %v2747 = vunpack.c.l.b16 %v2612
      %v2748 = vunpack.c.l.b16 %v2613
      %v2749 = vunpack.c.l.b16 %v2614
      %v2750 = vunpack.c.l.b16 %v2615
      %v2751 = vunpack.c.l.b16 %v2616
      %v2752 = vunpack.c.l.b16 %v2617
      %v2753 = vunpack.c.l.b16 %v2618
      %v2754 = vunpack.c.l.b16 %v2619
      %v2755 = vunpack.c.l.b16 %v2620
      %v2756 = vunpack.c.l.b16 %v2621
      %v2757 = vunpack.c.l.b16 %v2622
      %v2758 = vunpack.c.l.b16 %v2623
      %v2759 = vunpack.c.l.b16 %v2624
      %v2760 = vunpack.c.l.b16 %v2625
      %v2761 = vpack.c.b16 %v2698, %v2697
      %v2762 = vpack.c.b16 %v2700, %v2699
      %v2763 = vpack.c.b16 %v2702, %v2701
      %v2764 = vpack.c.b16 %v2704, %v2703
      %v2765 = vpack.c.b16 %v2706, %v2705
      %v2766 = vpack.c.b16 %v2708, %v2707
      %v2767 = vpack.c.b16 %v2710, %v2709
      %v2768 = vpack.c.b16 %v2712, %v2711
      %v2769 = vpack.c.b16 %v2714, %v2713
      %v2770 = vpack.c.b16 %v2716, %v2715
      %v2771 = vpack.c.b16 %v2718, %v2717
      %v2772 = vpack.c.b16 %v2720, %v2719
      %v2773 = vpack.c.b16 %v2722, %v2721
      %v2774 = vpack.c.b16 %v2724, %v2723
      %v2775 = vpack.c.b16 %v2726, %v2725
      %v2776 = vpack.c.b16 %v2728, %v2727
      %v2777 = vpack.c.b16 %v2730, %v2729
      %v2778 = vpack.c.b16 %v2732, %v2731
      %v2779 = vpack.c.b16 %v2734, %v2733
      %v2780 = vpack.c.b16 %v2736, %v2735
      %v2781 = vpack.c.b16 %v2738, %v2737
      %v2782 = vpack.c.b16 %v2740, %v2739
      %v2783 = vpack.c.b16 %v2742, %v2741
      %v2784 = vpack.c.b16 %v2744, %v2743
      %v2785 = vpack.c.b16 %v2746, %v2745
      %v2786 = vpack.c.b16 %v2748, %v2747
      %v2787 = vpack.c.b16 %v2750, %v2749
      %v2788 = vpack.c.b16 %v2752, %v2751
      %v2789 = vpack.c.b16 %v2754, %v2753
      %v2790 = vpack.c.b16 %v2756, %v2755
      %v2791 = vpack.c.b16 %v2758, %v2757
      %v2792 = vpack.c.b16 %v2760, %v2759
      %2825 = vmatprep.subr.bf16.mxu0 0
      %2826 = vmatpush1.bf16.msra.mxu0 %v2768
      %2827 = vmatprep.subr.bf16.mxu0 0
      %2828 = vmatpush1.bf16.msra.mxu0 %v2767
      %2829 = vmatprep.subr.bf16.mxu0 0
      %2830 = vmatpush1.bf16.msra.mxu0 %v2766
      %2831 = vmatprep.subr.bf16.mxu0 0
      %2832 = vmatpush1.bf16.msra.mxu0 %v2765
      %2833 = vmatprep.subr.bf16.mxu0 0
      %2834 = vmatpush1.bf16.msra.mxu0 %v2764
      %2835 = vmatprep.subr.bf16.mxu0 0
      %2836 = vmatpush1.bf16.msra.mxu0 %v2763
      %2837 = vmatprep.subr.bf16.mxu0 0
      %2838 = vmatpush1.bf16.msra.mxu0 %v2762
      %2839 = vmatprep.subr.bf16.mxu0 0
      %2840 = vmatpush1.bf16.msra.mxu0 %v2761
      %2841 = vmatprep.subr.bf16.mxu0 0
      %2842 = vmatpush2.bf16.msra.mxu0 %v2776
      %2843 = vmatprep.subr.bf16.mxu0 0
      %2844 = vmatpush2.bf16.msra.mxu0 %v2775
      %2845 = vmatprep.subr.bf16.mxu0 0
      %2846 = vmatpush2.bf16.msra.mxu0 %v2774
      %2847 = vmatprep.subr.bf16.mxu0 0
      %2848 = vmatpush2.bf16.msra.mxu0 %v2773
      %2849 = vmatprep.subr.bf16.mxu0 0
      %2850 = vmatpush2.bf16.msra.mxu0 %v2772
      %2851 = vmatprep.subr.bf16.mxu0 0
      %2852 = vmatpush2.bf16.msra.mxu0 %v2771
      %2853 = vmatprep.subr.bf16.mxu0 0
      %2854 = vmatpush2.bf16.msra.mxu0 %v2770
      %2855 = vmatprep.subr.bf16.mxu0 0
      %2856 = vmatpush2.bf16.msra.mxu0 %v2769
      %2857 = vmatprep.mubr.bf16.mxu0 %v2555
      %2858 = vmatmul.mubr.bf16.gmra.mxu0 %v2554
      %v2859 = vpop.f32.mrf.mxu0
      %v2860 = vadd.f32 %v2631, %v2859
      %v2861 = vpop.f32.mrf.mxu0
      %v2862 = vpop.f32.mrf.mxu0
      %v2863 = vadd.f32 %v2631, %v2862
      %v2864 = vpop.f32.mrf.mxu0
      %2865 = vmatprep.mubr.bf16.mxu0 %v2559
      %2866 = vmatmul.mubr.bf16.gmra.mxu0 %v2558
      %v2867 = vpop.f32.mrf.mxu0
      %v2868 = vadd.f32 %v2631, %v2867
      %v2869 = vpop.f32.mrf.mxu0
      %v2870 = vpop.f32.mrf.mxu0
      %v2871 = vadd.f32 %v2631, %v2870
      %v2872 = vpop.f32.mrf.mxu0
      %2873 = vdwg.mxu0
      %2874 = vmatprep.subr.bf16.mxu0 0
      %2875 = vmatpush1.bf16.msra.mxu0 %v2784
      %2876 = vmatprep.subr.bf16.mxu0 0
      %2877 = vmatpush1.bf16.msra.mxu0 %v2783
      %2878 = vmatprep.subr.bf16.mxu0 0
      %2879 = vmatpush1.bf16.msra.mxu0 %v2782
      %2880 = vmatprep.subr.bf16.mxu0 0
      %2881 = vmatpush1.bf16.msra.mxu0 %v2781
      %2882 = vmatprep.subr.bf16.mxu0 0
      %2883 = vmatpush1.bf16.msra.mxu0 %v2780
      %2884 = vmatprep.subr.bf16.mxu0 0
      %2885 = vmatpush1.bf16.msra.mxu0 %v2779
      %2886 = vmatprep.subr.bf16.mxu0 0
      %2887 = vmatpush1.bf16.msra.mxu0 %v2778
      %2888 = vmatprep.subr.bf16.mxu0 0
      %2889 = vmatpush1.bf16.msra.mxu0 %v2777
      %2890 = vmatprep.subr.bf16.mxu0 0
      %2891 = vmatpush2.bf16.msra.mxu0 %v2792
      %2892 = vmatprep.subr.bf16.mxu0 0
      %2893 = vmatpush2.bf16.msra.mxu0 %v2791
      %2894 = vmatprep.subr.bf16.mxu0 0
      %2895 = vmatpush2.bf16.msra.mxu0 %v2790
      %2896 = vmatprep.subr.bf16.mxu0 0
      %2897 = vmatpush2.bf16.msra.mxu0 %v2789
      %2898 = vmatprep.subr.bf16.mxu0 0
      %2899 = vmatpush2.bf16.msra.mxu0 %v2788
      %2900 = vmatprep.subr.bf16.mxu0 0
      %2901 = vmatpush2.bf16.msra.mxu0 %v2787
      %2902 = vmatprep.subr.bf16.mxu0 0
      %2903 = vmatpush2.bf16.msra.mxu0 %v2786
      %2904 = vmatprep.subr.bf16.mxu0 0
      %2905 = vmatpush2.bf16.msra.mxu0 %v2785
      %2906 = vmatprep.mubr.bf16.mxu0 %v2557
      %2907 = vmatmul.mubr.bf16.gmra.mxu0 %v2556
      %v2908 = vpop.f32.mrf.mxu0
      %v2909 = vadd.f32 %v2860, %v2908
      %v2910 = vpop.f32.mrf.mxu0
      %v2911 = vpop.f32.mrf.mxu0
      %v2912 = vadd.f32 %v2863, %v2911
      %v2913 = vpop.f32.mrf.mxu0
      %2914 = vmatprep.mubr.bf16.mxu0 %v2561
      %2915 = vmatmul.mubr.bf16.gmra.mxu0 %v2560
      %v2916 = vpop.f32.mrf.mxu0
      %v2917 = vadd.f32 %v2868, %v2916
      %v2918 = vpop.f32.mrf.mxu0
      %v2919 = vpop.f32.mrf.mxu0
      %v2920 = vadd.f32 %v2871, %v2919
      %v2921 = vpop.f32.mrf.mxu0
      %2922 = vdwg.mxu0
      %v2923 = vadd.f32 %v2212, %v2909
      %v2924 = vadd.f32 %v2213, %v2912
      %v2925 = vadd.f32 %v2214, %v2917
      %v2926 = vadd.f32 %v2215, %v2920
      %v2927 = vld [vmem:[%s991] sm:$0x1]
      %v2928 = vld [vmem:[%s994] sm:$0x1]
      %2929 = vadd.xlane.f32.xlu0 %v2923
      %v2930 = vpop.xlane.xlu0 %2929
      %2931 = vadd.xlane.f32.xlu0 %v2924
      %v2932 = vpop.xlane.xlu0 %2931
      %2933 = vadd.xlane.f32.xlu0 %v2925
      %v2934 = vpop.xlane.xlu0 %2933
      %2935 = vadd.xlane.f32.xlu0 %v2926
      %v2936 = vpop.xlane.xlu0 %2935
      %v2937 = vmul.f32 %v2930, %v2159
      %v2938 = vmul.f32 %v2932, %v2159
      %v2939 = vmul.f32 %v2934, %v2159
      %v2940 = vmul.f32 %v2936, %v2159
      %v2941 = vsub.f32 %v2923, %v2937
      %v2942 = vsub.f32 %v2924, %v2938
      %v2943 = vsub.f32 %v2925, %v2939
      %v2944 = vsub.f32 %v2926, %v2940
      %v2945 = vmul.f32 %v2941, %v2941
      %v2946 = vmul.f32 %v2942, %v2942
      %v2947 = vmul.f32 %v2943, %v2943
      %v2948 = vmul.f32 %v2944, %v2944
      %2949 = vadd.xlane.f32.xlu0 %v2945
      %v2950 = vpop.xlane.xlu0 %2949
      %2951 = vadd.xlane.f32.xlu0 %v2946
      %v2952 = vpop.xlane.xlu0 %2951
      %2953 = vadd.xlane.f32.xlu0 %v2947
      %v2954 = vpop.xlane.xlu0 %2953
      %2955 = vadd.xlane.f32.xlu0 %v2948
      %v2956 = vpop.xlane.xlu0 %2955
      %v2957 = vmul.f32 %v2950, %v2159
      %v2958 = vmul.f32 %v2952, %v2159
      %v2959 = vmul.f32 %v2954, %v2159
      %v2960 = vmul.f32 %v2956, %v2159
      %v2961 = vadd.f32 %v2957, 1e-05
      %v2962 = vadd.f32 %v2958, 1e-05
      %v2963 = vadd.f32 %v2959, 1e-05
      %v2964 = vadd.f32 %v2960, 1e-05
      %v2965 = vrsqrt.pop %v2961
      %v2966 = vrsqrt.pop %v2962
      %v2967 = vrsqrt.pop %v2963
      %v2968 = vrsqrt.pop %v2964
      %v2969 = vmul.f32 %v2941, %v2965
      %v2970 = vmul.f32 %v2942, %v2966
      %v2971 = vmul.f32 %v2943, %v2967
      %v2972 = vmul.f32 %v2944, %v2968
      %v2974 = vlaneseq
      %v2975 = vshrl.u32 %v2974, 7
      %v2976 = vsub.s32 0, %v2975
      %v2977 = vrot.slane %v2927, %v2976
      %v2979 = vmul.f32 %v2969, %v2977
      %v2980 = vmul.f32 %v2970, %v2977
      %v2981 = vmul.f32 %v2971, %v2977
      %v2982 = vmul.f32 %v2972, %v2977
      %v2984 = vlaneseq
      %v2985 = vshrl.u32 %v2984, 7
      %v2986 = vsub.s32 0, %v2985
      %v2987 = vrot.slane %v2928, %v2986
      %v2989 = vadd.f32 %v2979, %v2987
      %v2990 = vadd.f32 %v2980, %v2987
      %v2991 = vadd.f32 %v2981, %v2987
      %v2992 = vadd.f32 %v2982, %v2987
      %2993 = vst [vmem:[#allocation2] sm:$0xff] %v2989
      %2994 = vst [vmem:[#allocation2 + $0x8] sm:$0xff] %v2990
      %2995 = vst [vmem:[#allocation2 + $0x10] sm:$0xff] %v2991
      %2996 = vst [vmem:[#allocation2 + $0x18] sm:$0xff] %v2992
      %p2997 = scmp.eq.s32.totalorder %s38, 5
      // Predicated region
      $region125: #{transformer_forward.1} parent=119 // pred_check
        %p2998 = pneg %p2997
      $region126: #{transformer_forward.1} parent=119 // pred_check_branch
        %3000 = sbr.rel (%p2998) target = $region128
      $region127: #{transformer_forward.1} parent=119 // pred_region
        %v3002 = vrot.slane %v2991, 7
        %vm3004 = vcmask 1040384
        %v3005 = vsel %vm3004, %v2989, %v3002
        %v3006 = vld [vmem:[%s21] sm:$0x1]
        %v3007 = vld [vmem:[%s22] sm:$0x1]
        %vm3008 = vcmask 1041408
        %v3009 = vsel %vm3008, %v3005, 0.0
        %3010 = vadd.xlane.f32.xlu0 %v3009
        %v3011 = vpop.xlane.xlu0 %3010
        %v3012 = vmul.f32 %v3011, %v2159
        %v3013 = vsub.f32 %v3005, %v3012
        %v3014 = vmul.f32 %v3013, %v3013
        %v3015 = vsel %vm3008, %v3014, 0.0
        %3016 = vadd.xlane.f32.xlu0 %v3015
        %v3017 = vpop.xlane.xlu0 %3016
        %v3018 = vmul.f32 %v3017, %v2159
        %v3019 = vadd.f32 %v3018, 1e-05
        %v3020 = vrsqrt.pop %v3019
        %v3021 = vmul.f32 %v3013, %v3020
        %v3023 = vlaneseq
        %v3024 = vshrl.u32 %v3023, 7
        %v3025 = vsub.s32 0, %v3024
        %v3026 = vrot.slane %v3006, %v3025
        %v3028 = vmul.f32 %v3021, %v3026
        %v3030 = vlaneseq
        %v3031 = vshrl.u32 %v3030, 7
        %v3032 = vsub.s32 0, %v3031
        %v3033 = vrot.slane %v3007, %v3032
        %v3035 = vadd.f32 %v3028, %v3033
        %v3036 = vld [vmem:[%s23] sm:$0xff]
        %v3037 = vld [vmem:[%s23 + $0x8] sm:$0xff]
        %v3038 = vld [vmem:[%s23 + $0x10] sm:$0xff]
        %v3039 = vld [vmem:[%s23 + $0x18] sm:$0xff]
        %v3040 = vld [vmem:[%s23 + $0x20] sm:$0xff]
        %v3041 = vld [vmem:[%s23 + $0x28] sm:$0xff]
        %v3042 = vld [vmem:[%s23 + $0x30] sm:$0xff]
        %v3043 = vld [vmem:[%s23 + $0x38] sm:$0xff]
        %v3044 = vld [vmem:[%s23 + $0x40] sm:$0xff]
        %v3045 = vld [vmem:[%s23 + $0x48] sm:$0xff]
        %v3046 = vld [vmem:[%s23 + $0x50] sm:$0xff]
        %v3047 = vld [vmem:[%s23 + $0x58] sm:$0xff]
        %v3048 = vld [vmem:[%s23 + $0x60] sm:$0xff]
        %v3049 = vld [vmem:[%s23 + $0x68] sm:$0xff]
        %v3050 = vld [vmem:[%s23 + $0x70] sm:$0xff]
        %v3051 = vld [vmem:[%s23 + $0x78] sm:$0xff]
        %v3052 = vld [vmem:[#allocation3] sm:$0x1]
        %v3054 = vlaneseq
        %v3055 = vshrl.u32 %v3054, 7
        %v3056 = vsub.s32 0, %v3055
        %v3057 = vrot.slane %v3052, %v3056
        %3059 = vmatprep.subr.mxu0 0.0
        %3060 = vmatpush1.msra.mxu0 %v3051
        %3061 = vmatprep.subr.mxu0 0.0
        %3062 = vmatpush1.msra.mxu0 %v3050
        %3063 = vmatprep.subr.mxu0 0.0
        %3064 = vmatpush1.msra.mxu0 %v3049
        %3065 = vmatprep.subr.mxu0 0.0
        %3066 = vmatpush1.msra.mxu0 %v3048
        %3067 = vmatprep.subr.mxu0 0.0
        %3068 = vmatpush1.msra.mxu0 %v3047
        %3069 = vmatprep.subr.mxu0 0.0
        %3070 = vmatpush1.msra.mxu0 %v3046
        %3071 = vmatprep.subr.mxu0 0.0
        %3072 = vmatpush1.msra.mxu0 %v3045
        %3073 = vmatprep.subr.mxu0 0.0
        %3074 = vmatpush1.msra.mxu0 %v3044
        %3075 = vmatprep.subr.mxu0 0.0
        %3076 = vmatpush1.msra.mxu0 %v3043
        %3077 = vmatprep.subr.mxu0 0.0
        %3078 = vmatpush1.msra.mxu0 %v3042
        %3079 = vmatprep.subr.mxu0 0.0
        %3080 = vmatpush1.msra.mxu0 %v3041
        %3081 = vmatprep.subr.mxu0 0.0
        %3082 = vmatpush1.msra.mxu0 %v3040
        %3083 = vmatprep.subr.mxu0 0.0
        %3084 = vmatpush1.msra.mxu0 %v3039
        %3085 = vmatprep.subr.mxu0 0.0
        %3086 = vmatpush1.msra.mxu0 %v3038
        %3087 = vmatprep.subr.mxu0 0.0
        %3088 = vmatpush1.msra.mxu0 %v3037
        %3089 = vmatprep.subr.mxu0 0.0
        %3090 = vmatpush1.msra.mxu0 %v3036
        %3091 = vmatprep.subr.mxu0 0.0
        %3092 = vmatpush2.msra.mxu0 0.0
        %3093 = vmatprep.subr.mxu0 0.0
        %3094 = vmatpush2.msra.mxu0 0.0
        %3095 = vmatprep.subr.mxu0 0.0
        %3096 = vmatpush2.msra.mxu0 0.0
        %3097 = vmatprep.subr.mxu0 0.0
        %3098 = vmatpush2.msra.mxu0 0.0
        %3099 = vmatprep.subr.mxu0 0.0
        %3100 = vmatpush2.msra.mxu0 0.0
        %3101 = vmatprep.subr.mxu0 0.0
        %3102 = vmatpush2.msra.mxu0 0.0
        %3103 = vmatprep.subr.mxu0 0.0
        %3104 = vmatpush2.msra.mxu0 0.0
        %3105 = vmatprep.subr.mxu0 0.0
        %3106 = vmatpush2.msra.mxu0 0.0
        %3107 = vmatprep.subr.mxu0 0.0
        %3108 = vmatpush2.msra.mxu0 0.0
        %3109 = vmatprep.subr.mxu0 0.0
        %3110 = vmatpush2.msra.mxu0 0.0
        %3111 = vmatprep.subr.mxu0 0.0
        %3112 = vmatpush2.msra.mxu0 0.0
        %3113 = vmatprep.subr.mxu0 0.0
        %3114 = vmatpush2.msra.mxu0 0.0
        %3115 = vmatprep.subr.mxu0 0.0
        %3116 = vmatpush2.msra.mxu0 0.0
        %3117 = vmatprep.subr.mxu0 0.0
        %3118 = vmatpush2.msra.mxu0 0.0
        %3119 = vmatprep.subr.mxu0 0.0
        %3120 = vmatpush2.msra.mxu0 0.0
        %3121 = vmatprep.subr.mxu0 0.0
        %3122 = vmatpush2.msra.mxu0 0.0
        %3123 = vmatprep.mubr.f32.mxu0 0.0
        %3124 = vmatmul.mubr.f32.gmra.mxu0 %v3035
        %v3125 = vpop.f32.mrf.mxu0
        %v3126 = vadd.f32 %v3057, %v3125
        %v3127 = vpop.f32.mrf.mxu0
        %3128 = vdwg.mxu0
        %vm3129 = vcmask 1024
        %3130 = vst.msk [vmem:[%s25] sm:$0x3] %vm3129, %v3126
      $region128: #{transformer_forward.1} parent=119 // pred_fallthru
        _
      // Predicated region
      $region129: #{transformer_forward.1} parent=119 // pred_check
        %p3131 = pneg %p656
      $region130: #{transformer_forward.1} parent=119 // pred_check_branch
        %3133 = sbr.rel (%p3131) target = $region132
      $region131: #{transformer_forward.1} parent=119 // pred_region
        _
      $region132: #{transformer_forward.1} parent=119 // pred_fallthru
        _
      // Predicated region
      $region133: #{transformer_forward.1} parent=119 // pred_check
        %p3134 = pneg %p656
      $region134: #{transformer_forward.1} parent=119 // pred_check_branch
        %3136 = sbr.rel (%p3134) target = $region136
      $region135: #{transformer_forward.1} parent=119 // pred_region
        _
      $region136: #{transformer_forward.1} parent=119 // pred_fallthru
        _
    $region120: #{transformer_forward.1} parent=5 // pred_fallthru
      _
    %p3137 = scmp.le.s32.totalorder 2, %s33
    // Predicated region
    $region137: #{transformer_forward.1} parent=5 // pred_check
      %p3138 = pneg %p3137
    $region138: #{transformer_forward.1} parent=5 // pred_check_branch
      %3140 = sbr.rel (%p3138) target = $region140
    $region139: #{transformer_forward.1} parent=5 // pred_region
      %s3141 = ssub.s32 %s33, 2
    $region140: #{transformer_forward.1} parent=5 // pred_fallthru
      _
  $region6: #{transformer_forward.1} parent=0 // loop_footer
    %s37 = sadd.s32 1, %s33
  $region7: #{transformer_forward.1} parent=0 // loop_footer_branch
    %32 = sbr.rel target = $region3
  $region8: #{transformer_forward.1} parent=0 // loop_exit
    _

</llo_original>
